<compile_context>
chip_gen: v5e
topology: v5e:2x2
jax: 0.10.0
libtpu: 0.0.40
codegen_flags: <defaults>
</compile_context>

<pallas_src>
import functools

import jax
import jax.numpy as jnp
import numpy as np
from jax.experimental import pallas as pl
from jax.experimental.pallas import tpu as pltpu


# --------------------------------------------------------------------------
# precision policy
# --------------------------------------------------------------------------
COMPUTE_DTYPE = jnp.bfloat16   # MXU operand dtype (accumulation is always f32)
ACT_DTYPE = jnp.bfloat16       # dtype of intermediate activations stored between kernels


def _mx(v):
    """Cast a matmul operand to the MXU compute dtype."""
    return v.astype(COMPUTE_DTYPE)


def _gelu(x):
    # exact (erf) GELU, matching torch.nn.GELU default
    return 0.5 * x * (1.0 + jax.lax.erf(x * 0.7071067811865476))


def _row_block(n, max_blk=512, min_steps=4):
    """Largest row tile dividing n that still leaves >= min_steps grid steps."""
    cands = [b for b in (512, 256, 128, 64, 32, 16, 8) if b <= max_blk]
    for blk in cands:
        if n % blk == 0 and n // blk >= min_steps:
            return blk
    for blk in cands:
        if n % blk == 0:
            return blk
    # TODO(synk): pad awkward N to a multiple of 8 instead of one un-pipelined full block.
    return n


def _cparams(sem):
    return pltpu.CompilerParams(dimension_semantics=sem,
                                vmem_limit_bytes=64 * 1024 * 1024)


# --------------------------------------------------------------------------
# Pallas kernels
# --------------------------------------------------------------------------
def _ln_kernel(x_ref, g_ref, b_ref, o_ref, *, eps):
    x = x_ref[...].astype(jnp.float32)
    mu = jnp.mean(x, axis=-1, keepdims=True)
    var = jnp.mean((x - mu) ** 2, axis=-1, keepdims=True)
    y = (x - mu) * jax.lax.rsqrt(var + eps) * g_ref[...] + b_ref[...]
    o_ref[...] = y.astype(o_ref.dtype)


def _matmul_kernel(x_ref, w_ref, o_ref):
    o_ref[...] = jnp.dot(_mx(x_ref[...]), w_ref[...],
                         preferred_element_type=jnp.float32).astype(o_ref.dtype)


def _proj_residual_kernel(x_ref, res_ref, w_ref, b_ref, o_ref, *, scale):
    y = jnp.dot(_mx(x_ref[...]), w_ref[...],
                preferred_element_type=jnp.float32) + b_ref[...]
    o_ref[...] = (res_ref[...].astype(jnp.float32) + y * scale).astype(o_ref.dtype)


def _ln_mlp_residual_kernel(x_ref, g_ref, b_ref, w1_ref, b1_ref, w2_ref, b2_ref,
                            o_ref, *, eps, scale):
    x = x_ref[...].astype(jnp.float32)
    mu = jnp.mean(x, axis=-1, keepdims=True)
    var = jnp.mean((x - mu) ** 2, axis=-1, keepdims=True)
    xn = (x - mu) * jax.lax.rsqrt(var + eps) * g_ref[...] + b_ref[...]
    h = jnp.dot(_mx(xn), w1_ref[...], preferred_element_type=jnp.float32) + b1_ref[...]
    h = _gelu(h)
    y = jnp.dot(_mx(h), w2_ref[...], preferred_element_type=jnp.float32) + b2_ref[...]
    o_ref[...] = (x + y * scale).astype(o_ref.dtype)


def _mean_reweight_kernel(h_ref, w_ref, c_ref, f1w_ref, f1b_ref, f2w_ref, f2b_ref,
                          a_ref, acc_ref, *, inv_n, dim):
    i = pl.program_id(1)

    @pl.when(i == 0)
    def _():
        acc_ref[...] = jnp.zeros_like(acc_ref)

    s = (h_ref[0].astype(jnp.float32) + w_ref[0].astype(jnp.float32)
         + c_ref[0].astype(jnp.float32))
    acc_ref[...] += jnp.sum(s, axis=0, keepdims=True)

    @pl.when(i == pl.num_programs(1) - 1)
    def _():
        m = acc_ref[...] * inv_n                                             # (1, C)
        hdn = _gelu(jnp.dot(_mx(m), f1w_ref[...],
                            preferred_element_type=jnp.float32) + f1b_ref[...])
        rw = jnp.dot(_mx(hdn), f2w_ref[...],
                     preferred_element_type=jnp.float32) + f2b_ref[...]      # (1, 3C), j-major
        a0 = rw[:, 0 * dim:1 * dim]
        a1 = rw[:, 1 * dim:2 * dim]
        a2 = rw[:, 2 * dim:3 * dim]
        amax = jnp.maximum(jnp.maximum(a0, a1), a2)
        e0 = jnp.exp(a0 - amax)
        e1 = jnp.exp(a1 - amax)
        e2 = jnp.exp(a2 - amax)
        inv = 1.0 / (e0 + e1 + e2)
        a_ref[0] = jnp.concatenate([e0 * inv, e1 * inv, e2 * inv], axis=0)   # (3, C)


def _combine_proj_residual_kernel(h_ref, w_ref, c_ref, a_ref, res_ref, wp_ref, bp_ref,
                                  o_ref, *, scale):
    a = a_ref[0]                                   # (3, C) f32
    a0 = a[0:1, :]
    a1 = a[1:2, :]
    a2 = a[2:3, :]
    m = (h_ref[0].astype(jnp.float32) * a0
         + w_ref[0].astype(jnp.float32) * a1
         + c_ref[0].astype(jnp.float32) * a2)
    y = jnp.dot(_mx(m), wp_ref[...], preferred_element_type=jnp.float32) + bp_ref[...]
    o_ref[0] = (res_ref[0].astype(jnp.float32) + y * scale).astype(o_ref.dtype)


# --------------------------------------------------------------------------
# pallas_call wrappers (weights already in (in, out) layout; biases/LN params (1, d) f32)
# --------------------------------------------------------------------------
def pallas_layernorm(x2d, g, b, out_dtype, eps=1e-5):
    n, d = x2d.shape
    blk = _row_block(n)
    return pl.pallas_call(
        functools.partial(_ln_kernel, eps=eps),
        out_shape=jax.ShapeDtypeStruct((n, d), out_dtype),
        grid=(n // blk,),
        in_specs=[pl.BlockSpec((blk, d), lambda i: (i, 0)),
                  pl.BlockSpec((1, d), lambda i: (0, 0)),
                  pl.BlockSpec((1, d), lambda i: (0, 0))],
        out_specs=pl.BlockSpec((blk, d), lambda i: (i, 0)),
        compiler_params=_cparams(("parallel",)),
    )(x2d, g, b)


def pallas_matmul(x2d, w_io, out_dtype):
    n, din = x2d.shape
    dout = w_io.shape[1]
    blk = _row_block(n)
    return pl.pallas_call(
        _matmul_kernel,
        out_shape=jax.ShapeDtypeStruct((n, dout), out_dtype),
        grid=(n // blk,),
        in_specs=[pl.BlockSpec((blk, din), lambda i: (i, 0)),
                  pl.BlockSpec((din, dout), lambda i: (0, 0))],
        out_specs=pl.BlockSpec((blk, dout), lambda i: (i, 0)),
        compiler_params=_cparams(("parallel",)),
    )(x2d, w_io)


def pallas_proj_residual(x2d, res2d, w_io, b_row, scale):
    n, din = x2d.shape
    dout = w_io.shape[1]
    blk = _row_block(n)
    return pl.pallas_call(
        functools.partial(_proj_residual_kernel, scale=scale),
        out_shape=jax.ShapeDtypeStruct((n, dout), jnp.float32),
        grid=(n // blk,),
        in_specs=[pl.BlockSpec((blk, din), lambda i: (i, 0)),
                  pl.BlockSpec((blk, dout), lambda i: (i, 0)),
                  pl.BlockSpec((din, dout), lambda i: (0, 0)),
                  pl.BlockSpec((1, dout), lambda i: (0, 0))],
        out_specs=pl.BlockSpec((blk, dout), lambda i: (i, 0)),
        compiler_params=_cparams(("parallel",)),
    )(x2d, res2d, w_io, b_row)


def pallas_ln_mlp_residual(x2d, g, b, w1, b1, w2, b2, scale, eps=1e-5):
    n, d = x2d.shape
    hid = w1.shape[1]
    blk = _row_block(n, max_blk=256)   # bound the (blk, hidden) GELU intermediate (v7x VMEM)
    return pl.pallas_call(
        functools.partial(_ln_mlp_residual_kernel, eps=eps, scale=scale),
        out_shape=jax.ShapeDtypeStruct((n, d), jnp.float32),
        grid=(n // blk,),
        in_specs=[pl.BlockSpec((blk, d), lambda i: (i, 0)),
                  pl.BlockSpec((1, d), lambda i: (0, 0)),
                  pl.BlockSpec((1, d), lambda i: (0, 0)),
                  pl.BlockSpec((d, hid), lambda i: (0, 0)),
                  pl.BlockSpec((1, hid), lambda i: (0, 0)),
                  pl.BlockSpec((hid, d), lambda i: (0, 0)),
                  pl.BlockSpec((1, d), lambda i: (0, 0))],
        out_specs=pl.BlockSpec((blk, d), lambda i: (i, 0)),
        compiler_params=_cparams(("parallel",)),
    )(x2d, g, b, w1, b1, w2, b2)


def pallas_mean_reweight(h, w, c, f1w, f1b, f2w, f2b):
    """(B, Nb, C) branch outputs -> softmaxed reweight coefficients (B, 3, C) f32."""
    B, Nb, C = h.shape
    hid = f1w.shape[1]
    blk = _row_block(Nb, max_blk=256, min_steps=2)
    row = lambda: pl.BlockSpec((1, blk, C), lambda bb, ii: (bb, ii, 0))
    return pl.pallas_call(
        functools.partial(_mean_reweight_kernel, inv_n=1.0 / Nb, dim=C),
        out_shape=jax.ShapeDtypeStruct((B, 3, C), jnp.float32),
        grid=(B, Nb // blk),
        in_specs=[row(), row(), row(),
                  pl.BlockSpec((C, hid), lambda bb, ii: (0, 0)),
                  pl.BlockSpec((1, hid), lambda bb, ii: (0, 0)),
                  pl.BlockSpec((hid, 3 * C), lambda bb, ii: (0, 0)),
                  pl.BlockSpec((1, 3 * C), lambda bb, ii: (0, 0))],
        out_specs=pl.BlockSpec((1, 3, C), lambda bb, ii: (bb, 0, 0)),
        scratch_shapes=[pltpu.VMEM((1, C), jnp.float32)],
        compiler_params=_cparams(("parallel", "arbitrary")),
    )(h, w, c, f1w, f1b, f2w, f2b)


def pallas_combine_proj_residual(h, w, c, a, res, wp, bp, scale):
    B, Nb, C = h.shape
    blk = _row_block(Nb, max_blk=512, min_steps=2)
    row = lambda: pl.BlockSpec((1, blk, C), lambda bb, ii: (bb, ii, 0))
    return pl.pallas_call(
        functools.partial(_combine_proj_residual_kernel, scale=scale),
        out_shape=jax.ShapeDtypeStruct((B, Nb, C), jnp.float32),
        grid=(B, Nb // blk),
        in_specs=[row(), row(), row(),
                  pl.BlockSpec((1, 3, C), lambda bb, ii: (bb, 0, 0)),
                  row(),
                  pl.BlockSpec((C, C), lambda bb, ii: (0, 0)),
                  pl.BlockSpec((1, C), lambda bb, ii: (0, 0))],
        out_specs=row(),
        compiler_params=_cparams(("parallel", "parallel")),
    )(h, w, c, a, res, wp, bp)


# --------------------------------------------------------------------------
# PermutatorBlock forward (Pallas path)
# --------------------------------------------------------------------------
def permutator_block_forward_pallas(x, pp, segment_dim, tmp, skip_lam=1.0):
    B, T, H, W, C = x.shape
    S = C // segment_dim
    N = B * T * H * W
    Nb = T * H * W
    inv_skip = 1.0 / skip_lam
    x2 = x.reshape(N, C)

    # ---- xs = x + Spe_FC(s_norm1(x))  (residual fused into the proj kernel) ----
    xn = pallas_layernorm(x2, pp["s_norm1_g"], pp["s_norm1_b"],
                          out_dtype=ACT_DTYPE).reshape(B, T, H, W, C)
    t = (xn.reshape(B, T, H, W, segment_dim, S)
           .transpose(0, 4, 2, 3, 1, 5)
           .reshape(-1, T * S))
    t = pallas_matmul(t, pp["spe_mlp_t_w"], out_dtype=ACT_DTYPE)
    t = (t.reshape(B, segment_dim, H, W, T, S)
          .transpose(0, 4, 2, 3, 1, 5)
          .reshape(N, C))
    xs2 = pallas_proj_residual(t, x2, pp["spe_proj_w"], pp["spe_proj_b"], scale=1.0)

    # ---- x = x + Spa_FC(norm1(xs)) / skip_lam ----
    xn1 = pallas_layernorm(xs2, pp["norm1_g"], pp["norm1_b"],
                           out_dtype=ACT_DTYPE).reshape(B, T, H, W, C)
    HWt = (H * W) // tmp

    h = (jnp.swapaxes(xn1, 3, 2)
           .reshape(B, T, HWt, tmp, segment_dim, S)
           .transpose(0, 1, 2, 4, 3, 5)
           .reshape(-1, tmp * S))
    h = pallas_matmul(h, pp["spa_mlp_h_w"], out_dtype=ACT_DTYPE)
    h = (h.reshape(B, T, HWt, segment_dim, tmp, S)
          .transpose(0, 1, 2, 4, 3, 5)
          .reshape(B, T, W, H, C))
    h = jnp.swapaxes(h, 3, 2)

    w = (xn1.reshape(B, T, HWt, tmp, segment_dim, S)
            .transpose(0, 1, 2, 4, 3, 5)
            .reshape(-1, tmp * S))
    w = pallas_matmul(w, pp["spa_mlp_w_w"], out_dtype=ACT_DTYPE)
    w = (w.reshape(B, T, HWt, segment_dim, tmp, S)
          .transpose(0, 1, 2, 4, 3, 5)
          .reshape(B, T, H, W, C))

    c = pallas_matmul(xn1.reshape(N, C), pp["spa_mlp_c_w"],
                      out_dtype=ACT_DTYPE).reshape(B, T, H, W, C)

    h3 = h.reshape(B, Nb, C)
    w3 = w.reshape(B, Nb, C)
    c3 = c.reshape(B, Nb, C)

    # reweight coefficients (B, 3, C): channel mean + Mlp + softmax, all in one kernel
    a = pallas_mean_reweight(h3, w3, c3,
                             pp["spa_rw_fc1_w"], pp["spa_rw_fc1_b"],
                             pp["spa_rw_fc2_w"], pp["spa_rw_fc2_b"])

    x3 = pallas_combine_proj_residual(h3, w3, c3, a, x.reshape(B, Nb, C),
                                      pp["spa_proj_w"], pp["spa_proj_b"],
                                      scale=inv_skip)

    # ---- x = x + Mlp(norm2(x)) / skip_lam   (LN + MLP + residual in one kernel) ----
    x2 = pallas_ln_mlp_residual(x3.reshape(N, C), pp["norm2_g"], pp["norm2_b"],
                                pp["mlp_fc1_w"], pp["mlp_fc1_b"],
                                pp["mlp_fc2_w"], pp["mlp_fc2_b"],
                                scale=inv_skip)
    # Dropout / DropPath are identity at p=0.0 (inference)
    return x2.reshape(B, T, H, W, C)


# --------------------------------------------------------------------------
# plain-JAX f32 reference (mirrors the PyTorch module exactly)
# --------------------------------------------------------------------------
def _ref_layernorm(x, g, b, eps=1e-5):
    mu = x.mean(-1, keepdims=True)
    var = ((x - mu) ** 2).mean(-1, keepdims=True)
    return (x - mu) / jnp.sqrt(var + eps) * g + b


def _ref_mlp(x, w1, b1, w2, b2):
    return _gelu(x @ w1.T + b1) @ w2.T + b2


def _ref_spe_fc(x, p, segment_dim):
    B, T, H, W, C = x.shape
    S = C // segment_dim
    t = (x.reshape(B, T, H, W, segment_dim, S)
          .transpose(0, 4, 2, 3, 1, 5)
          .reshape(B, segment_dim, H, W, T * S))
    t = t @ p["spe_mlp_t_w"].T
    t = (t.reshape(B, segment_dim, H, W, T, S)
          .transpose(0, 4, 2, 3, 1, 5)
          .reshape(B, T, H, W, C))
    return t @ p["spe_proj_w"].T + p["spe_proj_b"]


def _ref_spa_fc(x, p, segment_dim, tmp):
    B, T, H, W, C = x.shape
    S = C // segment_dim
    HWt = (H * W) // tmp
    h = (jnp.swapaxes(x, 3, 2)
           .reshape(B, T, HWt, tmp, segment_dim, S)
           .transpose(0, 1, 2, 4, 3, 5)
           .reshape(B, T, HWt, segment_dim, tmp * S))
    h = h @ p["spa_mlp_h_w"].T
    h = (h.reshape(B, T, HWt, segment_dim, tmp, S)
          .transpose(0, 1, 2, 4, 3, 5)
          .reshape(B, T, W, H, C))
    h = jnp.swapaxes(h, 3, 2)
    w = (x.reshape(B, T, HWt, tmp, segment_dim, S)
          .transpose(0, 1, 2, 4, 3, 5)
          .reshape(B, T, HWt, segment_dim, tmp * S))
    w = w @ p["spa_mlp_w_w"].T
    w = (w.reshape(B, T, HWt, segment_dim, tmp, S)
          .transpose(0, 1, 2, 4, 3, 5)
          .reshape(B, T, H, W, C))
    c = x @ p["spa_mlp_c_w"].T
    a = (h + w + c).transpose(0, 4, 1, 2, 3).reshape(B, C, -1).mean(-1)
    a = _ref_mlp(a, p["spa_rw_fc1_w"], p["spa_rw_fc1_b"],
                 p["spa_rw_fc2_w"], p["spa_rw_fc2_b"])
    a = jax.nn.softmax(a.reshape(B, C, 3).transpose(2, 0, 1), axis=0)
    out = (h * a[0][:, None, None, None, :]
           + w * a[1][:, None, None, None, :]
           + c * a[2][:, None, None, None, :])
    return out @ p["spa_proj_w"].T + p["spa_proj_b"]


def permutator_block_forward_ref(x, p, segment_dim, tmp, skip_lam=1.0):
    xn = _ref_layernorm(x, p["s_norm1_g"], p["s_norm1_b"])
    xs = x + _ref_spe_fc(xn, p, segment_dim)
    xn1 = _ref_layernorm(xs, p["norm1_g"], p["norm1_b"])
    x = x + _ref_spa_fc(xn1, p, segment_dim, tmp) / skip_lam
    xn2 = _ref_layernorm(x, p["norm2_g"], p["norm2_b"])
    x = x + _ref_mlp(xn2, p["mlp_fc1_w"], p["mlp_fc1_b"],
                     p["mlp_fc2_w"], p["mlp_fc2_b"]) / skip_lam
    return x


# --------------------------------------------------------------------------
# parameters: PyTorch-convention init + one-time re-layout for the kernels
# --------------------------------------------------------------------------
def init_params(key, dim, segment_dim, tmp, band, mlp_ratio=4.0):
    S = dim // segment_dim
    dim2_spa = S * tmp
    dim2_spe = band * S
    hidden = int(dim * mlp_ratio)
    keys = iter(jax.random.split(key, 40))
    n = lambda shape, s=0.05: s * jax.random.normal(next(keys), shape, jnp.float32)

    p = {}
    for name in ("s_norm1", "norm1", "norm2"):
        p[f"{name}_g"] = 1.0 + n((dim,), 0.05)
        p[f"{name}_b"] = n((dim,), 0.05)

    p["spe_mlp_t_w"] = n((dim2_spe, dim2_spe))
    p["spe_proj_w"] = n((dim, dim))
    p["spe_proj_b"] = n((dim,), 0.02)

    p["spa_mlp_h_w"] = n((dim2_spa, dim2_spa))
    p["spa_mlp_w_w"] = n((dim2_spa, dim2_spa))
    p["spa_mlp_c_w"] = n((dim, dim))
    p["spa_rw_fc1_w"] = n((dim // 4, dim))
    p["spa_rw_fc1_b"] = n((dim // 4,), 0.02)
    p["spa_rw_fc2_w"] = n((dim * 3, dim // 4))
    p["spa_rw_fc2_b"] = n((dim * 3,), 0.02)
    p["spa_proj_w"] = n((dim, dim))
    p["spa_proj_b"] = n((dim,), 0.02)

    p["mlp_fc1_w"] = n((hidden, dim))
    p["mlp_fc1_b"] = n((hidden,), 0.02)
    p["mlp_fc2_w"] = n((dim, hidden))
    p["mlp_fc2_b"] = n((dim,), 0.02)
    return p


def prepare_params(p, dim):
    """One-time re-layout: (out,in)->(in,out), bf16 matmul weights, f32 biases/LN, and
    reweight fc2 rows reordered from interleaved (c*3+j) to branch-major (j*dim+c)."""
    wdt = COMPUTE_DTYPE
    w_io = lambda w: jnp.asarray(w).T.astype(wdt)
    b_row = lambda b: jnp.asarray(b).reshape(1, -1).astype(jnp.float32)

    pp = {}
    for name in ("s_norm1", "norm1", "norm2"):
        pp[f"{name}_g"] = b_row(p[f"{name}_g"])
        pp[f"{name}_b"] = b_row(p[f"{name}_b"])

    pp["spe_mlp_t_w"] = w_io(p["spe_mlp_t_w"])
    pp["spe_proj_w"] = w_io(p["spe_proj_w"])
    pp["spe_proj_b"] = b_row(p["spe_proj_b"])

    pp["spa_mlp_h_w"] = w_io(p["spa_mlp_h_w"])
    pp["spa_mlp_w_w"] = w_io(p["spa_mlp_w_w"])
    pp["spa_mlp_c_w"] = w_io(p["spa_mlp_c_w"])
    pp["spa_rw_fc1_w"] = w_io(p["spa_rw_fc1_w"])
    pp["spa_rw_fc1_b"] = b_row(p["spa_rw_fc1_b"])
    idx = np.arange(3 * dim).reshape(dim, 3).T.reshape(-1)   # new row j*dim+c <- old c*3+j
    pp["spa_rw_fc2_w"] = jnp.asarray(p["spa_rw_fc2_w"])[idx].T.astype(wdt)
    pp["spa_rw_fc2_b"] = jnp.asarray(p["spa_rw_fc2_b"])[idx].reshape(1, -1).astype(jnp.float32)
    pp["spa_proj_w"] = w_io(p["spa_proj_w"])
    pp["spa_proj_b"] = b_row(p["spa_proj_b"])

    pp["mlp_fc1_w"] = w_io(p["mlp_fc1_w"])
    pp["mlp_fc1_b"] = b_row(p["mlp_fc1_b"])
    pp["mlp_fc2_w"] = w_io(p["mlp_fc2_w"])
    pp["mlp_fc2_b"] = b_row(p["mlp_fc2_b"])
    return pp


# --------------------------------------------------------------------------
if __name__ == "__main__":
    # shapes consistent with the module constraints: dim = segment_dim * S, band = T,
    # H*W divisible by tmp
    B, T, H, W = 2, 2, 4, 4
    SEGMENT_DIM, TMP = 4, 4
    DIM = 16
    BAND = T

    key = jax.random.PRNGKey(0)
    k_x, k_p = jax.random.split(key)
    x = jax.random.normal(k_x, (B, T, H, W, DIM), jnp.float32)
    params = init_params(k_p, DIM, SEGMENT_DIM, TMP, BAND, mlp_ratio=4.0)
    prepped = prepare_params(params, DIM)   # one-time weight re-layout, outside jit

    fwd = jax.jit(functools.partial(permutator_block_forward_pallas,
                                    segment_dim=SEGMENT_DIM, tmp=TMP, skip_lam=1.0))
    out = fwd(x, prepped)
    jax.block_until_ready(out)

    ref = permutator_block_forward_ref(x, params, SEGMENT_DIM, TMP, skip_lam=1.0)
    assert out.shape == x.shape and out.dtype == jnp.float32
    err = float(jnp.max(jnp.abs(out - ref)))
    tol = 3e-2 if COMPUTE_DTYPE == jnp.bfloat16 else 2e-3
    assert np.isfinite(err) and err < tol, f"mismatch vs reference: {err}"

    print("KERNEL_OK")
</pallas_src>

<mosaic_0001>
module attributes {stable_mosaic.version = 11 : i64} {
  func.func @_ln_kernel(%arg0: i32, %arg1: memref<16x16xf32, #tpu.memory_space<vmem>>, %arg2: memref<1x16xf32, #tpu.memory_space<vmem>>, %arg3: memref<1x16xf32, #tpu.memory_space<vmem>>, %arg4: memref<16x16xbf16, #tpu.memory_space<vmem>>) attributes {dimension_semantics = [#tpu.dimension_semantics<parallel>], iteration_bounds = array<i64: 4>, scalar_prefetch = 0 : i64, scratch_operands = 0 : i64, tpu.core_type = #tpu.core_type<tc>, window_params = [{transform_indices = @transform_0, window_bounds = array<i64: 16, 16>}, {pipeline_mode = #tpu.pipeline_mode<synchronous>, transform_indices = @transform_1, window_bounds = array<i64: 1, 16>}, {pipeline_mode = #tpu.pipeline_mode<synchronous>, transform_indices = @transform_2, window_bounds = array<i64: 1, 16>}, {transform_indices = @transform_3, window_bounds = array<i64: 16, 16>}]} {
    %c0 = arith.constant 0 : index
    %c0_0 = arith.constant 0 : index
    %0 = vector.load %arg1[%c0, %c0_0] : memref<16x16xf32, #tpu.memory_space<vmem>>, vector<16x16xf32>
    %cst = arith.constant dense<0.000000e+00> : vector<16xf32>
    %1 = vector.multi_reduction <add>, %0, %cst [1] : vector<16x16xf32> to vector<16xf32>
    %2 = vector.shape_cast %1 : vector<16xf32> to vector<16x1xf32>
    %cst_1 = arith.constant 1.600000e+01 : f32
    %3 = vector.broadcast %cst_1 : f32 to vector<16x1xf32>
    %4 = arith.divf %2, %3 : vector<16x1xf32>
    %5 = vector.broadcast %4 : vector<16x1xf32> to vector<16x16xf32>
    %6 = arith.subf %0, %5 : vector<16x16xf32>
    %7 = arith.mulf %6, %6 : vector<16x16xf32>
    %cst_2 = arith.constant dense<0.000000e+00> : vector<16xf32>
    %8 = vector.multi_reduction <add>, %7, %cst_2 [1] : vector<16x16xf32> to vector<16xf32>
    %9 = vector.shape_cast %8 : vector<16xf32> to vector<16x1xf32>
    %cst_3 = arith.constant 1.600000e+01 : f32
    %10 = vector.broadcast %cst_3 : f32 to vector<16x1xf32>
    %11 = arith.divf %9, %10 : vector<16x1xf32>
    %12 = vector.broadcast %4 : vector<16x1xf32> to vector<16x16xf32>
    %13 = arith.subf %0, %12 : vector<16x16xf32>
    %cst_4 = arith.constant 9.99999974E-6 : f32
    %14 = vector.broadcast %cst_4 : f32 to vector<16x1xf32>
    %15 = arith.addf %11, %14 : vector<16x1xf32>
    %16 = math.rsqrt %15 : vector<16x1xf32>
    %17 = vector.broadcast %16 : vector<16x1xf32> to vector<16x16xf32>
    %18 = arith.mulf %13, %17 : vector<16x16xf32>
    %c0_5 = arith.constant 0 : index
    %c0_6 = arith.constant 0 : index
    %19 = vector.load %arg2[%c0_5, %c0_6] : memref<1x16xf32, #tpu.memory_space<vmem>>, vector<1x16xf32>
    %20 = vector.broadcast %19 : vector<1x16xf32> to vector<16x16xf32>
    %21 = arith.mulf %18, %20 : vector<16x16xf32>
    %c0_7 = arith.constant 0 : index
    %c0_8 = arith.constant 0 : index
    %22 = vector.load %arg3[%c0_7, %c0_8] : memref<1x16xf32, #tpu.memory_space<vmem>>, vector<1x16xf32>
    %23 = vector.broadcast %22 : vector<1x16xf32> to vector<16x16xf32>
    %24 = arith.addf %21, %23 : vector<16x16xf32>
    %25 = arith.truncf %24 : vector<16x16xf32> to vector<16x16xbf16>
    %c0_9 = arith.constant 0 : index
    %c0_10 = arith.constant 0 : index
    %26 = vector.load %arg4[%c0_9, %c0_10] : memref<16x16xbf16, #tpu.memory_space<vmem>>, vector<16x16xbf16>
    tpu.vector_store %arg4[%c0_9, %c0_10], %25 {strides = array<i32>} : memref<16x16xbf16, #tpu.memory_space<vmem>>, vector<16x16xbf16>,
    return
  }
  func.func @transform_0(%arg0: i32) -> (i32, i32) {
    %c0_i32 = arith.constant 0 : i32
    %c0_i32_0 = arith.constant 0 : i32
    return %arg0, %c0_i32 : i32, i32
  }
  func.func @transform_1(%arg0: i32) -> (i32, i32) {
    %c0_i32 = arith.constant 0 : i32
    %c0_i32_0 = arith.constant 0 : i32
    %c0_i32_1 = arith.constant 0 : i32
    return %c0_i32, %c0_i32_0 : i32, i32
  }
  func.func @transform_2(%arg0: i32) -> (i32, i32) {
    %c0_i32 = arith.constant 0 : i32
    %c0_i32_0 = arith.constant 0 : i32
    %c0_i32_1 = arith.constant 0 : i32
    return %c0_i32, %c0_i32_0 : i32, i32
  }
  func.func @transform_3(%arg0: i32) -> (i32, i32) {
    %c0_i32 = arith.constant 0 : i32
    %c0_i32_0 = arith.constant 0 : i32
    return %arg0, %c0_i32 : i32, i32
  }
}

module attributes {stable_mosaic.version = 11 : i64} {
  func.func @_matmul_kernel(%arg0: i32, %arg1: memref<32x8xbf16, #tpu.memory_space<vmem>>, %arg2: memref<8x8xbf16, #tpu.memory_space<vmem>>, %arg3: memref<32x8xbf16, #tpu.memory_space<vmem>>) attributes {dimension_semantics = [#tpu.dimension_semantics<parallel>], iteration_bounds = array<i64: 4>, scalar_prefetch = 0 : i64, scratch_operands = 0 : i64, tpu.core_type = #tpu.core_type<tc>, window_params = [{transform_indices = @transform_0, window_bounds = array<i64: 32, 8>}, {pipeline_mode = #tpu.pipeline_mode<synchronous>, transform_indices = @transform_1, window_bounds = array<i64: 8, 8>}, {transform_indices = @transform_2, window_bounds = array<i64: 32, 8>}]} {
    %c0 = arith.constant 0 : index
    %c0_0 = arith.constant 0 : index
    %0 = vector.load %arg1[%c0, %c0_0] : memref<32x8xbf16, #tpu.memory_space<vmem>>, vector<32x8xbf16>
    %c0_1 = arith.constant 0 : index
    %c0_2 = arith.constant 0 : index
    %1 = vector.load %arg2[%c0_1, %c0_2] : memref<8x8xbf16, #tpu.memory_space<vmem>>, vector<8x8xbf16>
    %cst = arith.constant dense<0.000000e+00> : vector<32x8xf32>
    %2 = tpu.matmul %0, %1, %cst {dimension_numbers = #tpu.dot_dimension_numbers<[1], [0], [0], [1], [0, 0, 1, 1], [], []>} : vector<32x8xbf16>, vector<8x8xbf16>, vector<32x8xf32> -> vector<32x8xf32>
    %3 = arith.truncf %2 : vector<32x8xf32> to vector<32x8xbf16>
    %c0_3 = arith.constant 0 : index
    %c0_4 = arith.constant 0 : index
    %4 = vector.load %arg3[%c0_3, %c0_4] : memref<32x8xbf16, #tpu.memory_space<vmem>>, vector<32x8xbf16>
    tpu.vector_store %arg3[%c0_3, %c0_4], %3 {strides = array<i32>} : memref<32x8xbf16, #tpu.memory_space<vmem>>, vector<32x8xbf16>,
    return
  }
  func.func @transform_0(%arg0: i32) -> (i32, i32) {
    %c0_i32 = arith.constant 0 : i32
    %c0_i32_0 = arith.constant 0 : i32
    return %arg0, %c0_i32 : i32, i32
  }
  func.func @transform_1(%arg0: i32) -> (i32, i32) {
    %c0_i32 = arith.constant 0 : i32
    %c0_i32_0 = arith.constant 0 : i32
    %c0_i32_1 = arith.constant 0 : i32
    return %c0_i32, %c0_i32_0 : i32, i32
  }
  func.func @transform_2(%arg0: i32) -> (i32, i32) {
    %c0_i32 = arith.constant 0 : i32
    %c0_i32_0 = arith.constant 0 : i32
    return %arg0, %c0_i32 : i32, i32
  }
}

module attributes {stable_mosaic.version = 11 : i64} {
  func.func @_proj_residual_kernel(%arg0: i32, %arg1: memref<16x16xbf16, #tpu.memory_space<vmem>>, %arg2: memref<16x16xf32, #tpu.memory_space<vmem>>, %arg3: memref<16x16xbf16, #tpu.memory_space<vmem>>, %arg4: memref<1x16xf32, #tpu.memory_space<vmem>>, %arg5: memref<16x16xf32, #tpu.memory_space<vmem>>) attributes {dimension_semantics = [#tpu.dimension_semantics<parallel>], iteration_bounds = array<i64: 4>, scalar_prefetch = 0 : i64, scratch_operands = 0 : i64, tpu.core_type = #tpu.core_type<tc>, window_params = [{transform_indices = @transform_0, window_bounds = array<i64: 16, 16>}, {transform_indices = @transform_1, window_bounds = array<i64: 16, 16>}, {pipeline_mode = #tpu.pipeline_mode<synchronous>, transform_indices = @transform_2, window_bounds = array<i64: 16, 16>}, {pipeline_mode = #tpu.pipeline_mode<synchronous>, transform_indices = @transform_3, window_bounds = array<i64: 1, 16>}, {transform_indices = @transform_4, window_bounds = array<i64: 16, 16>}]} {
    %c0 = arith.constant 0 : index
    %c0_0 = arith.constant 0 : index
    %0 = vector.load %arg1[%c0, %c0_0] : memref<16x16xbf16, #tpu.memory_space<vmem>>, vector<16x16xbf16>
    %c0_1 = arith.constant 0 : index
    %c0_2 = arith.constant 0 : index
    %1 = vector.load %arg3[%c0_1, %c0_2] : memref<16x16xbf16, #tpu.memory_space<vmem>>, vector<16x16xbf16>
    %cst = arith.constant dense<0.000000e+00> : vector<16x16xf32>
    %2 = tpu.matmul %0, %1, %cst {dimension_numbers = #tpu.dot_dimension_numbers<[1], [0], [0], [1], [0, 0, 1, 1], [], []>} : vector<16x16xbf16>, vector<16x16xbf16>, vector<16x16xf32> -> vector<16x16xf32>
    %c0_3 = arith.constant 0 : index
    %c0_4 = arith.constant 0 : index
    %3 = vector.load %arg4[%c0_3, %c0_4] : memref<1x16xf32, #tpu.memory_space<vmem>>, vector<1x16xf32>
    %4 = vector.broadcast %3 : vector<1x16xf32> to vector<16x16xf32>
    %5 = arith.addf %2, %4 : vector<16x16xf32>
    %c0_5 = arith.constant 0 : index
    %c0_6 = arith.constant 0 : index
    %6 = vector.load %arg2[%c0_5, %c0_6] : memref<16x16xf32, #tpu.memory_space<vmem>>, vector<16x16xf32>
    %cst_7 = arith.constant 1.000000e+00 : f32
    %7 = vector.broadcast %cst_7 : f32 to vector<16x16xf32>
    %8 = arith.mulf %5, %7 : vector<16x16xf32>
    %9 = arith.addf %6, %8 : vector<16x16xf32>
    %c0_8 = arith.constant 0 : index
    %c0_9 = arith.constant 0 : index
    %10 = vector.load %arg5[%c0_8, %c0_9] : memref<16x16xf32, #tpu.memory_space<vmem>>, vector<16x16xf32>
    tpu.vector_store %arg5[%c0_8, %c0_9], %9 {strides = array<i32>} : memref<16x16xf32, #tpu.memory_space<vmem>>, vector<16x16xf32>,
    return
  }
  func.func @transform_0(%arg0: i32) -> (i32, i32) {
    %c0_i32 = arith.constant 0 : i32
    %c0_i32_0 = arith.constant 0 : i32
    return %arg0, %c0_i32 : i32, i32
  }
  func.func @transform_1(%arg0: i32) -> (i32, i32) {
    %c0_i32 = arith.constant 0 : i32
    %c0_i32_0 = arith.constant 0 : i32
    return %arg0, %c0_i32 : i32, i32
  }
  func.func @transform_2(%arg0: i32) -> (i32, i32) {
    %c0_i32 = arith.constant 0 : i32
    %c0_i32_0 = arith.constant 0 : i32
    %c0_i32_1 = arith.constant 0 : i32
    return %c0_i32, %c0_i32_0 : i32, i32
  }
  func.func @transform_3(%arg0: i32) -> (i32, i32) {
    %c0_i32 = arith.constant 0 : i32
    %c0_i32_0 = arith.constant 0 : i32
    %c0_i32_1 = arith.constant 0 : i32
    return %c0_i32, %c0_i32_0 : i32, i32
  }
  func.func @transform_4(%arg0: i32) -> (i32, i32) {
    %c0_i32 = arith.constant 0 : i32
    %c0_i32_0 = arith.constant 0 : i32
    return %arg0, %c0_i32 : i32, i32
  }
}

module attributes {stable_mosaic.version = 11 : i64} {
  func.func @_ln_kernel(%arg0: i32, %arg1: memref<16x16xf32, #tpu.memory_space<vmem>>, %arg2: memref<1x16xf32, #tpu.memory_space<vmem>>, %arg3: memref<1x16xf32, #tpu.memory_space<vmem>>, %arg4: memref<16x16xbf16, #tpu.memory_space<vmem>>) attributes {dimension_semantics = [#tpu.dimension_semantics<parallel>], iteration_bounds = array<i64: 4>, scalar_prefetch = 0 : i64, scratch_operands = 0 : i64, tpu.core_type = #tpu.core_type<tc>, window_params = [{transform_indices = @transform_0, window_bounds = array<i64: 16, 16>}, {pipeline_mode = #tpu.pipeline_mode<synchronous>, transform_indices = @transform_1, window_bounds = array<i64: 1, 16>}, {pipeline_mode = #tpu.pipeline_mode<synchronous>, transform_indices = @transform_2, window_bounds = array<i64: 1, 16>}, {transform_indices = @transform_3, window_bounds = array<i64: 16, 16>}]} {
    %c0 = arith.constant 0 : index
    %c0_0 = arith.constant 0 : index
    %0 = vector.load %arg1[%c0, %c0_0] : memref<16x16xf32, #tpu.memory_space<vmem>>, vector<16x16xf32>
    %cst = arith.constant dense<0.000000e+00> : vector<16xf32>
    %1 = vector.multi_reduction <add>, %0, %cst [1] : vector<16x16xf32> to vector<16xf32>
    %2 = vector.shape_cast %1 : vector<16xf32> to vector<16x1xf32>
    %cst_1 = arith.constant 1.600000e+01 : f32
    %3 = vector.broadcast %cst_1 : f32 to vector<16x1xf32>
    %4 = arith.divf %2, %3 : vector<16x1xf32>
    %5 = vector.broadcast %4 : vector<16x1xf32> to vector<16x16xf32>
    %6 = arith.subf %0, %5 : vector<16x16xf32>
    %7 = arith.mulf %6, %6 : vector<16x16xf32>
    %cst_2 = arith.constant dense<0.000000e+00> : vector<16xf32>
    %8 = vector.multi_reduction <add>, %7, %cst_2 [1] : vector<16x16xf32> to vector<16xf32>
    %9 = vector.shape_cast %8 : vector<16xf32> to vector<16x1xf32>
    %cst_3 = arith.constant 1.600000e+01 : f32
    %10 = vector.broadcast %cst_3 : f32 to vector<16x1xf32>
    %11 = arith.divf %9, %10 : vector<16x1xf32>
    %12 = vector.broadcast %4 : vector<16x1xf32> to vector<16x16xf32>
    %13 = arith.subf %0, %12 : vector<16x16xf32>
    %cst_4 = arith.constant 9.99999974E-6 : f32
    %14 = vector.broadcast %cst_4 : f32 to vector<16x1xf32>
    %15 = arith.addf %11, %14 : vector<16x1xf32>
    %16 = math.rsqrt %15 : vector<16x1xf32>
    %17 = vector.broadcast %16 : vector<16x1xf32> to vector<16x16xf32>
    %18 = arith.mulf %13, %17 : vector<16x16xf32>
    %c0_5 = arith.constant 0 : index
    %c0_6 = arith.constant 0 : index
    %19 = vector.load %arg2[%c0_5, %c0_6] : memref<1x16xf32, #tpu.memory_space<vmem>>, vector<1x16xf32>
    %20 = vector.broadcast %19 : vector<1x16xf32> to vector<16x16xf32>
    %21 = arith.mulf %18, %20 : vector<16x16xf32>
    %c0_7 = arith.constant 0 : index
    %c0_8 = arith.constant 0 : index
    %22 = vector.load %arg3[%c0_7, %c0_8] : memref<1x16xf32, #tpu.memory_space<vmem>>, vector<1x16xf32>
    %23 = vector.broadcast %22 : vector<1x16xf32> to vector<16x16xf32>
    %24 = arith.addf %21, %23 : vector<16x16xf32>
    %25 = arith.truncf %24 : vector<16x16xf32> to vector<16x16xbf16>
    %c0_9 = arith.constant 0 : index
    %c0_10 = arith.constant 0 : index
    %26 = vector.load %arg4[%c0_9, %c0_10] : memref<16x16xbf16, #tpu.memory_space<vmem>>, vector<16x16xbf16>
    tpu.vector_store %arg4[%c0_9, %c0_10], %25 {strides = array<i32>} : memref<16x16xbf16, #tpu.memory_space<vmem>>, vector<16x16xbf16>,
    return
  }
  func.func @transform_0(%arg0: i32) -> (i32, i32) {
    %c0_i32 = arith.constant 0 : i32
    %c0_i32_0 = arith.constant 0 : i32
    return %arg0, %c0_i32 : i32, i32
  }
  func.func @transform_1(%arg0: i32) -> (i32, i32) {
    %c0_i32 = arith.constant 0 : i32
    %c0_i32_0 = arith.constant 0 : i32
    %c0_i32_1 = arith.constant 0 : i32
    return %c0_i32, %c0_i32_0 : i32, i32
  }
  func.func @transform_2(%arg0: i32) -> (i32, i32) {
    %c0_i32 = arith.constant 0 : i32
    %c0_i32_0 = arith.constant 0 : i32
    %c0_i32_1 = arith.constant 0 : i32
    return %c0_i32, %c0_i32_0 : i32, i32
  }
  func.func @transform_3(%arg0: i32) -> (i32, i32) {
    %c0_i32 = arith.constant 0 : i32
    %c0_i32_0 = arith.constant 0 : i32
    return %arg0, %c0_i32 : i32, i32
  }
}

module attributes {stable_mosaic.version = 11 : i64} {
  func.func @_matmul_kernel(%arg0: i32, %arg1: memref<16x16xbf16, #tpu.memory_space<vmem>>, %arg2: memref<16x16xbf16, #tpu.memory_space<vmem>>, %arg3: memref<16x16xbf16, #tpu.memory_space<vmem>>) attributes {dimension_semantics = [#tpu.dimension_semantics<parallel>], iteration_bounds = array<i64: 4>, scalar_prefetch = 0 : i64, scratch_operands = 0 : i64, tpu.core_type = #tpu.core_type<tc>, window_params = [{transform_indices = @transform_0, window_bounds = array<i64: 16, 16>}, {pipeline_mode = #tpu.pipeline_mode<synchronous>, transform_indices = @transform_1, window_bounds = array<i64: 16, 16>}, {transform_indices = @transform_2, window_bounds = array<i64: 16, 16>}]} {
    %c0 = arith.constant 0 : index
    %c0_0 = arith.constant 0 : index
    %0 = vector.load %arg1[%c0, %c0_0] : memref<16x16xbf16, #tpu.memory_space<vmem>>, vector<16x16xbf16>
    %c0_1 = arith.constant 0 : index
    %c0_2 = arith.constant 0 : index
    %1 = vector.load %arg2[%c0_1, %c0_2] : memref<16x16xbf16, #tpu.memory_space<vmem>>, vector<16x16xbf16>
    %cst = arith.constant dense<0.000000e+00> : vector<16x16xf32>
    %2 = tpu.matmul %0, %1, %cst {dimension_numbers = #tpu.dot_dimension_numbers<[1], [0], [0], [1], [0, 0, 1, 1], [], []>} : vector<16x16xbf16>, vector<16x16xbf16>, vector<16x16xf32> -> vector<16x16xf32>
    %3 = arith.truncf %2 : vector<16x16xf32> to vector<16x16xbf16>
    %c0_3 = arith.constant 0 : index
    %c0_4 = arith.constant 0 : index
    %4 = vector.load %arg3[%c0_3, %c0_4] : memref<16x16xbf16, #tpu.memory_space<vmem>>, vector<16x16xbf16>
    tpu.vector_store %arg3[%c0_3, %c0_4], %3 {strides = array<i32>} : memref<16x16xbf16, #tpu.memory_space<vmem>>, vector<16x16xbf16>,
    return
  }
  func.func @transform_0(%arg0: i32) -> (i32, i32) {
    %c0_i32 = arith.constant 0 : i32
    %c0_i32_0 = arith.constant 0 : i32
    return %arg0, %c0_i32 : i32, i32
  }
  func.func @transform_1(%arg0: i32) -> (i32, i32) {
    %c0_i32 = arith.constant 0 : i32
    %c0_i32_0 = arith.constant 0 : i32
    %c0_i32_1 = arith.constant 0 : i32
    return %c0_i32, %c0_i32_0 : i32, i32
  }
  func.func @transform_2(%arg0: i32) -> (i32, i32) {
    %c0_i32 = arith.constant 0 : i32
    %c0_i32_0 = arith.constant 0 : i32
    return %arg0, %c0_i32 : i32, i32
  }
}

module attributes {stable_mosaic.version = 11 : i64} {
  func.func @_combine_proj_residual_kernel(%arg0: i32, %arg1: i32, %arg2: memref<1x16x16xbf16, #tpu.memory_space<vmem>>, %arg3: memref<1x16x16xbf16, #tpu.memory_space<vmem>>, %arg4: memref<1x16x16xbf16, #tpu.memory_space<vmem>>, %arg5: memref<1x3x16xf32, #tpu.memory_space<vmem>>, %arg6: memref<1x16x16xf32, #tpu.memory_space<vmem>>, %arg7: memref<16x16xbf16, #tpu.memory_space<vmem>>, %arg8: memref<1x16xf32, #tpu.memory_space<vmem>>, %arg9: memref<1x16x16xf32, #tpu.memory_space<vmem>>) attributes {dimension_semantics = [#tpu.dimension_semantics<parallel>, #tpu.dimension_semantics<parallel>], iteration_bounds = array<i64: 2, 2>, scalar_prefetch = 0 : i64, scratch_operands = 0 : i64, tpu.core_type = #tpu.core_type<tc>, window_params = [{transform_indices = @transform_0, window_bounds = array<i64: 1, 16, 16>}, {transform_indices = @transform_1, window_bounds = array<i64: 1, 16, 16>}, {transform_indices = @transform_2, window_bounds = array<i64: 1, 16, 16>}, {transform_indices = @transform_3, window_bounds = array<i64: 1, 3, 16>}, {transform_indices = @transform_4, window_bounds = array<i64: 1, 16, 16>}, {pipeline_mode = #tpu.pipeline_mode<synchronous>, transform_indices = @transform_5, window_bounds = array<i64: 16, 16>}, {pipeline_mode = #tpu.pipeline_mode<synchronous>, transform_indices = @transform_6, window_bounds = array<i64: 1, 16>}, {transform_indices = @transform_7, window_bounds = array<i64: 1, 16, 16>}]} {
    %c0 = arith.constant 0 : index
    %c0_0 = arith.constant 0 : index
    %c0_1 = arith.constant 0 : index
    %0 = vector.load %arg5[%c0, %c0_0, %c0_1] : memref<1x3x16xf32, #tpu.memory_space<vmem>>, vector<1x3x16xf32>
    %1 = vector.shape_cast %0 : vector<1x3x16xf32> to vector<3x16xf32>
    %2 = vector.extract_strided_slice %1 {offsets = [0, 0], sizes = [1, 16], strides = [1, 1]} : vector<3x16xf32> to vector<1x16xf32>
    %3 = vector.extract_strided_slice %1 {offsets = [1, 0], sizes = [1, 16], strides = [1, 1]} : vector<3x16xf32> to vector<1x16xf32>
    %4 = vector.extract_strided_slice %1 {offsets = [2, 0], sizes = [1, 16], strides = [1, 1]} : vector<3x16xf32> to vector<1x16xf32>
    %c0_2 = arith.constant 0 : index
    %c0_3 = arith.constant 0 : index
    %c0_4 = arith.constant 0 : index
    %5 = vector.load %arg2[%c0_2, %c0_3, %c0_4] : memref<1x16x16xbf16, #tpu.memory_space<vmem>>, vector<1x16x16xbf16>
    %6 = vector.shape_cast %5 : vector<1x16x16xbf16> to vector<16x16xbf16>
    %7 = arith.extf %6 : vector<16x16xbf16> to vector<16x16xf32>
    %8 = vector.broadcast %2 : vector<1x16xf32> to vector<16x16xf32>
    %9 = arith.mulf %7, %8 : vector<16x16xf32>
    %c0_5 = arith.constant 0 : index
    %c0_6 = arith.constant 0 : index
    %c0_7 = arith.constant 0 : index
    %10 = vector.load %arg3[%c0_5, %c0_6, %c0_7] : memref<1x16x16xbf16, #tpu.memory_space<vmem>>, vector<1x16x16xbf16>
    %11 = vector.shape_cast %10 : vector<1x16x16xbf16> to vector<16x16xbf16>
    %12 = arith.extf %11 : vector<16x16xbf16> to vector<16x16xf32>
    %13 = vector.broadcast %3 : vector<1x16xf32> to vector<16x16xf32>
    %14 = arith.mulf %12, %13 : vector<16x16xf32>
    %15 = arith.addf %9, %14 : vector<16x16xf32>
    %c0_8 = arith.constant 0 : index
    %c0_9 = arith.constant 0 : index
    %c0_10 = arith.constant 0 : index
    %16 = vector.load %arg4[%c0_8, %c0_9, %c0_10] : memref<1x16x16xbf16, #tpu.memory_space<vmem>>, vector<1x16x16xbf16>
    %17 = vector.shape_cast %16 : vector<1x16x16xbf16> to vector<16x16xbf16>
    %18 = arith.extf %17 : vector<16x16xbf16> to vector<16x16xf32>
    %19 = vector.broadcast %4 : vector<1x16xf32> to vector<16x16xf32>
    %20 = arith.mulf %18, %19 : vector<16x16xf32>
    %21 = arith.addf %15, %20 : vector<16x16xf32>
    %22 = arith.truncf %21 : vector<16x16xf32> to vector<16x16xbf16>
    %c0_11 = arith.constant 0 : index
    %c0_12 = arith.constant 0 : index
    %23 = vector.load %arg7[%c0_11, %c0_12] : memref<16x16xbf16, #tpu.memory_space<vmem>>, vector<16x16xbf16>
    %cst = arith.constant dense<0.000000e+00> : vector<16x16xf32>
    %24 = tpu.matmul %22, %23, %cst {dimension_numbers = #tpu.dot_dimension_numbers<[1], [0], [0], [1], [0, 0, 1, 1], [], []>} : vector<16x16xbf16>, vector<16x16xbf16>, vector<16x16xf32> -> vector<16x16xf32>
    %c0_13 = arith.constant 0 : index
    %c0_14 = arith.constant 0 : index
    %25 = vector.load %arg8[%c0_13, %c0_14] : memref<1x16xf32, #tpu.memory_space<vmem>>, vector<1x16xf32>
    %26 = vector.broadcast %25 : vector<1x16xf32> to vector<16x16xf32>
    %27 = arith.addf %24, %26 : vector<16x16xf32>
    %c0_15 = arith.constant 0 : index
    %c0_16 = arith.constant 0 : index
    %c0_17 = arith.constant 0 : index
    %28 = vector.load %arg6[%c0_15, %c0_16, %c0_17] : memref<1x16x16xf32, #tpu.memory_space<vmem>>, vector<1x16x16xf32>
    %29 = vector.shape_cast %28 : vector<1x16x16xf32> to vector<16x16xf32>
    %cst_18 = arith.constant 1.000000e+00 : f32
    %30 = vector.broadcast %cst_18 : f32 to vector<16x16xf32>
    %31 = arith.mulf %27, %30 : vector<16x16xf32>
    %32 = arith.addf %29, %31 : vector<16x16xf32>
    %c0_19 = arith.constant 0 : index
    %c0_20 = arith.constant 0 : index
    %c0_21 = arith.constant 0 : index
    %33 = vector.load %arg9[%c0_19, %c0_20, %c0_21] : memref<1x16x16xf32, #tpu.memory_space<vmem>>, vector<1x16x16xf32>
    %34 = vector.shape_cast %33 : vector<1x16x16xf32> to vector<16x16xf32>
    %35 = vector.shape_cast %32 : vector<16x16xf32> to vector<1x16x16xf32>
    tpu.vector_store %arg9[%c0_19, %c0_20, %c0_21], %35 {strides = array<i32>} : memref<1x16x16xf32, #tpu.memory_space<vmem>>, vector<1x16x16xf32>,
    return
  }
  func.func @transform_0(%arg0: i32, %arg1: i32) -> (i32, i32, i32) {
    %c0_i32 = arith.constant 0 : i32
    %c0_i32_0 = arith.constant 0 : i32
    return %arg0, %arg1, %c0_i32 : i32, i32, i32
  }
  func.func @transform_1(%arg0: i32, %arg1: i32) -> (i32, i32, i32) {
    %c0_i32 = arith.constant 0 : i32
    %c0_i32_0 = arith.constant 0 : i32
    return %arg0, %arg1, %c0_i32 : i32, i32, i32
  }
  func.func @transform_2(%arg0: i32, %arg1: i32) -> (i32, i32, i32) {
    %c0_i32 = arith.constant 0 : i32
    %c0_i32_0 = arith.constant 0 : i32
    return %arg0, %arg1, %c0_i32 : i32, i32, i32
  }
  func.func @transform_3(%arg0: i32, %arg1: i32) -> (i32, i32, i32) {
    %c0_i32 = arith.constant 0 : i32
    %c0_i32_0 = arith.constant 0 : i32
    %c0_i32_1 = arith.constant 0 : i32
    return %arg0, %c0_i32, %c0_i32_0 : i32, i32, i32
  }
  func.func @transform_4(%arg0: i32, %arg1: i32) -> (i32, i32, i32) {
    %c0_i32 = arith.constant 0 : i32
    %c0_i32_0 = arith.constant 0 : i32
    return %arg0, %arg1, %c0_i32 : i32, i32, i32
  }
  func.func @transform_5(%arg0: i32, %arg1: i32) -> (i32, i32) {
    %c0_i32 = arith.constant 0 : i32
    %c0_i32_0 = arith.constant 0 : i32
    %c0_i32_1 = arith.constant 0 : i32
    return %c0_i32, %c0_i32_0 : i32, i32
  }
  func.func @transform_6(%arg0: i32, %arg1: i32) -> (i32, i32) {
    %c0_i32 = arith.constant 0 : i32
    %c0_i32_0 = arith.constant 0 : i32
    %c0_i32_1 = arith.constant 0 : i32
    return %c0_i32, %c0_i32_0 : i32, i32
  }
  func.func @transform_7(%arg0: i32, %arg1: i32) -> (i32, i32, i32) {
    %c0_i32 = arith.constant 0 : i32
    %c0_i32_0 = arith.constant 0 : i32
    return %arg0, %arg1, %c0_i32 : i32, i32, i32
  }
}

module attributes {stable_mosaic.version = 11 : i64} {
  func.func @_mean_reweight_kernel(%arg0: i32, %arg1: i32, %arg2: memref<1x16x16xbf16, #tpu.memory_space<vmem>>, %arg3: memref<1x16x16xbf16, #tpu.memory_space<vmem>>, %arg4: memref<1x16x16xbf16, #tpu.memory_space<vmem>>, %arg5: memref<16x4xbf16, #tpu.memory_space<vmem>>, %arg6: memref<1x4xf32, #tpu.memory_space<vmem>>, %arg7: memref<4x48xbf16, #tpu.memory_space<vmem>>, %arg8: memref<1x48xf32, #tpu.memory_space<vmem>>, %arg9: memref<1x3x16xf32, #tpu.memory_space<vmem>>, %arg10: memref<1x16xf32, #tpu.memory_space<vmem>>) attributes {dimension_semantics = [#tpu.dimension_semantics<parallel>, #tpu.dimension_semantics<arbitrary>], iteration_bounds = array<i64: 2, 2>, scalar_prefetch = 0 : i64, scratch_operands = 1 : i64, tpu.core_type = #tpu.core_type<tc>, window_params = [{transform_indices = @transform_0, window_bounds = array<i64: 1, 16, 16>}, {transform_indices = @transform_1, window_bounds = array<i64: 1, 16, 16>}, {transform_indices = @transform_2, window_bounds = array<i64: 1, 16, 16>}, {pipeline_mode = #tpu.pipeline_mode<synchronous>, transform_indices = @transform_3, window_bounds = array<i64: 16, 4>}, {pipeline_mode = #tpu.pipeline_mode<synchronous>, transform_indices = @transform_4, window_bounds = array<i64: 1, 4>}, {pipeline_mode = #tpu.pipeline_mode<synchronous>, transform_indices = @transform_5, window_bounds = array<i64: 4, 48>}, {pipeline_mode = #tpu.pipeline_mode<synchronous>, transform_indices = @transform_6, window_bounds = array<i64: 1, 48>}, {transform_indices = @transform_7, window_bounds = array<i64: 1, 3, 16>}]} {
    %c0_i32 = arith.constant 0 : i32
    %0 = arith.cmpi eq, %arg1, %c0_i32 : i32
    %1 = arith.extui %0 : i1 to i32
    %c0_i32_0 = arith.constant 0 : i32
    %2 = arith.cmpi ne, %1, %c0_i32_0 : i32
    scf.if %2 {
      %cst_14 = arith.constant 0.000000e+00 : f32
      %22 = vector.broadcast %cst_14 : f32 to vector<1x16xf32>
      %c0_15 = arith.constant 0 : index
      %c0_16 = arith.constant 0 : index
      %23 = vector.load %arg10[%c0_15, %c0_16] : memref<1x16xf32, #tpu.memory_space<vmem>>, vector<1x16xf32>
      tpu.vector_store %arg10[%c0_15, %c0_16], %22 {strides = array<i32>} : memref<1x16xf32, #tpu.memory_space<vmem>>, vector<1x16xf32>,
    } else {
    }
    %c0 = arith.constant 0 : index
    %c0_1 = arith.constant 0 : index
    %c0_2 = arith.constant 0 : index
    %3 = vector.load %arg2[%c0, %c0_1, %c0_2] : memref<1x16x16xbf16, #tpu.memory_space<vmem>>, vector<1x16x16xbf16>
    %4 = vector.shape_cast %3 : vector<1x16x16xbf16> to vector<16x16xbf16>
    %5 = arith.extf %4 : vector<16x16xbf16> to vector<16x16xf32>
    %c0_3 = arith.constant 0 : index
    %c0_4 = arith.constant 0 : index
    %c0_5 = arith.constant 0 : index
    %6 = vector.load %arg3[%c0_3, %c0_4, %c0_5] : memref<1x16x16xbf16, #tpu.memory_space<vmem>>, vector<1x16x16xbf16>
    %7 = vector.shape_cast %6 : vector<1x16x16xbf16> to vector<16x16xbf16>
    %8 = arith.extf %7 : vector<16x16xbf16> to vector<16x16xf32>
    %9 = arith.addf %5, %8 : vector<16x16xf32>
    %c0_6 = arith.constant 0 : index
    %c0_7 = arith.constant 0 : index
    %c0_8 = arith.constant 0 : index
    %10 = vector.load %arg4[%c0_6, %c0_7, %c0_8] : memref<1x16x16xbf16, #tpu.memory_space<vmem>>, vector<1x16x16xbf16>
    %11 = vector.shape_cast %10 : vector<1x16x16xbf16> to vector<16x16xbf16>
    %12 = arith.extf %11 : vector<16x16xbf16> to vector<16x16xf32>
    %13 = arith.addf %9, %12 : vector<16x16xf32>
    %c0_9 = arith.constant 0 : index
    %c0_10 = arith.constant 0 : index
    %14 = vector.load %arg10[%c0_9, %c0_10] : memref<1x16xf32, #tpu.memory_space<vmem>>, vector<1x16xf32>
    %cst = arith.constant dense<0.000000e+00> : vector<16xf32>
    %15 = vector.multi_reduction <add>, %13, %cst [0] : vector<16x16xf32> to vector<16xf32>
    %16 = vector.shape_cast %15 : vector<16xf32> to vector<1x16xf32>
    %17 = arith.addf %14, %16 : vector<1x16xf32>
    %c0_11 = arith.constant 0 : index
    %c0_12 = arith.constant 0 : index
    %18 = vector.load %arg10[%c0_11, %c0_12] : memref<1x16xf32, #tpu.memory_space<vmem>>, vector<1x16xf32>
    tpu.vector_store %arg10[%c0_11, %c0_12], %17 {strides = array<i32>} : memref<1x16xf32, #tpu.memory_space<vmem>>, vector<1x16xf32>,
    %c1_i32 = arith.constant 1 : i32
    %19 = arith.cmpi eq, %arg1, %c1_i32 : i32
    %20 = arith.extui %19 : i1 to i32
    %c0_i32_13 = arith.constant 0 : i32
    %21 = arith.cmpi ne, %20, %c0_i32_13 : i32
    scf.if %21 {
      %c0_14 = arith.constant 0 : index
      %c0_15 = arith.constant 0 : index
      %22 = vector.load %arg10[%c0_14, %c0_15] : memref<1x16xf32, #tpu.memory_space<vmem>>, vector<1x16xf32>
      %cst_16 = arith.constant 3.125000e-02 : f32
      %23 = vector.broadcast %cst_16 : f32 to vector<1x16xf32>
      %24 = arith.mulf %22, %23 : vector<1x16xf32>
      %25 = arith.truncf %24 : vector<1x16xf32> to vector<1x16xbf16>
      %c0_17 = arith.constant 0 : index
      %c0_18 = arith.constant 0 : index
      %26 = vector.load %arg5[%c0_17, %c0_18] : memref<16x4xbf16, #tpu.memory_space<vmem>>, vector<16x4xbf16>
      %cst_19 = arith.constant dense<0.000000e+00> : vector<1x4xf32>
      %27 = tpu.matmul %25, %26, %cst_19 {dimension_numbers = #tpu.dot_dimension_numbers<[1], [0], [0], [1], [0, 0, 1, 1], [], []>} : vector<1x16xbf16>, vector<16x4xbf16>, vector<1x4xf32> -> vector<1x4xf32>
      %c0_20 = arith.constant 0 : index
      %c0_21 = arith.constant 0 : index
      %28 = vector.load %arg6[%c0_20, %c0_21] : memref<1x4xf32, #tpu.memory_space<vmem>>, vector<1x4xf32>
      %29 = arith.addf %27, %28 : vector<1x4xf32>
      %cst_22 = arith.constant 5.000000e-01 : f32
      %30 = vector.broadcast %cst_22 : f32 to vector<1x4xf32>
      %31 = arith.mulf %30, %29 : vector<1x4xf32>
      %cst_23 = arith.constant 0.707106769 : f32
      %32 = vector.broadcast %cst_23 : f32 to vector<1x4xf32>
      %33 = arith.mulf %29, %32 : vector<1x4xf32>
      %34 = math.erf %33 : vector<1x4xf32>
      %cst_24 = arith.constant 1.000000e+00 : f32
      %35 = vector.broadcast %cst_24 : f32 to vector<1x4xf32>
      %36 = arith.addf %35, %34 : vector<1x4xf32>
      %37 = arith.mulf %31, %36 : vector<1x4xf32>
      %38 = arith.truncf %37 : vector<1x4xf32> to vector<1x4xbf16>
      %c0_25 = arith.constant 0 : index
      %c0_26 = arith.constant 0 : index
      %39 = vector.load %arg7[%c0_25, %c0_26] : memref<4x48xbf16, #tpu.memory_space<vmem>>, vector<4x48xbf16>
      %cst_27 = arith.constant dense<0.000000e+00> : vector<1x48xf32>
      %40 = tpu.matmul %38, %39, %cst_27 {dimension_numbers = #tpu.dot_dimension_numbers<[1], [0], [0], [1], [0, 0, 1, 1], [], []>} : vector<1x4xbf16>, vector<4x48xbf16>, vector<1x48xf32> -> vector<1x48xf32>
      %c0_28 = arith.constant 0 : index
      %c0_29 = arith.constant 0 : index
      %41 = vector.load %arg8[%c0_28, %c0_29] : memref<1x48xf32, #tpu.memory_space<vmem>>, vector<1x48xf32>
      %42 = arith.addf %40, %41 : vector<1x48xf32>
      %43 = vector.extract_strided_slice %42 {offsets = [0, 0], sizes = [1, 16], strides = [1, 1]} : vector<1x48xf32> to vector<1x16xf32>
      %44 = vector.extract_strided_slice %42 {offsets = [0, 16], sizes = [1, 16], strides = [1, 1]} : vector<1x48xf32> to vector<1x16xf32>
      %45 = vector.extract_strided_slice %42 {offsets = [0, 32], sizes = [1, 16], strides = [1, 1]} : vector<1x48xf32> to vector<1x16xf32>
      %46 = arith.maximumf %43, %44 : vector<1x16xf32>
      %47 = arith.maximumf %46, %45 : vector<1x16xf32>
      %48 = arith.subf %43, %47 : vector<1x16xf32>
      %49 = math.exp %48 : vector<1x16xf32>
      %50 = arith.subf %44, %47 : vector<1x16xf32>
      %51 = math.exp %50 : vector<1x16xf32>
      %52 = arith.subf %45, %47 : vector<1x16xf32>
      %53 = math.exp %52 : vector<1x16xf32>
      %54 = arith.addf %49, %51 : vector<1x16xf32>
      %55 = arith.addf %54, %53 : vector<1x16xf32>
      %cst_30 = arith.constant 1.000000e+00 : f32
      %56 = vector.broadcast %cst_30 : f32 to vector<1x16xf32>
      %57 = arith.divf %56, %55 : vector<1x16xf32>
      %58 = arith.mulf %49, %57 : vector<1x16xf32>
      %59 = arith.mulf %51, %57 : vector<1x16xf32>
      %60 = arith.mulf %53, %57 : vector<1x16xf32>
      %61 = tpu.concatenate %58, %59, %60 in 0 : vector<1x16xf32>, vector<1x16xf32>, vector<1x16xf32> -> vector<3x16xf32>
      %c0_31 = arith.constant 0 : index
      %c0_32 = arith.constant 0 : index
      %c0_33 = arith.constant 0 : index
      %62 = vector.load %arg9[%c0_31, %c0_32, %c0_33] : memref<1x3x16xf32, #tpu.memory_space<vmem>>, vector<1x3x16xf32>
      %63 = vector.shape_cast %62 : vector<1x3x16xf32> to vector<3x16xf32>
      %64 = vector.shape_cast %61 : vector<3x16xf32> to vector<1x3x16xf32>
      tpu.vector_store %arg9[%c0_31, %c0_32, %c0_33], %64 {strides = array<i32>} : memref<1x3x16xf32, #tpu.memory_space<vmem>>, vector<1x3x16xf32>,
    } else {
    }
    return
  }
  func.func @transform_0(%arg0: i32, %arg1: i32) -> (i32, i32, i32) {
    %c0_i32 = arith.constant 0 : i32
    %c0_i32_0 = arith.constant 0 : i32
    return %arg0, %arg1, %c0_i32 : i32, i32, i32
  }
  func.func @transform_1(%arg0: i32, %arg1: i32) -> (i32, i32, i32) {
    %c0_i32 = arith.constant 0 : i32
    %c0_i32_0 = arith.constant 0 : i32
    return %arg0, %arg1, %c0_i32 : i32, i32, i32
  }
  func.func @transform_2(%arg0: i32, %arg1: i32) -> (i32, i32, i32) {
    %c0_i32 = arith.constant 0 : i32
    %c0_i32_0 = arith.constant 0 : i32
    return %arg0, %arg1, %c0_i32 : i32, i32, i32
  }
  func.func @transform_3(%arg0: i32, %arg1: i32) -> (i32, i32) {
    %c0_i32 = arith.constant 0 : i32
    %c0_i32_0 = arith.constant 0 : i32
    %c0_i32_1 = arith.constant 0 : i32
    return %c0_i32, %c0_i32_0 : i32, i32
  }
  func.func @transform_4(%arg0: i32, %arg1: i32) -> (i32, i32) {
    %c0_i32 = arith.constant 0 : i32
    %c0_i32_0 = arith.constant 0 : i32
    %c0_i32_1 = arith.constant 0 : i32
    return %c0_i32, %c0_i32_0 : i32, i32
  }
  func.func @transform_5(%arg0: i32, %arg1: i32) -> (i32, i32) {
    %c0_i32 = arith.constant 0 : i32
    %c0_i32_0 = arith.constant 0 : i32
    %c0_i32_1 = arith.constant 0 : i32
    return %c0_i32, %c0_i32_0 : i32, i32
  }
  func.func @transform_6(%arg0: i32, %arg1: i32) -> (i32, i32) {
    %c0_i32 = arith.constant 0 : i32
    %c0_i32_0 = arith.constant 0 : i32
    %c0_i32_1 = arith.constant 0 : i32
    return %c0_i32, %c0_i32_0 : i32, i32
  }
  func.func @transform_7(%arg0: i32, %arg1: i32) -> (i32, i32, i32) {
    %c0_i32 = arith.constant 0 : i32
    %c0_i32_0 = arith.constant 0 : i32
    %c0_i32_1 = arith.constant 0 : i32
    return %arg0, %c0_i32, %c0_i32_0 : i32, i32, i32
  }
}

module attributes {stable_mosaic.version = 11 : i64} {
  func.func @_ln_mlp_residual_kernel(%arg0: i32, %arg1: memref<16x16xf32, #tpu.memory_space<vmem>>, %arg2: memref<1x16xf32, #tpu.memory_space<vmem>>, %arg3: memref<1x16xf32, #tpu.memory_space<vmem>>, %arg4: memref<16x64xbf16, #tpu.memory_space<vmem>>, %arg5: memref<1x64xf32, #tpu.memory_space<vmem>>, %arg6: memref<64x16xbf16, #tpu.memory_space<vmem>>, %arg7: memref<1x16xf32, #tpu.memory_space<vmem>>, %arg8: memref<16x16xf32, #tpu.memory_space<vmem>>) attributes {dimension_semantics = [#tpu.dimension_semantics<parallel>], iteration_bounds = array<i64: 4>, scalar_prefetch = 0 : i64, scratch_operands = 0 : i64, tpu.core_type = #tpu.core_type<tc>, window_params = [{transform_indices = @transform_0, window_bounds = array<i64: 16, 16>}, {pipeline_mode = #tpu.pipeline_mode<synchronous>, transform_indices = @transform_1, window_bounds = array<i64: 1, 16>}, {pipeline_mode = #tpu.pipeline_mode<synchronous>, transform_indices = @transform_2, window_bounds = array<i64: 1, 16>}, {pipeline_mode = #tpu.pipeline_mode<synchronous>, transform_indices = @transform_3, window_bounds = array<i64: 16, 64>}, {pipeline_mode = #tpu.pipeline_mode<synchronous>, transform_indices = @transform_4, window_bounds = array<i64: 1, 64>}, {pipeline_mode = #tpu.pipeline_mode<synchronous>, transform_indices = @transform_5, window_bounds = array<i64: 64, 16>}, {pipeline_mode = #tpu.pipeline_mode<synchronous>, transform_indices = @transform_6, window_bounds = array<i64: 1, 16>}, {transform_indices = @transform_7, window_bounds = array<i64: 16, 16>}]} {
    %c0 = arith.constant 0 : index
    %c0_0 = arith.constant 0 : index
    %0 = vector.load %arg1[%c0, %c0_0] : memref<16x16xf32, #tpu.memory_space<vmem>>, vector<16x16xf32>
    %cst = arith.constant dense<0.000000e+00> : vector<16xf32>
    %1 = vector.multi_reduction <add>, %0, %cst [1] : vector<16x16xf32> to vector<16xf32>
    %2 = vector.shape_cast %1 : vector<16xf32> to vector<16x1xf32>
    %cst_1 = arith.constant 1.600000e+01 : f32
    %3 = vector.broadcast %cst_1 : f32 to vector<16x1xf32>
    %4 = arith.divf %2, %3 : vector<16x1xf32>
    %5 = vector.broadcast %4 : vector<16x1xf32> to vector<16x16xf32>
    %6 = arith.subf %0, %5 : vector<16x16xf32>
    %7 = arith.mulf %6, %6 : vector<16x16xf32>
    %cst_2 = arith.constant dense<0.000000e+00> : vector<16xf32>
    %8 = vector.multi_reduction <add>, %7, %cst_2 [1] : vector<16x16xf32> to vector<16xf32>
    %9 = vector.shape_cast %8 : vector<16xf32> to vector<16x1xf32>
    %cst_3 = arith.constant 1.600000e+01 : f32
    %10 = vector.broadcast %cst_3 : f32 to vector<16x1xf32>
    %11 = arith.divf %9, %10 : vector<16x1xf32>
    %12 = vector.broadcast %4 : vector<16x1xf32> to vector<16x16xf32>
    %13 = arith.subf %0, %12 : vector<16x16xf32>
    %cst_4 = arith.constant 9.99999974E-6 : f32
    %14 = vector.broadcast %cst_4 : f32 to vector<16x1xf32>
    %15 = arith.addf %11, %14 : vector<16x1xf32>
    %16 = math.rsqrt %15 : vector<16x1xf32>
    %17 = vector.broadcast %16 : vector<16x1xf32> to vector<16x16xf32>
    %18 = arith.mulf %13, %17 : vector<16x16xf32>
    %c0_5 = arith.constant 0 : index
    %c0_6 = arith.constant 0 : index
    %19 = vector.load %arg2[%c0_5, %c0_6] : memref<1x16xf32, #tpu.memory_space<vmem>>, vector<1x16xf32>
    %20 = vector.broadcast %19 : vector<1x16xf32> to vector<16x16xf32>
    %21 = arith.mulf %18, %20 : vector<16x16xf32>
    %c0_7 = arith.constant 0 : index
    %c0_8 = arith.constant 0 : index
    %22 = vector.load %arg3[%c0_7, %c0_8] : memref<1x16xf32, #tpu.memory_space<vmem>>, vector<1x16xf32>
    %23 = vector.broadcast %22 : vector<1x16xf32> to vector<16x16xf32>
    %24 = arith.addf %21, %23 : vector<16x16xf32>
    %25 = arith.truncf %24 : vector<16x16xf32> to vector<16x16xbf16>
    %c0_9 = arith.constant 0 : index
    %c0_10 = arith.constant 0 : index
    %26 = vector.load %arg4[%c0_9, %c0_10] : memref<16x64xbf16, #tpu.memory_space<vmem>>, vector<16x64xbf16>
    %cst_11 = arith.constant dense<0.000000e+00> : vector<16x64xf32>
    %27 = tpu.matmul %25, %26, %cst_11 {dimension_numbers = #tpu.dot_dimension_numbers<[1], [0], [0], [1], [0, 0, 1, 1], [], []>} : vector<16x16xbf16>, vector<16x64xbf16>, vector<16x64xf32> -> vector<16x64xf32>
    %c0_12 = arith.constant 0 : index
    %c0_13 = arith.constant 0 : index
    %28 = vector.load %arg5[%c0_12, %c0_13] : memref<1x64xf32, #tpu.memory_space<vmem>>, vector<1x64xf32>
    %29 = vector.broadcast %28 : vector<1x64xf32> to vector<16x64xf32>
    %30 = arith.addf %27, %29 : vector<16x64xf32>
    %cst_14 = arith.constant 5.000000e-01 : f32
    %31 = vector.broadcast %cst_14 : f32 to vector<16x64xf32>
    %32 = arith.mulf %31, %30 : vector<16x64xf32>
    %cst_15 = arith.constant 0.707106769 : f32
    %33 = vector.broadcast %cst_15 : f32 to vector<16x64xf32>
    %34 = arith.mulf %30, %33 : vector<16x64xf32>
    %35 = math.erf %34 : vector<16x64xf32>
    %cst_16 = arith.constant 1.000000e+00 : f32
    %36 = vector.broadcast %cst_16 : f32 to vector<16x64xf32>
    %37 = arith.addf %36, %35 : vector<16x64xf32>
    %38 = arith.mulf %32, %37 : vector<16x64xf32>
    %39 = arith.truncf %38 : vector<16x64xf32> to vector<16x64xbf16>
    %c0_17 = arith.constant 0 : index
    %c0_18 = arith.constant 0 : index
    %40 = vector.load %arg6[%c0_17, %c0_18] : memref<64x16xbf16, #tpu.memory_space<vmem>>, vector<64x16xbf16>
    %cst_19 = arith.constant dense<0.000000e+00> : vector<16x16xf32>
    %41 = tpu.matmul %39, %40, %cst_19 {dimension_numbers = #tpu.dot_dimension_numbers<[1], [0], [0], [1], [0, 0, 1, 1], [], []>} : vector<16x64xbf16>, vector<64x16xbf16>, vector<16x16xf32> -> vector<16x16xf32>
    %c0_20 = arith.constant 0 : index
    %c0_21 = arith.constant 0 : index
    %42 = vector.load %arg7[%c0_20, %c0_21] : memref<1x16xf32, #tpu.memory_space<vmem>>, vector<1x16xf32>
    %43 = vector.broadcast %42 : vector<1x16xf32> to vector<16x16xf32>
    %44 = arith.addf %41, %43 : vector<16x16xf32>
    %cst_22 = arith.constant 1.000000e+00 : f32
    %45 = vector.broadcast %cst_22 : f32 to vector<16x16xf32>
    %46 = arith.mulf %44, %45 : vector<16x16xf32>
    %47 = arith.addf %0, %46 : vector<16x16xf32>
    %c0_23 = arith.constant 0 : index
    %c0_24 = arith.constant 0 : index
    %48 = vector.load %arg8[%c0_23, %c0_24] : memref<16x16xf32, #tpu.memory_space<vmem>>, vector<16x16xf32>
    tpu.vector_store %arg8[%c0_23, %c0_24], %47 {strides = array<i32>} : memref<16x16xf32, #tpu.memory_space<vmem>>, vector<16x16xf32>,
    return
  }
  func.func @transform_0(%arg0: i32) -> (i32, i32) {
    %c0_i32 = arith.constant 0 : i32
    %c0_i32_0 = arith.constant 0 : i32
    return %arg0, %c0_i32 : i32, i32
  }
  func.func @transform_1(%arg0: i32) -> (i32, i32) {
    %c0_i32 = arith.constant 0 : i32
    %c0_i32_0 = arith.constant 0 : i32
    %c0_i32_1 = arith.constant 0 : i32
    return %c0_i32, %c0_i32_0 : i32, i32
  }
  func.func @transform_2(%arg0: i32) -> (i32, i32) {
    %c0_i32 = arith.constant 0 : i32
    %c0_i32_0 = arith.constant 0 : i32
    %c0_i32_1 = arith.constant 0 : i32
    return %c0_i32, %c0_i32_0 : i32, i32
  }
  func.func @transform_3(%arg0: i32) -> (i32, i32) {
    %c0_i32 = arith.constant 0 : i32
    %c0_i32_0 = arith.constant 0 : i32
    %c0_i32_1 = arith.constant 0 : i32
    return %c0_i32, %c0_i32_0 : i32, i32
  }
  func.func @transform_4(%arg0: i32) -> (i32, i32) {
    %c0_i32 = arith.constant 0 : i32
    %c0_i32_0 = arith.constant 0 : i32
    %c0_i32_1 = arith.constant 0 : i32
    return %c0_i32, %c0_i32_0 : i32, i32
  }
  func.func @transform_5(%arg0: i32) -> (i32, i32) {
    %c0_i32 = arith.constant 0 : i32
    %c0_i32_0 = arith.constant 0 : i32
    %c0_i32_1 = arith.constant 0 : i32
    return %c0_i32, %c0_i32_0 : i32, i32
  }
  func.func @transform_6(%arg0: i32) -> (i32, i32) {
    %c0_i32 = arith.constant 0 : i32
    %c0_i32_0 = arith.constant 0 : i32
    %c0_i32_1 = arith.constant 0 : i32
    return %c0_i32, %c0_i32_0 : i32, i32
  }
  func.func @transform_7(%arg0: i32) -> (i32, i32) {
    %c0_i32 = arith.constant 0 : i32
    %c0_i32_0 = arith.constant 0 : i32
    return %arg0, %c0_i32 : i32, i32
  }
}

</mosaic_0001>

<llo_original>
// kernel: permutator_block_forward_pallas.10
$region0: #{permutator_block_forward_pallas.10}
  #allocation0 [shape = 'u32[]', space=smem, size = 0x4, offset = 0x4, fixed_abs, tag = 'smem constant byte address 0x4 - core index']
  #allocation1 [shape = 'u32[72,128]{1,0:T(1,128)}', space=vmem, size = 0x9000, scoped, tag = 'internal scratch']
  %s0 = inlined_call_operand.hbm [shape: f32[64,16], index: 0, kind: input, shape index: {}]
  %s1 = inlined_call_operand.vmem [shape: f32[1,16], index: 1, kind: input, shape index: {}]
  %s2 = inlined_call_operand.vmem [shape: f32[1,16], index: 2, kind: input, shape index: {}]
  %s3 = inlined_call_operand.vmem [shape: bf16[64,16], index: 3, kind: output, shape index: {}]
  %s4 = sld [smem:[#allocation0]]
  $region49: #{permutator_block_forward_pallas.10} parent=0
    _
  %s6 = ssub.s32 1, %s4
  %s7 = scalar_select 0, %s6, %s4
  $region1: #{permutator_block_forward_pallas.10} parent=0
    #allocation2 [shape = 'u8[16384]{0}', space=vmem, size = 0x4000, scoped, tag = 'input window, operand 0']
    #allocation3 [shape = 's32[2]{0}', space=sflag, size = 0x8, scoped, tag = 'scoped memory for permutator_block_forward_pallas.10']
    %8 = vsyncpa [#allocation3], 0
    %s9 = scalar_lea.sflag [#allocation3], 1
    %10 = vsyncpa %s9, 0
    loop: start=0, step=1, limit=6
    $region2: #{permutator_block_forward_pallas.10} parent=1 // loop_pre_header
      _
    $region3: #{permutator_block_forward_pallas.10} parent=1 // loop_header
      %s12 = sphi 0, %s16
      %p13 = scmp.ge.s32.totalorder %s12, 6
      %s22 = sphi 0, %s24
      %s25 = sphi 0, %s22
      %s26 = sphi 0, %s25
      %s42 = sphi 0, %s26
      %s46 = sphi 0, %s46
      %s48 = sphi 0, %s46
      %s49 = sphi 0, %s48
      %s63 = sphi 0, %s49
      %s67 = sphi 0, %s67
      %s69 = sphi 0, %s67
      %s70 = sphi 0, %s69
      %s84 = sphi 0, %s70
      %s90 = sphi 0, %s92
      %s93 = sphi 0, %s90
      %s94 = sphi 0, %s93
      %s110 = sphi 0, %s94
    $region4: #{permutator_block_forward_pallas.10} parent=1 // loop_header_branch
      %15 = sbr.rel (%p13) target = $region8
    $region5: #{permutator_block_forward_pallas.10} parent=1 // loop_body
      %s17 = ssub.s32 %s12, 1
      %s18 = ssub.s32 %s12, 2
      %s19 = sadd.s32 %s12, 1
      %s20 = ssub.s32 %s12, %s19
      %p21 = scmp.eq.s32.totalorder %s20, 0
      %s23 = sadd.s32 %s22, 1
      %s24 = scalar_select %p21, %s22, %s23
      %p27 = pneg %p21
      %p28 = scmp.eq.s32.totalorder %s12, 3
      %p29 = por %p27, %p28
      %p30 = scmp.ne.s32.totalorder %s22, %s25
      %p31 = scmp.eq.s32.totalorder %s12, 0
      %p32 = por %p30, %p31
      %p33 = scmp.ne.s32.totalorder %s22, %s25
      %p34 = scmp.eq.s32.totalorder %s17, 3
      %p35 = por %p33, %p34
      %p36 = scmp.ne.s32.totalorder %s25, %s26
      %p37 = scmp.eq.s32.totalorder %s17, 0
      %p38 = por %p36, %p37
      %p39 = scmp.ne.s32.totalorder %s25, %s26
      %p40 = scmp.eq.s32.totalorder %s18, 3
      %p41 = por %p39, %p40
      %p43 = scmp.ne.s32.totalorder %s26, %s42
      %p44 = scmp.eq.s32.totalorder %s18, 0
      %p45 = por %p43, %p44
      %s47 = sadd.s32 %s46, 1
      %p50 = scmp.eq.s32.totalorder %s12, 3
      %p51 = scmp.ne.s32.totalorder %s46, %s48
      %p52 = scmp.eq.s32.totalorder %s12, 0
      %p53 = por %p51, %p52
      %p54 = scmp.ne.s32.totalorder %s46, %s48
      %p55 = scmp.eq.s32.totalorder %s17, 3
      %p56 = por %p54, %p55
      %p57 = scmp.ne.s32.totalorder %s48, %s49
      %p58 = scmp.eq.s32.totalorder %s17, 0
      %p59 = por %p57, %p58
      %p60 = scmp.ne.s32.totalorder %s48, %s49
      %p61 = scmp.eq.s32.totalorder %s18, 3
      %p62 = por %p60, %p61
      %p64 = scmp.ne.s32.totalorder %s49, %s63
      %p65 = scmp.eq.s32.totalorder %s18, 0
      %p66 = por %p64, %p65
      %s68 = sadd.s32 %s67, 1
      %p71 = scmp.eq.s32.totalorder %s12, 3
      %p72 = scmp.ne.s32.totalorder %s67, %s69
      %p73 = scmp.eq.s32.totalorder %s12, 0
      %p74 = por %p72, %p73
      %p75 = scmp.ne.s32.totalorder %s67, %s69
      %p76 = scmp.eq.s32.totalorder %s17, 3
      %p77 = por %p75, %p76
      %p78 = scmp.ne.s32.totalorder %s69, %s70
      %p79 = scmp.eq.s32.totalorder %s17, 0
      %p80 = por %p78, %p79
      %p81 = scmp.ne.s32.totalorder %s69, %s70
      %p82 = scmp.eq.s32.totalorder %s18, 3
      %p83 = por %p81, %p82
      %p85 = scmp.ne.s32.totalorder %s70, %s84
      %p86 = scmp.eq.s32.totalorder %s18, 0
      %p87 = por %p85, %p86
      %s88 = ssub.s32 %s12, %s19
      %p89 = scmp.eq.s32.totalorder %s88, 0
      %s91 = sadd.s32 %s90, 1
      %s92 = scalar_select %p89, %s90, %s91
      %p95 = pneg %p89
      %p96 = scmp.eq.s32.totalorder %s12, 3
      %p97 = por %p95, %p96
      %p98 = scmp.ne.s32.totalorder %s90, %s93
      %p99 = scmp.eq.s32.totalorder %s12, 0
      %p100 = por %p98, %p99
      %p101 = scmp.ne.s32.totalorder %s90, %s93
      %p102 = scmp.eq.s32.totalorder %s17, 3
      %p103 = por %p101, %p102
      %p104 = scmp.ne.s32.totalorder %s93, %s94
      %p105 = scmp.eq.s32.totalorder %s17, 0
      %p106 = por %p104, %p105
      %p107 = scmp.ne.s32.totalorder %s93, %s94
      %p108 = scmp.eq.s32.totalorder %s18, 3
      %p109 = por %p107, %p108
      %p111 = scmp.ne.s32.totalorder %s94, %s110
      %p112 = scmp.eq.s32.totalorder %s18, 0
      %p113 = por %p111, %p112
      %p114 = scmp.le.s32.totalorder 1, %s12
      %p115 = scmp.lt.s32.totalorder %s12, 5
      %p116 = pnand %p114, %p115
      %p117 = pneg %p116
      // Predicated region
      $region9: #{permutator_block_forward_pallas.10} parent=5 // pred_check
        _
      $region10: #{permutator_block_forward_pallas.10} parent=5 // pred_check_branch
        %119 = sbr.rel (%p116) target = $region12
      $region11: #{permutator_block_forward_pallas.10} parent=5 // pred_region
        %s120 = ssub.s32 %s12, 1
        // Predicated region
        $region13: #{permutator_block_forward_pallas.10} parent=11 // pred_check
          %p121 = pneg %p59
        $region14: #{permutator_block_forward_pallas.10} parent=11 // pred_check_branch
          %123 = sbr.rel (%p121) target = $region16
        $region15: #{permutator_block_forward_pallas.10} parent=11 // pred_region
          _
        $region16: #{permutator_block_forward_pallas.10} parent=11 // pred_fallthru
          _
        // Predicated region
        $region17: #{permutator_block_forward_pallas.10} parent=11 // pred_check
          %p124 = pneg %p80
        $region18: #{permutator_block_forward_pallas.10} parent=11 // pred_check_branch
          %126 = sbr.rel (%p124) target = $region20
        $region19: #{permutator_block_forward_pallas.10} parent=11 // pred_region
          _
        $region20: #{permutator_block_forward_pallas.10} parent=11 // pred_fallthru
          _
      $region12: #{permutator_block_forward_pallas.10} parent=5 // pred_fallthru
        _
      %p127 = scmp.lt.s32.totalorder %s12, 4
      // Predicated region
      $region21: #{permutator_block_forward_pallas.10} parent=5 // pred_check
        %p128 = pneg %p127
      $region22: #{permutator_block_forward_pallas.10} parent=5 // pred_check_branch
        %130 = sbr.rel (%p128) target = $region24
      $region23: #{permutator_block_forward_pallas.10} parent=5 // pred_region
        // Predicated region
        $region25: #{permutator_block_forward_pallas.10} parent=23 // pred_check
          %p131 = pneg %p32
        $region26: #{permutator_block_forward_pallas.10} parent=23 // pred_check_branch
          %133 = sbr.rel (%p131) target = $region28
        $region27: #{permutator_block_forward_pallas.10} parent=23 // pred_region
          %s134 = sand.u32 %s22, 1
          %s135 = scalar_lea.sflag [#allocation3], %s134
          %s136 = sand.u32 %s22, 1
          %s137 = smul.addr %s136, 16
          %s138 = scalar_lea.vmem [#allocation2], %s137
          %s139 = smul.u32 2, %s12
          %141 = vsyncadd %s135, 0
          %s142 = smul.addr %s139, 8
          %s143 = scalar_lea.hbm %s0, %s142
          %s144 = sshll.u32 %s143, 4
          %s145 = int_to_ptr.hbm [resolvable:$true] %s144
          %s146 = sshll.u32 %s138, 4
          %s147 = int_to_ptr.vmem [resolvable:$true] %s146
          %152 = dma.hbm_to_vmem [thread:$0]  %s145, 256, %s147, %s135, 128, 128, 8
        $region28: #{permutator_block_forward_pallas.10} parent=23 // pred_fallthru
          _
      $region24: #{permutator_block_forward_pallas.10} parent=5 // pred_fallthru
        _
      %p153 = scmp.le.s32.totalorder 1, %s12
      %p154 = scmp.lt.s32.totalorder %s12, 5
      %p155 = pnand %p153, %p154
      %p156 = pneg %p155
      // Predicated region
      $region29: #{permutator_block_forward_pallas.10} parent=5 // pred_check
        _
      $region30: #{permutator_block_forward_pallas.10} parent=5 // pred_check_branch
        %158 = sbr.rel (%p155) target = $region32
      $region31: #{permutator_block_forward_pallas.10} parent=5 // pred_region
        %s159 = ssub.s32 %s12, 1
        %s160 = sand.u32 %s25, 1
        %s161 = scalar_lea.sflag [#allocation3], %s160
        %s162 = sand.u32 %s25, 1
        %s163 = smul.addr %s162, 16
        %s164 = scalar_lea.vmem [#allocation2], %s163
        // Predicated region
        $region33: #{permutator_block_forward_pallas.10} parent=31 // pred_check
          %p165 = pneg %p38
        $region34: #{permutator_block_forward_pallas.10} parent=31 // pred_check_branch
          %167 = sbr.rel (%p165) target = $region36
        $region35: #{permutator_block_forward_pallas.10} parent=31 // pred_region
          %169 = dma.done %s161, 256
        $region36: #{permutator_block_forward_pallas.10} parent=31 // pred_fallthru
          _
        %s170 = sand.u32 %s25, 1
        %s171 = scalar_lea.sflag [#allocation3], %s170
        %s172 = sand.u32 %s25, 1
        %s173 = smul.addr %s172, 16
        %s174 = scalar_lea.vmem [#allocation2], %s173
        %p175 = pneg %p38
        %p176 = pneg %p35
        %p177 = pneg %p59
        %p178 = pneg %p56
        %p179 = pneg %p80
        %p180 = pneg %p77
        %p181 = pneg %p106
        %p182 = pneg %p103
        %s183 = smul.u32 2, %s17
        %p184 = scmp.lt.s32.totalorder %s183, 7
        %s185 = scalar_select %p184, %s183, 7
        %s186 = smul.addr %s185, 4
        %s187 = scalar_lea.vmem %s3, %s186
        %s188 = smul.u32 2, %s17
        %s189 = smul.u32 2, %s17
        %p190 = scmp.lt.s32.totalorder %s189, 7
        %s191 = scalar_select %p190, %s189, 7
        %s192 = smul.addr %s191, 4
        %s193 = scalar_lea.vmem %s3, %s192
        %s194 = smul.u32 2, %s17
        %v195 = vld [vmem:[%s164] sm:$0xff]
        %v196 = vld [vmem:[%s164 + $0x8] sm:$0xff]
        %vm197 = vcmask 130048
        %v198 = vsel %vm197, %v195, 0.0
        %199 = vadd.xlane.f32.xlu0 %v198
        %v200 = vpop.xlane.xlu0 %199
        %v201 = vsel %vm197, %v196, 0.0
        %202 = vadd.xlane.f32.xlu0 %v201
        %v203 = vpop.xlane.xlu0 %202
        %v204 = vrcp.pop 16.0
        %v205 = vmul.f32 16.0, %v204
        %v206 = vsub.f32 1.0, %v205
        %v207 = vmul.f32 %v204, %v206
        %v208 = vadd.f32 %v204, %v207
        %vm209 = vweird.f32 %v204
        %v210 = vsel %vm209, %v204, %v208
        %v211 = vmul.f32 %v200, %v210
        %v212 = vmul.f32 %v203, %v210
        %v213 = vsub.f32 %v195, %v211
        %v214 = vsub.f32 %v196, %v212
        %v215 = vmul.f32 %v213, %v213
        %v216 = vmul.f32 %v214, %v214
        %v217 = vsel %vm197, %v215, 0.0
        %218 = vadd.xlane.f32.xlu0 %v217
        %v219 = vpop.xlane.xlu0 %218
        %v220 = vsel %vm197, %v216, 0.0
        %221 = vadd.xlane.f32.xlu0 %v220
        %v222 = vpop.xlane.xlu0 %221
        %v223 = vmul.f32 %v219, %v210
        %v224 = vmul.f32 %v222, %v210
        %v225 = vadd.f32 %v223, 1e-05
        %v226 = vadd.f32 %v224, 1e-05
        %v227 = vrsqrt.pop %v225
        %v228 = vmul.f32 %v227, %v225
        %v229 = vmul.f32 %v228, %v227
        %v230 = vmul.f32 0.5, %v229
        %v231 = vsub.f32 1.5, %v230
        %v232 = vmul.f32 %v227, %v231
        %vm233 = vweird.f32 %v225
        %vm234 = vweird.f32 %v227
        %vm235 = vmor %vm233, %vm234
        %v236 = vsel %vm235, %v227, %v232
        %v237 = vrsqrt.pop %v226
        %v238 = vmul.f32 %v237, %v226
        %v239 = vmul.f32 %v238, %v237
        %v240 = vmul.f32 0.5, %v239
        %v241 = vsub.f32 1.5, %v240
        %v242 = vmul.f32 %v237, %v241
        %vm243 = vweird.f32 %v226
        %vm244 = vweird.f32 %v237
        %vm245 = vmor %vm243, %vm244
        %v246 = vsel %vm245, %v237, %v242
        %v247 = vmul.f32 %v213, %v236
        %v248 = vmul.f32 %v214, %v246
        %v249 = vld [vmem:[%s1] sm:$0x1]
        %v251 = vperm.slane %v249, 0
        %v253 = vmul.f32 %v247, %v251
        %v254 = vmul.f32 %v248, %v251
        %v255 = vld [vmem:[%s2] sm:$0x1]
        %v257 = vperm.slane %v255, 0
        %v259 = vadd.f32 %v253, %v257
        %v260 = vadd.f32 %v254, %v257
        %v261 = vpack.c.bf16 %v259, %v259
        %v262 = vpack.c.bf16 %v260, %v260
        %vm263 = vcmask 125952
        %264 = vst.msk [vmem:[%s193] sm:$0xf] %vm263, %v261
        %265 = vst.msk [vmem:[%s193 + $0x4] sm:$0xf] %vm263, %v262
        %s266 = smul.u32 2, %s17
        %p267 = scmp.lt.s32.totalorder %s266, 7
        %s268 = scalar_select %p267, %s266, 7
        %s269 = smul.addr %s268, 4
        %s270 = scalar_lea.vmem %s3, %s269
        // Predicated region
        $region37: #{permutator_block_forward_pallas.10} parent=31 // pred_check
          %p271 = pneg %p103
        $region38: #{permutator_block_forward_pallas.10} parent=31 // pred_check_branch
          %273 = sbr.rel (%p271) target = $region40
        $region39: #{permutator_block_forward_pallas.10} parent=31 // pred_region
          %s274 = smul.u32 2, %s17
        $region40: #{permutator_block_forward_pallas.10} parent=31 // pred_fallthru
          _
      $region32: #{permutator_block_forward_pallas.10} parent=5 // pred_fallthru
        _
      %p275 = scmp.le.s32.totalorder 2, %s12
      // Predicated region
      $region41: #{permutator_block_forward_pallas.10} parent=5 // pred_check
        %p276 = pneg %p275
      $region42: #{permutator_block_forward_pallas.10} parent=5 // pred_check_branch
        %278 = sbr.rel (%p276) target = $region44
      $region43: #{permutator_block_forward_pallas.10} parent=5 // pred_region
        %s279 = ssub.s32 %s12, 2
        // Predicated region
        $region45: #{permutator_block_forward_pallas.10} parent=43 // pred_check
          %p280 = pneg %p109
        $region46: #{permutator_block_forward_pallas.10} parent=43 // pred_check_branch
          %282 = sbr.rel (%p280) target = $region48
        $region47: #{permutator_block_forward_pallas.10} parent=43 // pred_region
          %s283 = smul.u32 2, %s18
          %p284 = scmp.lt.s32.totalorder %s283, 7
          %s285 = scalar_select %p284, %s283, 7
          %s286 = smul.addr %s285, 4
          %s287 = scalar_lea.vmem %s3, %s286
        $region48: #{permutator_block_forward_pallas.10} parent=43 // pred_fallthru
          _
      $region44: #{permutator_block_forward_pallas.10} parent=5 // pred_fallthru
        _
    $region6: #{permutator_block_forward_pallas.10} parent=1 // loop_footer
      %s16 = sadd.s32 1, %s12
    $region7: #{permutator_block_forward_pallas.10} parent=1 // loop_footer_branch
      %11 = sbr.rel target = $region3
    $region8: #{permutator_block_forward_pallas.10} parent=1 // loop_exit
      _
    %288 = vsyncpa [#allocation3], 1
    %s289 = scalar_lea.sflag [#allocation3], 1
    %290 = vsyncpa %s289, 1

// kernel: permutator_block_forward_pallas.11
$region0: #{permutator_block_forward_pallas.11}
  #allocation0 [shape = 'u32[]', space=smem, size = 0x4, offset = 0x4, fixed_abs, tag = 'smem constant byte address 0x4 - core index']
  #allocation1 [shape = 'u32[72,128]{1,0:T(1,128)}', space=vmem, size = 0x9000, scoped, tag = 'internal scratch']
  %s0 = inlined_call_operand.vmem [shape: bf16[128,8], index: 0, kind: input, shape index: {}]
  %s1 = inlined_call_operand.vmem [shape: bf16[8,8], index: 1, kind: input, shape index: {}]
  %s2 = inlined_call_operand.vmem [shape: bf16[128,8], index: 2, kind: output, shape index: {}]
  %s3 = sld [smem:[#allocation0]]
  $region41: #{permutator_block_forward_pallas.11} parent=0
    _
  %s5 = ssub.s32 1, %s3
  %s6 = scalar_select 0, %s5, %s3
  loop: start=0, step=1, limit=6
  $region2: #{permutator_block_forward_pallas.11} parent=0 // loop_pre_header
    _
  $region3: #{permutator_block_forward_pallas.11} parent=0 // loop_header
    %s8 = sphi 0, %s12
    %p9 = scmp.ge.s32.totalorder %s8, 6
    %s18 = sphi 0, %s20
    %s21 = sphi 0, %s18
    %s22 = sphi 0, %s21
    %s38 = sphi 0, %s22
    %s42 = sphi 0, %s42
    %s44 = sphi 0, %s42
    %s45 = sphi 0, %s44
    %s59 = sphi 0, %s45
    %s65 = sphi 0, %s67
    %s68 = sphi 0, %s65
    %s69 = sphi 0, %s68
    %s85 = sphi 0, %s69
  $region4: #{permutator_block_forward_pallas.11} parent=0 // loop_header_branch
    %11 = sbr.rel (%p9) target = $region8
  $region5: #{permutator_block_forward_pallas.11} parent=0 // loop_body
    %s13 = ssub.s32 %s8, 1
    %s14 = ssub.s32 %s8, 2
    %s15 = sadd.s32 %s8, 1
    %s16 = ssub.s32 %s8, %s15
    %p17 = scmp.eq.s32.totalorder %s16, 0
    %s19 = sadd.s32 %s18, 1
    %s20 = scalar_select %p17, %s18, %s19
    %p23 = pneg %p17
    %p24 = scmp.eq.s32.totalorder %s8, 3
    %p25 = por %p23, %p24
    %p26 = scmp.ne.s32.totalorder %s18, %s21
    %p27 = scmp.eq.s32.totalorder %s8, 0
    %p28 = por %p26, %p27
    %p29 = scmp.ne.s32.totalorder %s18, %s21
    %p30 = scmp.eq.s32.totalorder %s13, 3
    %p31 = por %p29, %p30
    %p32 = scmp.ne.s32.totalorder %s21, %s22
    %p33 = scmp.eq.s32.totalorder %s13, 0
    %p34 = por %p32, %p33
    %p35 = scmp.ne.s32.totalorder %s21, %s22
    %p36 = scmp.eq.s32.totalorder %s14, 3
    %p37 = por %p35, %p36
    %p39 = scmp.ne.s32.totalorder %s22, %s38
    %p40 = scmp.eq.s32.totalorder %s14, 0
    %p41 = por %p39, %p40
    %s43 = sadd.s32 %s42, 1
    %p46 = scmp.eq.s32.totalorder %s8, 3
    %p47 = scmp.ne.s32.totalorder %s42, %s44
    %p48 = scmp.eq.s32.totalorder %s8, 0
    %p49 = por %p47, %p48
    %p50 = scmp.ne.s32.totalorder %s42, %s44
    %p51 = scmp.eq.s32.totalorder %s13, 3
    %p52 = por %p50, %p51
    %p53 = scmp.ne.s32.totalorder %s44, %s45
    %p54 = scmp.eq.s32.totalorder %s13, 0
    %p55 = por %p53, %p54
    %p56 = scmp.ne.s32.totalorder %s44, %s45
    %p57 = scmp.eq.s32.totalorder %s14, 3
    %p58 = por %p56, %p57
    %p60 = scmp.ne.s32.totalorder %s45, %s59
    %p61 = scmp.eq.s32.totalorder %s14, 0
    %p62 = por %p60, %p61
    %s63 = ssub.s32 %s8, %s15
    %p64 = scmp.eq.s32.totalorder %s63, 0
    %s66 = sadd.s32 %s65, 1
    %s67 = scalar_select %p64, %s65, %s66
    %p70 = pneg %p64
    %p71 = scmp.eq.s32.totalorder %s8, 3
    %p72 = por %p70, %p71
    %p73 = scmp.ne.s32.totalorder %s65, %s68
    %p74 = scmp.eq.s32.totalorder %s8, 0
    %p75 = por %p73, %p74
    %p76 = scmp.ne.s32.totalorder %s65, %s68
    %p77 = scmp.eq.s32.totalorder %s13, 3
    %p78 = por %p76, %p77
    %p79 = scmp.ne.s32.totalorder %s68, %s69
    %p80 = scmp.eq.s32.totalorder %s13, 0
    %p81 = por %p79, %p80
    %p82 = scmp.ne.s32.totalorder %s68, %s69
    %p83 = scmp.eq.s32.totalorder %s14, 3
    %p84 = por %p82, %p83
    %p86 = scmp.ne.s32.totalorder %s69, %s85
    %p87 = scmp.eq.s32.totalorder %s14, 0
    %p88 = por %p86, %p87
    %p89 = scmp.le.s32.totalorder 1, %s8
    %p90 = scmp.lt.s32.totalorder %s8, 5
    %p91 = pnand %p89, %p90
    %p92 = pneg %p91
    // Predicated region
    $region9: #{permutator_block_forward_pallas.11} parent=5 // pred_check
      _
    $region10: #{permutator_block_forward_pallas.11} parent=5 // pred_check_branch
      %94 = sbr.rel (%p91) target = $region12
    $region11: #{permutator_block_forward_pallas.11} parent=5 // pred_region
      %s95 = ssub.s32 %s8, 1
      // Predicated region
      $region13: #{permutator_block_forward_pallas.11} parent=11 // pred_check
        %p96 = pneg %p55
      $region14: #{permutator_block_forward_pallas.11} parent=11 // pred_check_branch
        %98 = sbr.rel (%p96) target = $region16
      $region15: #{permutator_block_forward_pallas.11} parent=11 // pred_region
        _
      $region16: #{permutator_block_forward_pallas.11} parent=11 // pred_fallthru
        _
    $region12: #{permutator_block_forward_pallas.11} parent=5 // pred_fallthru
      _
    %p99 = scmp.lt.s32.totalorder %s8, 4
    // Predicated region
    $region17: #{permutator_block_forward_pallas.11} parent=5 // pred_check
      %p100 = pneg %p99
    $region18: #{permutator_block_forward_pallas.11} parent=5 // pred_check_branch
      %102 = sbr.rel (%p100) target = $region20
    $region19: #{permutator_block_forward_pallas.11} parent=5 // pred_region
      // Predicated region
      $region21: #{permutator_block_forward_pallas.11} parent=19 // pred_check
        %p103 = pneg %p28
      $region22: #{permutator_block_forward_pallas.11} parent=19 // pred_check_branch
        %105 = sbr.rel (%p103) target = $region24
      $region23: #{permutator_block_forward_pallas.11} parent=19 // pred_region
        %s106 = smul.u32 4, %s8
        %p107 = scmp.lt.s32.totalorder %s106, 15
        %s108 = scalar_select %p107, %s106, 15
        %s109 = smul.addr %s108, 4
        %s110 = scalar_lea.vmem %s0, %s109
        %s111 = smul.u32 4, %s8
      $region24: #{permutator_block_forward_pallas.11} parent=19 // pred_fallthru
        _
    $region20: #{permutator_block_forward_pallas.11} parent=5 // pred_fallthru
      _
    %p112 = scmp.le.s32.totalorder 1, %s8
    %p113 = scmp.lt.s32.totalorder %s8, 5
    %p114 = pnand %p112, %p113
    %p115 = pneg %p114
    // Predicated region
    $region25: #{permutator_block_forward_pallas.11} parent=5 // pred_check
      _
    $region26: #{permutator_block_forward_pallas.11} parent=5 // pred_check_branch
      %117 = sbr.rel (%p114) target = $region28
    $region27: #{permutator_block_forward_pallas.11} parent=5 // pred_region
      %s118 = ssub.s32 %s8, 1
      %s119 = smul.u32 4, %s13
      %p120 = scmp.lt.s32.totalorder %s119, 15
      %s121 = scalar_select %p120, %s119, 15
      %s122 = smul.addr %s121, 4
      %s123 = scalar_lea.vmem %s0, %s122
      %p124 = pneg %p34
      %p125 = pneg %p31
      %p126 = pneg %p55
      %p127 = pneg %p52
      %p128 = pneg %p81
      %p129 = pneg %p78
      %s130 = smul.u32 4, %s13
      %p131 = scmp.lt.s32.totalorder %s130, 15
      %s132 = scalar_select %p131, %s130, 15
      %s133 = smul.addr %s132, 4
      %s134 = scalar_lea.vmem %s2, %s133
      %s135 = smul.u32 4, %s13
      %p136 = scmp.lt.s32.totalorder %s135, 15
      %s137 = scalar_select %p136, %s135, 15
      %s138 = smul.addr %s137, 4
      %s139 = scalar_lea.vmem %s0, %s138
      %s140 = smul.u32 4, %s13
      %s141 = smul.u32 4, %s13
      %p142 = scmp.lt.s32.totalorder %s141, 15
      %s143 = scalar_select %p142, %s141, 15
      %s144 = smul.addr %s143, 4
      %s145 = scalar_lea.vmem %s2, %s144
      %s146 = smul.u32 4, %s13
      %v148 = vld [vmem:[%s139] sm:$0xf]
      %v149 = vld [vmem:[%s139 + $0x4] sm:$0xf]
      %v150 = vld [vmem:[%s139 + $0x8] sm:$0xf]
      %v151 = vld [vmem:[%s139 + $0xc] sm:$0xf]
      %v152 = vld [vmem:[%s1] sm:$0xf]
      %v157 = vunpack.c.l.b16 %v148
      %v158 = vunpack.c.l.b16 %v149
      %v159 = vunpack.c.l.b16 %v150
      %v160 = vunpack.c.l.b16 %v151
      %v161 = vpack.c.b16 %v158, %v157
      %v162 = vpack.c.b16 %v160, %v159
      %vm163 = vcmask 64512
      %v165 = vsel %vm163, %v161, 0
      %v168 = vsel %vm163, %v162, 0
      %vm170 = vcmask 1043456
      %v172 = vsel %vm170, %v152, 0
      %174 = vmatpush.bf16.msra.mxu0 0
      %175 = vmatpush.bf16.msra.mxu0 0
      %176 = vmatpush.bf16.msra.mxu0 0
      %177 = vmatpush.bf16.msra.mxu0 0
      %178 = vmatpush.bf16.msra.mxu0 0
      %179 = vmatpush.bf16.msra.mxu0 0
      %180 = vmatpush.bf16.msra.mxu0 0
      %181 = vmatpush.bf16.msra.mxu0 %v172
      %182 = vmatmul.bf16.gmra.mxu0 %v165
      %v183 = vpop.f32.mrf.mxu0
      %v184 = vadd.f32 0.0, %v183
      %v185 = vpop.f32.mrf.mxu0
      %v186 = vadd.f32 0.0, %v185
      %187 = vmatmul.bf16.gmra.mxu0 %v168
      %v188 = vpop.f32.mrf.mxu0
      %v189 = vadd.f32 0.0, %v188
      %v190 = vpop.f32.mrf.mxu0
      %v191 = vadd.f32 0.0, %v190
      %192 = vdwg.mxu0
      %v193 = vpack.c.bf16 %v184, %v184
      %v194 = vpack.c.bf16 %v186, %v186
      %v195 = vpack.c.bf16 %v189, %v189
      %v196 = vpack.c.bf16 %v191, %v191
      %vm197 = vcmask 60416
      %198 = vst.msk [vmem:[%s145] sm:$0xf] %vm197, %v193
      %199 = vst.msk [vmem:[%s145 + $0x4] sm:$0xf] %vm197, %v194
      %200 = vst.msk [vmem:[%s145 + $0x8] sm:$0xf] %vm197, %v195
      %201 = vst.msk [vmem:[%s145 + $0xc] sm:$0xf] %vm197, %v196
      %s202 = smul.u32 4, %s13
      %p203 = scmp.lt.s32.totalorder %s202, 15
      %s204 = scalar_select %p203, %s202, 15
      %s205 = smul.addr %s204, 4
      %s206 = scalar_lea.vmem %s2, %s205
      // Predicated region
      $region29: #{permutator_block_forward_pallas.11} parent=27 // pred_check
        %p207 = pneg %p78
      $region30: #{permutator_block_forward_pallas.11} parent=27 // pred_check_branch
        %209 = sbr.rel (%p207) target = $region32
      $region31: #{permutator_block_forward_pallas.11} parent=27 // pred_region
        %s210 = smul.u32 4, %s13
      $region32: #{permutator_block_forward_pallas.11} parent=27 // pred_fallthru
        _
    $region28: #{permutator_block_forward_pallas.11} parent=5 // pred_fallthru
      _
    %p211 = scmp.le.s32.totalorder 2, %s8
    // Predicated region
    $region33: #{permutator_block_forward_pallas.11} parent=5 // pred_check
      %p212 = pneg %p211
    $region34: #{permutator_block_forward_pallas.11} parent=5 // pred_check_branch
      %214 = sbr.rel (%p212) target = $region36
    $region35: #{permutator_block_forward_pallas.11} parent=5 // pred_region
      %s215 = ssub.s32 %s8, 2
      // Predicated region
      $region37: #{permutator_block_forward_pallas.11} parent=35 // pred_check
        %p216 = pneg %p84
      $region38: #{permutator_block_forward_pallas.11} parent=35 // pred_check_branch
        %218 = sbr.rel (%p216) target = $region40
      $region39: #{permutator_block_forward_pallas.11} parent=35 // pred_region
        %s219 = smul.u32 4, %s14
        %p220 = scmp.lt.s32.totalorder %s219, 15
        %s221 = scalar_select %p220, %s219, 15
        %s222 = smul.addr %s221, 4
        %s223 = scalar_lea.vmem %s2, %s222
      $region40: #{permutator_block_forward_pallas.11} parent=35 // pred_fallthru
        _
    $region36: #{permutator_block_forward_pallas.11} parent=5 // pred_fallthru
      _
  $region6: #{permutator_block_forward_pallas.11} parent=0 // loop_footer
    %s12 = sadd.s32 1, %s8
  $region7: #{permutator_block_forward_pallas.11} parent=0 // loop_footer_branch
    %7 = sbr.rel target = $region3
  $region8: #{permutator_block_forward_pallas.11} parent=0 // loop_exit
    _

// kernel: permutator_block_forward_pallas.12
$region0: #{permutator_block_forward_pallas.12}
  #allocation0 [shape = 'u32[]', space=smem, size = 0x4, offset = 0x4, fixed_abs, tag = 'smem constant byte address 0x4 - core index']
  #allocation1 [shape = 'u32[72,128]{1,0:T(1,128)}', space=vmem, size = 0x9000, scoped, tag = 'internal scratch']
  %s0 = inlined_call_operand.vmem [shape: bf16[64,16], index: 0, kind: input, shape index: {}]
  %s1 = inlined_call_operand.vmem [shape: f32[64,16], index: 1, kind: input, shape index: {}]
  %s2 = inlined_call_operand.vmem [shape: bf16[16,16], index: 2, kind: input, shape index: {}]
  %s3 = inlined_call_operand.vmem [shape: f32[1,16], index: 3, kind: input, shape index: {}]
  %s4 = inlined_call_operand.vmem [shape: f32[64,16], index: 4, kind: output, shape index: {}]
  %s5 = sld [smem:[#allocation0]]
  $region49: #{permutator_block_forward_pallas.12} parent=0
    _
  %s7 = ssub.s32 1, %s5
  %s8 = scalar_select 0, %s7, %s5
  loop: start=0, step=1, limit=6
  $region2: #{permutator_block_forward_pallas.12} parent=0 // loop_pre_header
    _
  $region3: #{permutator_block_forward_pallas.12} parent=0 // loop_header
    %s10 = sphi 0, %s14
    %p11 = scmp.ge.s32.totalorder %s10, 6
    %s20 = sphi 0, %s22
    %s23 = sphi 0, %s20
    %s24 = sphi 0, %s23
    %s40 = sphi 0, %s24
    %s46 = sphi 0, %s48
    %s49 = sphi 0, %s46
    %s50 = sphi 0, %s49
    %s66 = sphi 0, %s50
    %s70 = sphi 0, %s70
    %s72 = sphi 0, %s70
    %s73 = sphi 0, %s72
    %s87 = sphi 0, %s73
    %s91 = sphi 0, %s91
    %s93 = sphi 0, %s91
    %s94 = sphi 0, %s93
    %s108 = sphi 0, %s94
    %s114 = sphi 0, %s116
    %s117 = sphi 0, %s114
    %s118 = sphi 0, %s117
    %s134 = sphi 0, %s118
  $region4: #{permutator_block_forward_pallas.12} parent=0 // loop_header_branch
    %13 = sbr.rel (%p11) target = $region8
  $region5: #{permutator_block_forward_pallas.12} parent=0 // loop_body
    %s15 = ssub.s32 %s10, 1
    %s16 = ssub.s32 %s10, 2
    %s17 = sadd.s32 %s10, 1
    %s18 = ssub.s32 %s10, %s17
    %p19 = scmp.eq.s32.totalorder %s18, 0
    %s21 = sadd.s32 %s20, 1
    %s22 = scalar_select %p19, %s20, %s21
    %p25 = pneg %p19
    %p26 = scmp.eq.s32.totalorder %s10, 3
    %p27 = por %p25, %p26
    %p28 = scmp.ne.s32.totalorder %s20, %s23
    %p29 = scmp.eq.s32.totalorder %s10, 0
    %p30 = por %p28, %p29
    %p31 = scmp.ne.s32.totalorder %s20, %s23
    %p32 = scmp.eq.s32.totalorder %s15, 3
    %p33 = por %p31, %p32
    %p34 = scmp.ne.s32.totalorder %s23, %s24
    %p35 = scmp.eq.s32.totalorder %s15, 0
    %p36 = por %p34, %p35
    %p37 = scmp.ne.s32.totalorder %s23, %s24
    %p38 = scmp.eq.s32.totalorder %s16, 3
    %p39 = por %p37, %p38
    %p41 = scmp.ne.s32.totalorder %s24, %s40
    %p42 = scmp.eq.s32.totalorder %s16, 0
    %p43 = por %p41, %p42
    %s44 = ssub.s32 %s10, %s17
    %p45 = scmp.eq.s32.totalorder %s44, 0
    %s47 = sadd.s32 %s46, 1
    %s48 = scalar_select %p45, %s46, %s47
    %p51 = pneg %p45
    %p52 = scmp.eq.s32.totalorder %s10, 3
    %p53 = por %p51, %p52
    %p54 = scmp.ne.s32.totalorder %s46, %s49
    %p55 = scmp.eq.s32.totalorder %s10, 0
    %p56 = por %p54, %p55
    %p57 = scmp.ne.s32.totalorder %s46, %s49
    %p58 = scmp.eq.s32.totalorder %s15, 3
    %p59 = por %p57, %p58
    %p60 = scmp.ne.s32.totalorder %s49, %s50
    %p61 = scmp.eq.s32.totalorder %s15, 0
    %p62 = por %p60, %p61
    %p63 = scmp.ne.s32.totalorder %s49, %s50
    %p64 = scmp.eq.s32.totalorder %s16, 3
    %p65 = por %p63, %p64
    %p67 = scmp.ne.s32.totalorder %s50, %s66
    %p68 = scmp.eq.s32.totalorder %s16, 0
    %p69 = por %p67, %p68
    %s71 = sadd.s32 %s70, 1
    %p74 = scmp.eq.s32.totalorder %s10, 3
    %p75 = scmp.ne.s32.totalorder %s70, %s72
    %p76 = scmp.eq.s32.totalorder %s10, 0
    %p77 = por %p75, %p76
    %p78 = scmp.ne.s32.totalorder %s70, %s72
    %p79 = scmp.eq.s32.totalorder %s15, 3
    %p80 = por %p78, %p79
    %p81 = scmp.ne.s32.totalorder %s72, %s73
    %p82 = scmp.eq.s32.totalorder %s15, 0
    %p83 = por %p81, %p82
    %p84 = scmp.ne.s32.totalorder %s72, %s73
    %p85 = scmp.eq.s32.totalorder %s16, 3
    %p86 = por %p84, %p85
    %p88 = scmp.ne.s32.totalorder %s73, %s87
    %p89 = scmp.eq.s32.totalorder %s16, 0
    %p90 = por %p88, %p89
    %s92 = sadd.s32 %s91, 1
    %p95 = scmp.eq.s32.totalorder %s10, 3
    %p96 = scmp.ne.s32.totalorder %s91, %s93
    %p97 = scmp.eq.s32.totalorder %s10, 0
    %p98 = por %p96, %p97
    %p99 = scmp.ne.s32.totalorder %s91, %s93
    %p100 = scmp.eq.s32.totalorder %s15, 3
    %p101 = por %p99, %p100
    %p102 = scmp.ne.s32.totalorder %s93, %s94
    %p103 = scmp.eq.s32.totalorder %s15, 0
    %p104 = por %p102, %p103
    %p105 = scmp.ne.s32.totalorder %s93, %s94
    %p106 = scmp.eq.s32.totalorder %s16, 3
    %p107 = por %p105, %p106
    %p109 = scmp.ne.s32.totalorder %s94, %s108
    %p110 = scmp.eq.s32.totalorder %s16, 0
    %p111 = por %p109, %p110
    %s112 = ssub.s32 %s10, %s17
    %p113 = scmp.eq.s32.totalorder %s112, 0
    %s115 = sadd.s32 %s114, 1
    %s116 = scalar_select %p113, %s114, %s115
    %p119 = pneg %p113
    %p120 = scmp.eq.s32.totalorder %s10, 3
    %p121 = por %p119, %p120
    %p122 = scmp.ne.s32.totalorder %s114, %s117
    %p123 = scmp.eq.s32.totalorder %s10, 0
    %p124 = por %p122, %p123
    %p125 = scmp.ne.s32.totalorder %s114, %s117
    %p126 = scmp.eq.s32.totalorder %s15, 3
    %p127 = por %p125, %p126
    %p128 = scmp.ne.s32.totalorder %s117, %s118
    %p129 = scmp.eq.s32.totalorder %s15, 0
    %p130 = por %p128, %p129
    %p131 = scmp.ne.s32.totalorder %s117, %s118
    %p132 = scmp.eq.s32.totalorder %s16, 3
    %p133 = por %p131, %p132
    %p135 = scmp.ne.s32.totalorder %s118, %s134
    %p136 = scmp.eq.s32.totalorder %s16, 0
    %p137 = por %p135, %p136
    %p138 = scmp.le.s32.totalorder 1, %s10
    %p139 = scmp.lt.s32.totalorder %s10, 5
    %p140 = pnand %p138, %p139
    %p141 = pneg %p140
    // Predicated region
    $region9: #{permutator_block_forward_pallas.12} parent=5 // pred_check
      _
    $region10: #{permutator_block_forward_pallas.12} parent=5 // pred_check_branch
      %143 = sbr.rel (%p140) target = $region12
    $region11: #{permutator_block_forward_pallas.12} parent=5 // pred_region
      %s144 = ssub.s32 %s10, 1
      // Predicated region
      $region13: #{permutator_block_forward_pallas.12} parent=11 // pred_check
        %p145 = pneg %p83
      $region14: #{permutator_block_forward_pallas.12} parent=11 // pred_check_branch
        %147 = sbr.rel (%p145) target = $region16
      $region15: #{permutator_block_forward_pallas.12} parent=11 // pred_region
        _
      $region16: #{permutator_block_forward_pallas.12} parent=11 // pred_fallthru
        _
      // Predicated region
      $region17: #{permutator_block_forward_pallas.12} parent=11 // pred_check
        %p148 = pneg %p104
      $region18: #{permutator_block_forward_pallas.12} parent=11 // pred_check_branch
        %150 = sbr.rel (%p148) target = $region20
      $region19: #{permutator_block_forward_pallas.12} parent=11 // pred_region
        _
      $region20: #{permutator_block_forward_pallas.12} parent=11 // pred_fallthru
        _
    $region12: #{permutator_block_forward_pallas.12} parent=5 // pred_fallthru
      _
    %p151 = scmp.lt.s32.totalorder %s10, 4
    // Predicated region
    $region21: #{permutator_block_forward_pallas.12} parent=5 // pred_check
      %p152 = pneg %p151
    $region22: #{permutator_block_forward_pallas.12} parent=5 // pred_check_branch
      %154 = sbr.rel (%p152) target = $region24
    $region23: #{permutator_block_forward_pallas.12} parent=5 // pred_region
      // Predicated region
      $region25: #{permutator_block_forward_pallas.12} parent=23 // pred_check
        %p155 = pneg %p30
      $region26: #{permutator_block_forward_pallas.12} parent=23 // pred_check_branch
        %157 = sbr.rel (%p155) target = $region28
      $region27: #{permutator_block_forward_pallas.12} parent=23 // pred_region
        %s158 = smul.u32 2, %s10
        %p159 = scmp.lt.s32.totalorder %s158, 7
        %s160 = scalar_select %p159, %s158, 7
        %s161 = smul.addr %s160, 4
        %s162 = scalar_lea.vmem %s0, %s161
        %s163 = smul.u32 2, %s10
      $region28: #{permutator_block_forward_pallas.12} parent=23 // pred_fallthru
        _
      // Predicated region
      $region29: #{permutator_block_forward_pallas.12} parent=23 // pred_check
        %p164 = pneg %p56
      $region30: #{permutator_block_forward_pallas.12} parent=23 // pred_check_branch
        %166 = sbr.rel (%p164) target = $region32
      $region31: #{permutator_block_forward_pallas.12} parent=23 // pred_region
        %s167 = smul.u32 2, %s10
        %p168 = scmp.lt.s32.totalorder %s167, 7
        %s169 = scalar_select %p168, %s167, 7
        %s170 = smul.addr %s169, 8
        %s171 = scalar_lea.vmem %s1, %s170
        %s172 = smul.u32 2, %s10
      $region32: #{permutator_block_forward_pallas.12} parent=23 // pred_fallthru
        _
    $region24: #{permutator_block_forward_pallas.12} parent=5 // pred_fallthru
      _
    %p173 = scmp.le.s32.totalorder 1, %s10
    %p174 = scmp.lt.s32.totalorder %s10, 5
    %p175 = pnand %p173, %p174
    %p176 = pneg %p175
    // Predicated region
    $region33: #{permutator_block_forward_pallas.12} parent=5 // pred_check
      _
    $region34: #{permutator_block_forward_pallas.12} parent=5 // pred_check_branch
      %178 = sbr.rel (%p175) target = $region36
    $region35: #{permutator_block_forward_pallas.12} parent=5 // pred_region
      %s179 = ssub.s32 %s10, 1
      %s180 = smul.u32 2, %s15
      %p181 = scmp.lt.s32.totalorder %s180, 7
      %s182 = scalar_select %p181, %s180, 7
      %s183 = smul.addr %s182, 4
      %s184 = scalar_lea.vmem %s0, %s183
      %p185 = pneg %p36
      %p186 = pneg %p33
      %s187 = smul.u32 2, %s15
      %p188 = scmp.lt.s32.totalorder %s187, 7
      %s189 = scalar_select %p188, %s187, 7
      %s190 = smul.addr %s189, 8
      %s191 = scalar_lea.vmem %s1, %s190
      %p192 = pneg %p62
      %p193 = pneg %p59
      %p194 = pneg %p83
      %p195 = pneg %p80
      %p196 = pneg %p104
      %p197 = pneg %p101
      %p198 = pneg %p130
      %p199 = pneg %p127
      %s200 = smul.u32 2, %s15
      %p201 = scmp.lt.s32.totalorder %s200, 7
      %s202 = scalar_select %p201, %s200, 7
      %s203 = smul.addr %s202, 8
      %s204 = scalar_lea.vmem %s4, %s203
      %s205 = smul.u32 2, %s15
      %p206 = scmp.lt.s32.totalorder %s205, 7
      %s207 = scalar_select %p206, %s205, 7
      %s208 = smul.addr %s207, 4
      %s209 = scalar_lea.vmem %s0, %s208
      %s210 = smul.u32 2, %s15
      %s211 = smul.u32 2, %s15
      %p212 = scmp.lt.s32.totalorder %s211, 7
      %s213 = scalar_select %p212, %s211, 7
      %s214 = smul.addr %s213, 8
      %s215 = scalar_lea.vmem %s1, %s214
      %s216 = smul.u32 2, %s15
      %s217 = smul.u32 2, %s15
      %p218 = scmp.lt.s32.totalorder %s217, 7
      %s219 = scalar_select %p218, %s217, 7
      %s220 = smul.addr %s219, 8
      %s221 = scalar_lea.vmem %s4, %s220
      %s222 = smul.u32 2, %s15
      %v224 = vld [vmem:[%s209] sm:$0xf]
      %v225 = vld [vmem:[%s209 + $0x4] sm:$0xf]
      %v226 = vld [vmem:[%s2] sm:$0xf]
      %v227 = vld [vmem:[%s2 + $0x4] sm:$0xf]
      %v228 = vld [vmem:[%s3] sm:$0x1]
      %v230 = vperm.slane %v228, 0
      %v234 = vunpack.c.l.b16 %v224
      %v235 = vunpack.c.l.b16 %v225
      %v236 = vpack.c.b16 %v235, %v234
      %v239 = vunpack.c.l.b16 %v226
      %v240 = vunpack.c.l.b16 %v227
      %v241 = vpack.c.b16 %v240, %v239
      %vm243 = vcmask 130048
      %v245 = vsel %vm243, %v236, 0
      %247 = vmatpush.bf16.msra.mxu0 0
      %248 = vmatpush.bf16.msra.mxu0 0
      %249 = vmatpush.bf16.msra.mxu0 0
      %250 = vmatpush.bf16.msra.mxu0 0
      %251 = vmatpush.bf16.msra.mxu0 0
      %252 = vmatpush.bf16.msra.mxu0 0
      %253 = vmatpush.bf16.msra.mxu0 0
      %254 = vmatpush.bf16.msra.mxu0 %v241
      %255 = vmatmul.bf16.gmra.mxu0 %v245
      %v256 = vpop.f32.mrf.mxu0
      %v257 = vadd.f32 %v230, %v256
      %v258 = vpop.f32.mrf.mxu0
      %v259 = vadd.f32 %v230, %v258
      %260 = vdwg.mxu0
      %v261 = vld [vmem:[%s215] sm:$0xff]
      %v262 = vld [vmem:[%s215 + $0x8] sm:$0xff]
      %v263 = vadd.f32 %v261, %v257
      %v264 = vadd.f32 %v262, %v259
      %265 = vst.msk [vmem:[%s221] sm:$0xff] %vm243, %v263
      %266 = vst.msk [vmem:[%s221 + $0x8] sm:$0xff] %vm243, %v264
      %s267 = smul.u32 2, %s15
      %p268 = scmp.lt.s32.totalorder %s267, 7
      %s269 = scalar_select %p268, %s267, 7
      %s270 = smul.addr %s269, 8
      %s271 = scalar_lea.vmem %s4, %s270
      // Predicated region
      $region37: #{permutator_block_forward_pallas.12} parent=35 // pred_check
        %p272 = pneg %p127
      $region38: #{permutator_block_forward_pallas.12} parent=35 // pred_check_branch
        %274 = sbr.rel (%p272) target = $region40
      $region39: #{permutator_block_forward_pallas.12} parent=35 // pred_region
        %s275 = smul.u32 2, %s15
      $region40: #{permutator_block_forward_pallas.12} parent=35 // pred_fallthru
        _
    $region36: #{permutator_block_forward_pallas.12} parent=5 // pred_fallthru
      _
    %p276 = scmp.le.s32.totalorder 2, %s10
    // Predicated region
    $region41: #{permutator_block_forward_pallas.12} parent=5 // pred_check
      %p277 = pneg %p276
    $region42: #{permutator_block_forward_pallas.12} parent=5 // pred_check_branch
      %279 = sbr.rel (%p277) target = $region44
    $region43: #{permutator_block_forward_pallas.12} parent=5 // pred_region
      %s280 = ssub.s32 %s10, 2
      // Predicated region
      $region45: #{permutator_block_forward_pallas.12} parent=43 // pred_check
        %p281 = pneg %p133
      $region46: #{permutator_block_forward_pallas.12} parent=43 // pred_check_branch
        %283 = sbr.rel (%p281) target = $region48
      $region47: #{permutator_block_forward_pallas.12} parent=43 // pred_region
        %s284 = smul.u32 2, %s16
        %p285 = scmp.lt.s32.totalorder %s284, 7
        %s286 = scalar_select %p285, %s284, 7
        %s287 = smul.addr %s286, 8
        %s288 = scalar_lea.vmem %s4, %s287
      $region48: #{permutator_block_forward_pallas.12} parent=43 // pred_fallthru
        _
    $region44: #{permutator_block_forward_pallas.12} parent=5 // pred_fallthru
      _
  $region6: #{permutator_block_forward_pallas.12} parent=0 // loop_footer
    %s14 = sadd.s32 1, %s10
  $region7: #{permutator_block_forward_pallas.12} parent=0 // loop_footer_branch
    %9 = sbr.rel target = $region3
  $region8: #{permutator_block_forward_pallas.12} parent=0 // loop_exit
    _

// kernel: permutator_block_forward_pallas.13
$region0: #{permutator_block_forward_pallas.13}
  #allocation0 [shape = 'u32[]', space=smem, size = 0x4, offset = 0x4, fixed_abs, tag = 'smem constant byte address 0x4 - core index']
  #allocation1 [shape = 'u32[72,128]{1,0:T(1,128)}', space=vmem, size = 0x9000, scoped, tag = 'internal scratch']
  %s0 = inlined_call_operand.vmem [shape: f32[64,16], index: 0, kind: input, shape index: {}]
  %s1 = inlined_call_operand.vmem [shape: f32[1,16], index: 1, kind: input, shape index: {}]
  %s2 = inlined_call_operand.vmem [shape: f32[1,16], index: 2, kind: input, shape index: {}]
  %s3 = inlined_call_operand.vmem [shape: bf16[64,16], index: 3, kind: output, shape index: {}]
  %s4 = sld [smem:[#allocation0]]
  $region45: #{permutator_block_forward_pallas.13} parent=0
    _
  %s6 = ssub.s32 1, %s4
  %s7 = scalar_select 0, %s6, %s4
  loop: start=0, step=1, limit=6
  $region2: #{permutator_block_forward_pallas.13} parent=0 // loop_pre_header
    _
  $region3: #{permutator_block_forward_pallas.13} parent=0 // loop_header
    %s9 = sphi 0, %s13
    %p10 = scmp.ge.s32.totalorder %s9, 6
    %s19 = sphi 0, %s21
    %s22 = sphi 0, %s19
    %s23 = sphi 0, %s22
    %s39 = sphi 0, %s23
    %s43 = sphi 0, %s43
    %s45 = sphi 0, %s43
    %s46 = sphi 0, %s45
    %s60 = sphi 0, %s46
    %s64 = sphi 0, %s64
    %s66 = sphi 0, %s64
    %s67 = sphi 0, %s66
    %s81 = sphi 0, %s67
    %s87 = sphi 0, %s89
    %s90 = sphi 0, %s87
    %s91 = sphi 0, %s90
    %s107 = sphi 0, %s91
  $region4: #{permutator_block_forward_pallas.13} parent=0 // loop_header_branch
    %12 = sbr.rel (%p10) target = $region8
  $region5: #{permutator_block_forward_pallas.13} parent=0 // loop_body
    %s14 = ssub.s32 %s9, 1
    %s15 = ssub.s32 %s9, 2
    %s16 = sadd.s32 %s9, 1
    %s17 = ssub.s32 %s9, %s16
    %p18 = scmp.eq.s32.totalorder %s17, 0
    %s20 = sadd.s32 %s19, 1
    %s21 = scalar_select %p18, %s19, %s20
    %p24 = pneg %p18
    %p25 = scmp.eq.s32.totalorder %s9, 3
    %p26 = por %p24, %p25
    %p27 = scmp.ne.s32.totalorder %s19, %s22
    %p28 = scmp.eq.s32.totalorder %s9, 0
    %p29 = por %p27, %p28
    %p30 = scmp.ne.s32.totalorder %s19, %s22
    %p31 = scmp.eq.s32.totalorder %s14, 3
    %p32 = por %p30, %p31
    %p33 = scmp.ne.s32.totalorder %s22, %s23
    %p34 = scmp.eq.s32.totalorder %s14, 0
    %p35 = por %p33, %p34
    %p36 = scmp.ne.s32.totalorder %s22, %s23
    %p37 = scmp.eq.s32.totalorder %s15, 3
    %p38 = por %p36, %p37
    %p40 = scmp.ne.s32.totalorder %s23, %s39
    %p41 = scmp.eq.s32.totalorder %s15, 0
    %p42 = por %p40, %p41
    %s44 = sadd.s32 %s43, 1
    %p47 = scmp.eq.s32.totalorder %s9, 3
    %p48 = scmp.ne.s32.totalorder %s43, %s45
    %p49 = scmp.eq.s32.totalorder %s9, 0
    %p50 = por %p48, %p49
    %p51 = scmp.ne.s32.totalorder %s43, %s45
    %p52 = scmp.eq.s32.totalorder %s14, 3
    %p53 = por %p51, %p52
    %p54 = scmp.ne.s32.totalorder %s45, %s46
    %p55 = scmp.eq.s32.totalorder %s14, 0
    %p56 = por %p54, %p55
    %p57 = scmp.ne.s32.totalorder %s45, %s46
    %p58 = scmp.eq.s32.totalorder %s15, 3
    %p59 = por %p57, %p58
    %p61 = scmp.ne.s32.totalorder %s46, %s60
    %p62 = scmp.eq.s32.totalorder %s15, 0
    %p63 = por %p61, %p62
    %s65 = sadd.s32 %s64, 1
    %p68 = scmp.eq.s32.totalorder %s9, 3
    %p69 = scmp.ne.s32.totalorder %s64, %s66
    %p70 = scmp.eq.s32.totalorder %s9, 0
    %p71 = por %p69, %p70
    %p72 = scmp.ne.s32.totalorder %s64, %s66
    %p73 = scmp.eq.s32.totalorder %s14, 3
    %p74 = por %p72, %p73
    %p75 = scmp.ne.s32.totalorder %s66, %s67
    %p76 = scmp.eq.s32.totalorder %s14, 0
    %p77 = por %p75, %p76
    %p78 = scmp.ne.s32.totalorder %s66, %s67
    %p79 = scmp.eq.s32.totalorder %s15, 3
    %p80 = por %p78, %p79
    %p82 = scmp.ne.s32.totalorder %s67, %s81
    %p83 = scmp.eq.s32.totalorder %s15, 0
    %p84 = por %p82, %p83
    %s85 = ssub.s32 %s9, %s16
    %p86 = scmp.eq.s32.totalorder %s85, 0
    %s88 = sadd.s32 %s87, 1
    %s89 = scalar_select %p86, %s87, %s88
    %p92 = pneg %p86
    %p93 = scmp.eq.s32.totalorder %s9, 3
    %p94 = por %p92, %p93
    %p95 = scmp.ne.s32.totalorder %s87, %s90
    %p96 = scmp.eq.s32.totalorder %s9, 0
    %p97 = por %p95, %p96
    %p98 = scmp.ne.s32.totalorder %s87, %s90
    %p99 = scmp.eq.s32.totalorder %s14, 3
    %p100 = por %p98, %p99
    %p101 = scmp.ne.s32.totalorder %s90, %s91
    %p102 = scmp.eq.s32.totalorder %s14, 0
    %p103 = por %p101, %p102
    %p104 = scmp.ne.s32.totalorder %s90, %s91
    %p105 = scmp.eq.s32.totalorder %s15, 3
    %p106 = por %p104, %p105
    %p108 = scmp.ne.s32.totalorder %s91, %s107
    %p109 = scmp.eq.s32.totalorder %s15, 0
    %p110 = por %p108, %p109
    %p111 = scmp.le.s32.totalorder 1, %s9
    %p112 = scmp.lt.s32.totalorder %s9, 5
    %p113 = pnand %p111, %p112
    %p114 = pneg %p113
    // Predicated region
    $region9: #{permutator_block_forward_pallas.13} parent=5 // pred_check
      _
    $region10: #{permutator_block_forward_pallas.13} parent=5 // pred_check_branch
      %116 = sbr.rel (%p113) target = $region12
    $region11: #{permutator_block_forward_pallas.13} parent=5 // pred_region
      %s117 = ssub.s32 %s9, 1
      // Predicated region
      $region13: #{permutator_block_forward_pallas.13} parent=11 // pred_check
        %p118 = pneg %p56
      $region14: #{permutator_block_forward_pallas.13} parent=11 // pred_check_branch
        %120 = sbr.rel (%p118) target = $region16
      $region15: #{permutator_block_forward_pallas.13} parent=11 // pred_region
        _
      $region16: #{permutator_block_forward_pallas.13} parent=11 // pred_fallthru
        _
      // Predicated region
      $region17: #{permutator_block_forward_pallas.13} parent=11 // pred_check
        %p121 = pneg %p77
      $region18: #{permutator_block_forward_pallas.13} parent=11 // pred_check_branch
        %123 = sbr.rel (%p121) target = $region20
      $region19: #{permutator_block_forward_pallas.13} parent=11 // pred_region
        _
      $region20: #{permutator_block_forward_pallas.13} parent=11 // pred_fallthru
        _
    $region12: #{permutator_block_forward_pallas.13} parent=5 // pred_fallthru
      _
    %p124 = scmp.lt.s32.totalorder %s9, 4
    // Predicated region
    $region21: #{permutator_block_forward_pallas.13} parent=5 // pred_check
      %p125 = pneg %p124
    $region22: #{permutator_block_forward_pallas.13} parent=5 // pred_check_branch
      %127 = sbr.rel (%p125) target = $region24
    $region23: #{permutator_block_forward_pallas.13} parent=5 // pred_region
      // Predicated region
      $region25: #{permutator_block_forward_pallas.13} parent=23 // pred_check
        %p128 = pneg %p29
      $region26: #{permutator_block_forward_pallas.13} parent=23 // pred_check_branch
        %130 = sbr.rel (%p128) target = $region28
      $region27: #{permutator_block_forward_pallas.13} parent=23 // pred_region
        %s131 = smul.u32 2, %s9
        %p132 = scmp.lt.s32.totalorder %s131, 7
        %s133 = scalar_select %p132, %s131, 7
        %s134 = smul.addr %s133, 8
        %s135 = scalar_lea.vmem %s0, %s134
        %s136 = smul.u32 2, %s9
      $region28: #{permutator_block_forward_pallas.13} parent=23 // pred_fallthru
        _
    $region24: #{permutator_block_forward_pallas.13} parent=5 // pred_fallthru
      _
    %p137 = scmp.le.s32.totalorder 1, %s9
    %p138 = scmp.lt.s32.totalorder %s9, 5
    %p139 = pnand %p137, %p138
    %p140 = pneg %p139
    // Predicated region
    $region29: #{permutator_block_forward_pallas.13} parent=5 // pred_check
      _
    $region30: #{permutator_block_forward_pallas.13} parent=5 // pred_check_branch
      %142 = sbr.rel (%p139) target = $region32
    $region31: #{permutator_block_forward_pallas.13} parent=5 // pred_region
      %s143 = ssub.s32 %s9, 1
      %s144 = smul.u32 2, %s14
      %p145 = scmp.lt.s32.totalorder %s144, 7
      %s146 = scalar_select %p145, %s144, 7
      %s147 = smul.addr %s146, 8
      %s148 = scalar_lea.vmem %s0, %s147
      %p149 = pneg %p35
      %p150 = pneg %p32
      %p151 = pneg %p56
      %p152 = pneg %p53
      %p153 = pneg %p77
      %p154 = pneg %p74
      %p155 = pneg %p103
      %p156 = pneg %p100
      %s157 = smul.u32 2, %s14
      %p158 = scmp.lt.s32.totalorder %s157, 7
      %s159 = scalar_select %p158, %s157, 7
      %s160 = smul.addr %s159, 4
      %s161 = scalar_lea.vmem %s3, %s160
      %s162 = smul.u32 2, %s14
      %p163 = scmp.lt.s32.totalorder %s162, 7
      %s164 = scalar_select %p163, %s162, 7
      %s165 = smul.addr %s164, 8
      %s166 = scalar_lea.vmem %s0, %s165
      %s167 = smul.u32 2, %s14
      %s168 = smul.u32 2, %s14
      %p169 = scmp.lt.s32.totalorder %s168, 7
      %s170 = scalar_select %p169, %s168, 7
      %s171 = smul.addr %s170, 4
      %s172 = scalar_lea.vmem %s3, %s171
      %s173 = smul.u32 2, %s14
      %v174 = vld [vmem:[%s166] sm:$0xff]
      %v175 = vld [vmem:[%s166 + $0x8] sm:$0xff]
      %vm176 = vcmask 130048
      %v177 = vsel %vm176, %v174, 0.0
      %178 = vadd.xlane.f32.xlu0 %v177
      %v179 = vpop.xlane.xlu0 %178
      %v180 = vsel %vm176, %v175, 0.0
      %181 = vadd.xlane.f32.xlu0 %v180
      %v182 = vpop.xlane.xlu0 %181
      %v183 = vrcp.pop 16.0
      %v184 = vmul.f32 16.0, %v183
      %v185 = vsub.f32 1.0, %v184
      %v186 = vmul.f32 %v183, %v185
      %v187 = vadd.f32 %v183, %v186
      %vm188 = vweird.f32 %v183
      %v189 = vsel %vm188, %v183, %v187
      %v190 = vmul.f32 %v179, %v189
      %v191 = vmul.f32 %v182, %v189
      %v192 = vsub.f32 %v174, %v190
      %v193 = vsub.f32 %v175, %v191
      %v194 = vmul.f32 %v192, %v192
      %v195 = vmul.f32 %v193, %v193
      %v196 = vsel %vm176, %v194, 0.0
      %197 = vadd.xlane.f32.xlu0 %v196
      %v198 = vpop.xlane.xlu0 %197
      %v199 = vsel %vm176, %v195, 0.0
      %200 = vadd.xlane.f32.xlu0 %v199
      %v201 = vpop.xlane.xlu0 %200
      %v202 = vmul.f32 %v198, %v189
      %v203 = vmul.f32 %v201, %v189
      %v204 = vadd.f32 %v202, 1e-05
      %v205 = vadd.f32 %v203, 1e-05
      %v206 = vrsqrt.pop %v204
      %v207 = vmul.f32 %v206, %v204
      %v208 = vmul.f32 %v207, %v206
      %v209 = vmul.f32 0.5, %v208
      %v210 = vsub.f32 1.5, %v209
      %v211 = vmul.f32 %v206, %v210
      %vm212 = vweird.f32 %v204
      %vm213 = vweird.f32 %v206
      %vm214 = vmor %vm212, %vm213
      %v215 = vsel %vm214, %v206, %v211
      %v216 = vrsqrt.pop %v205
      %v217 = vmul.f32 %v216, %v205
      %v218 = vmul.f32 %v217, %v216
      %v219 = vmul.f32 0.5, %v218
      %v220 = vsub.f32 1.5, %v219
      %v221 = vmul.f32 %v216, %v220
      %vm222 = vweird.f32 %v205
      %vm223 = vweird.f32 %v216
      %vm224 = vmor %vm222, %vm223
      %v225 = vsel %vm224, %v216, %v221
      %v226 = vmul.f32 %v192, %v215
      %v227 = vmul.f32 %v193, %v225
      %v228 = vld [vmem:[%s1] sm:$0x1]
      %v230 = vperm.slane %v228, 0
      %v232 = vmul.f32 %v226, %v230
      %v233 = vmul.f32 %v227, %v230
      %v234 = vld [vmem:[%s2] sm:$0x1]
      %v236 = vperm.slane %v234, 0
      %v238 = vadd.f32 %v232, %v236
      %v239 = vadd.f32 %v233, %v236
      %v240 = vpack.c.bf16 %v238, %v238
      %v241 = vpack.c.bf16 %v239, %v239
      %vm242 = vcmask 125952
      %243 = vst.msk [vmem:[%s172] sm:$0xf] %vm242, %v240
      %244 = vst.msk [vmem:[%s172 + $0x4] sm:$0xf] %vm242, %v241
      %s245 = smul.u32 2, %s14
      %p246 = scmp.lt.s32.totalorder %s245, 7
      %s247 = scalar_select %p246, %s245, 7
      %s248 = smul.addr %s247, 4
      %s249 = scalar_lea.vmem %s3, %s248
      // Predicated region
      $region33: #{permutator_block_forward_pallas.13} parent=31 // pred_check
        %p250 = pneg %p100
      $region34: #{permutator_block_forward_pallas.13} parent=31 // pred_check_branch
        %252 = sbr.rel (%p250) target = $region36
      $region35: #{permutator_block_forward_pallas.13} parent=31 // pred_region
        %s253 = smul.u32 2, %s14
      $region36: #{permutator_block_forward_pallas.13} parent=31 // pred_fallthru
        _
    $region32: #{permutator_block_forward_pallas.13} parent=5 // pred_fallthru
      _
    %p254 = scmp.le.s32.totalorder 2, %s9
    // Predicated region
    $region37: #{permutator_block_forward_pallas.13} parent=5 // pred_check
      %p255 = pneg %p254
    $region38: #{permutator_block_forward_pallas.13} parent=5 // pred_check_branch
      %257 = sbr.rel (%p255) target = $region40
    $region39: #{permutator_block_forward_pallas.13} parent=5 // pred_region
      %s258 = ssub.s32 %s9, 2
      // Predicated region
      $region41: #{permutator_block_forward_pallas.13} parent=39 // pred_check
        %p259 = pneg %p106
      $region42: #{permutator_block_forward_pallas.13} parent=39 // pred_check_branch
        %261 = sbr.rel (%p259) target = $region44
      $region43: #{permutator_block_forward_pallas.13} parent=39 // pred_region
        %s262 = smul.u32 2, %s15
        %p263 = scmp.lt.s32.totalorder %s262, 7
        %s264 = scalar_select %p263, %s262, 7
        %s265 = smul.addr %s264, 4
        %s266 = scalar_lea.vmem %s3, %s265
      $region44: #{permutator_block_forward_pallas.13} parent=39 // pred_fallthru
        _
    $region40: #{permutator_block_forward_pallas.13} parent=5 // pred_fallthru
      _
  $region6: #{permutator_block_forward_pallas.13} parent=0 // loop_footer
    %s13 = sadd.s32 1, %s9
  $region7: #{permutator_block_forward_pallas.13} parent=0 // loop_footer_branch
    %8 = sbr.rel target = $region3
  $region8: #{permutator_block_forward_pallas.13} parent=0 // loop_exit
    _

// kernel: permutator_block_forward_pallas.14
$region0: #{permutator_block_forward_pallas.14}
  #allocation0 [shape = 'u32[]', space=smem, size = 0x4, offset = 0x4, fixed_abs, tag = 'smem constant byte address 0x4 - core index']
  #allocation1 [shape = 'u32[72,128]{1,0:T(1,128)}', space=vmem, size = 0x9000, scoped, tag = 'internal scratch']
  %s0 = inlined_call_operand.vmem [shape: bf16[64,16], index: 0, kind: input, shape index: {}]
  %s1 = inlined_call_operand.vmem [shape: bf16[16,16], index: 1, kind: input, shape index: {}]
  %s2 = inlined_call_operand.vmem [shape: bf16[64,16], index: 2, kind: output, shape index: {}]
  %s3 = sld [smem:[#allocation0]]
  $region41: #{permutator_block_forward_pallas.14} parent=0
    _
  %s5 = ssub.s32 1, %s3
  %s6 = scalar_select 0, %s5, %s3
  loop: start=0, step=1, limit=6
  $region2: #{permutator_block_forward_pallas.14} parent=0 // loop_pre_header
    _
  $region3: #{permutator_block_forward_pallas.14} parent=0 // loop_header
    %s8 = sphi 0, %s12
    %p9 = scmp.ge.s32.totalorder %s8, 6
    %s18 = sphi 0, %s20
    %s21 = sphi 0, %s18
    %s22 = sphi 0, %s21
    %s38 = sphi 0, %s22
    %s42 = sphi 0, %s42
    %s44 = sphi 0, %s42
    %s45 = sphi 0, %s44
    %s59 = sphi 0, %s45
    %s65 = sphi 0, %s67
    %s68 = sphi 0, %s65
    %s69 = sphi 0, %s68
    %s85 = sphi 0, %s69
  $region4: #{permutator_block_forward_pallas.14} parent=0 // loop_header_branch
    %11 = sbr.rel (%p9) target = $region8
  $region5: #{permutator_block_forward_pallas.14} parent=0 // loop_body
    %s13 = ssub.s32 %s8, 1
    %s14 = ssub.s32 %s8, 2
    %s15 = sadd.s32 %s8, 1
    %s16 = ssub.s32 %s8, %s15
    %p17 = scmp.eq.s32.totalorder %s16, 0
    %s19 = sadd.s32 %s18, 1
    %s20 = scalar_select %p17, %s18, %s19
    %p23 = pneg %p17
    %p24 = scmp.eq.s32.totalorder %s8, 3
    %p25 = por %p23, %p24
    %p26 = scmp.ne.s32.totalorder %s18, %s21
    %p27 = scmp.eq.s32.totalorder %s8, 0
    %p28 = por %p26, %p27
    %p29 = scmp.ne.s32.totalorder %s18, %s21
    %p30 = scmp.eq.s32.totalorder %s13, 3
    %p31 = por %p29, %p30
    %p32 = scmp.ne.s32.totalorder %s21, %s22
    %p33 = scmp.eq.s32.totalorder %s13, 0
    %p34 = por %p32, %p33
    %p35 = scmp.ne.s32.totalorder %s21, %s22
    %p36 = scmp.eq.s32.totalorder %s14, 3
    %p37 = por %p35, %p36
    %p39 = scmp.ne.s32.totalorder %s22, %s38
    %p40 = scmp.eq.s32.totalorder %s14, 0
    %p41 = por %p39, %p40
    %s43 = sadd.s32 %s42, 1
    %p46 = scmp.eq.s32.totalorder %s8, 3
    %p47 = scmp.ne.s32.totalorder %s42, %s44
    %p48 = scmp.eq.s32.totalorder %s8, 0
    %p49 = por %p47, %p48
    %p50 = scmp.ne.s32.totalorder %s42, %s44
    %p51 = scmp.eq.s32.totalorder %s13, 3
    %p52 = por %p50, %p51
    %p53 = scmp.ne.s32.totalorder %s44, %s45
    %p54 = scmp.eq.s32.totalorder %s13, 0
    %p55 = por %p53, %p54
    %p56 = scmp.ne.s32.totalorder %s44, %s45
    %p57 = scmp.eq.s32.totalorder %s14, 3
    %p58 = por %p56, %p57
    %p60 = scmp.ne.s32.totalorder %s45, %s59
    %p61 = scmp.eq.s32.totalorder %s14, 0
    %p62 = por %p60, %p61
    %s63 = ssub.s32 %s8, %s15
    %p64 = scmp.eq.s32.totalorder %s63, 0
    %s66 = sadd.s32 %s65, 1
    %s67 = scalar_select %p64, %s65, %s66
    %p70 = pneg %p64
    %p71 = scmp.eq.s32.totalorder %s8, 3
    %p72 = por %p70, %p71
    %p73 = scmp.ne.s32.totalorder %s65, %s68
    %p74 = scmp.eq.s32.totalorder %s8, 0
    %p75 = por %p73, %p74
    %p76 = scmp.ne.s32.totalorder %s65, %s68
    %p77 = scmp.eq.s32.totalorder %s13, 3
    %p78 = por %p76, %p77
    %p79 = scmp.ne.s32.totalorder %s68, %s69
    %p80 = scmp.eq.s32.totalorder %s13, 0
    %p81 = por %p79, %p80
    %p82 = scmp.ne.s32.totalorder %s68, %s69
    %p83 = scmp.eq.s32.totalorder %s14, 3
    %p84 = por %p82, %p83
    %p86 = scmp.ne.s32.totalorder %s69, %s85
    %p87 = scmp.eq.s32.totalorder %s14, 0
    %p88 = por %p86, %p87
    %p89 = scmp.le.s32.totalorder 1, %s8
    %p90 = scmp.lt.s32.totalorder %s8, 5
    %p91 = pnand %p89, %p90
    %p92 = pneg %p91
    // Predicated region
    $region9: #{permutator_block_forward_pallas.14} parent=5 // pred_check
      _
    $region10: #{permutator_block_forward_pallas.14} parent=5 // pred_check_branch
      %94 = sbr.rel (%p91) target = $region12
    $region11: #{permutator_block_forward_pallas.14} parent=5 // pred_region
      %s95 = ssub.s32 %s8, 1
      // Predicated region
      $region13: #{permutator_block_forward_pallas.14} parent=11 // pred_check
        %p96 = pneg %p55
      $region14: #{permutator_block_forward_pallas.14} parent=11 // pred_check_branch
        %98 = sbr.rel (%p96) target = $region16
      $region15: #{permutator_block_forward_pallas.14} parent=11 // pred_region
        _
      $region16: #{permutator_block_forward_pallas.14} parent=11 // pred_fallthru
        _
    $region12: #{permutator_block_forward_pallas.14} parent=5 // pred_fallthru
      _
    %p99 = scmp.lt.s32.totalorder %s8, 4
    // Predicated region
    $region17: #{permutator_block_forward_pallas.14} parent=5 // pred_check
      %p100 = pneg %p99
    $region18: #{permutator_block_forward_pallas.14} parent=5 // pred_check_branch
      %102 = sbr.rel (%p100) target = $region20
    $region19: #{permutator_block_forward_pallas.14} parent=5 // pred_region
      // Predicated region
      $region21: #{permutator_block_forward_pallas.14} parent=19 // pred_check
        %p103 = pneg %p28
      $region22: #{permutator_block_forward_pallas.14} parent=19 // pred_check_branch
        %105 = sbr.rel (%p103) target = $region24
      $region23: #{permutator_block_forward_pallas.14} parent=19 // pred_region
        %s106 = smul.u32 2, %s8
        %p107 = scmp.lt.s32.totalorder %s106, 7
        %s108 = scalar_select %p107, %s106, 7
        %s109 = smul.addr %s108, 4
        %s110 = scalar_lea.vmem %s0, %s109
        %s111 = smul.u32 2, %s8
      $region24: #{permutator_block_forward_pallas.14} parent=19 // pred_fallthru
        _
    $region20: #{permutator_block_forward_pallas.14} parent=5 // pred_fallthru
      _
    %p112 = scmp.le.s32.totalorder 1, %s8
    %p113 = scmp.lt.s32.totalorder %s8, 5
    %p114 = pnand %p112, %p113
    %p115 = pneg %p114
    // Predicated region
    $region25: #{permutator_block_forward_pallas.14} parent=5 // pred_check
      _
    $region26: #{permutator_block_forward_pallas.14} parent=5 // pred_check_branch
      %117 = sbr.rel (%p114) target = $region28
    $region27: #{permutator_block_forward_pallas.14} parent=5 // pred_region
      %s118 = ssub.s32 %s8, 1
      %s119 = smul.u32 2, %s13
      %p120 = scmp.lt.s32.totalorder %s119, 7
      %s121 = scalar_select %p120, %s119, 7
      %s122 = smul.addr %s121, 4
      %s123 = scalar_lea.vmem %s0, %s122
      %p124 = pneg %p34
      %p125 = pneg %p31
      %p126 = pneg %p55
      %p127 = pneg %p52
      %p128 = pneg %p81
      %p129 = pneg %p78
      %s130 = smul.u32 2, %s13
      %p131 = scmp.lt.s32.totalorder %s130, 7
      %s132 = scalar_select %p131, %s130, 7
      %s133 = smul.addr %s132, 4
      %s134 = scalar_lea.vmem %s2, %s133
      %s135 = smul.u32 2, %s13
      %p136 = scmp.lt.s32.totalorder %s135, 7
      %s137 = scalar_select %p136, %s135, 7
      %s138 = smul.addr %s137, 4
      %s139 = scalar_lea.vmem %s0, %s138
      %s140 = smul.u32 2, %s13
      %s141 = smul.u32 2, %s13
      %p142 = scmp.lt.s32.totalorder %s141, 7
      %s143 = scalar_select %p142, %s141, 7
      %s144 = smul.addr %s143, 4
      %s145 = scalar_lea.vmem %s2, %s144
      %s146 = smul.u32 2, %s13
      %v148 = vld [vmem:[%s139] sm:$0xf]
      %v149 = vld [vmem:[%s139 + $0x4] sm:$0xf]
      %v150 = vld [vmem:[%s1] sm:$0xf]
      %v151 = vld [vmem:[%s1 + $0x4] sm:$0xf]
      %v154 = vunpack.c.l.b16 %v148
      %v155 = vunpack.c.l.b16 %v149
      %v156 = vpack.c.b16 %v155, %v154
      %v159 = vunpack.c.l.b16 %v150
      %v160 = vunpack.c.l.b16 %v151
      %v161 = vpack.c.b16 %v160, %v159
      %vm163 = vcmask 130048
      %v165 = vsel %vm163, %v156, 0
      %167 = vmatpush.bf16.msra.mxu0 0
      %168 = vmatpush.bf16.msra.mxu0 0
      %169 = vmatpush.bf16.msra.mxu0 0
      %170 = vmatpush.bf16.msra.mxu0 0
      %171 = vmatpush.bf16.msra.mxu0 0
      %172 = vmatpush.bf16.msra.mxu0 0
      %173 = vmatpush.bf16.msra.mxu0 0
      %174 = vmatpush.bf16.msra.mxu0 %v161
      %175 = vmatmul.bf16.gmra.mxu0 %v165
      %v176 = vpop.f32.mrf.mxu0
      %v177 = vadd.f32 0.0, %v176
      %v178 = vpop.f32.mrf.mxu0
      %v179 = vadd.f32 0.0, %v178
      %180 = vdwg.mxu0
      %v181 = vpack.c.bf16 %v177, %v177
      %v182 = vpack.c.bf16 %v179, %v179
      %vm183 = vcmask 125952
      %184 = vst.msk [vmem:[%s145] sm:$0xf] %vm183, %v181
      %185 = vst.msk [vmem:[%s145 + $0x4] sm:$0xf] %vm183, %v182
      %s186 = smul.u32 2, %s13
      %p187 = scmp.lt.s32.totalorder %s186, 7
      %s188 = scalar_select %p187, %s186, 7
      %s189 = smul.addr %s188, 4
      %s190 = scalar_lea.vmem %s2, %s189
      // Predicated region
      $region29: #{permutator_block_forward_pallas.14} parent=27 // pred_check
        %p191 = pneg %p78
      $region30: #{permutator_block_forward_pallas.14} parent=27 // pred_check_branch
        %193 = sbr.rel (%p191) target = $region32
      $region31: #{permutator_block_forward_pallas.14} parent=27 // pred_region
        %s194 = smul.u32 2, %s13
      $region32: #{permutator_block_forward_pallas.14} parent=27 // pred_fallthru
        _
    $region28: #{permutator_block_forward_pallas.14} parent=5 // pred_fallthru
      _
    %p195 = scmp.le.s32.totalorder 2, %s8
    // Predicated region
    $region33: #{permutator_block_forward_pallas.14} parent=5 // pred_check
      %p196 = pneg %p195
    $region34: #{permutator_block_forward_pallas.14} parent=5 // pred_check_branch
      %198 = sbr.rel (%p196) target = $region36
    $region35: #{permutator_block_forward_pallas.14} parent=5 // pred_region
      %s199 = ssub.s32 %s8, 2
      // Predicated region
      $region37: #{permutator_block_forward_pallas.14} parent=35 // pred_check
        %p200 = pneg %p84
      $region38: #{permutator_block_forward_pallas.14} parent=35 // pred_check_branch
        %202 = sbr.rel (%p200) target = $region40
      $region39: #{permutator_block_forward_pallas.14} parent=35 // pred_region
        %s203 = smul.u32 2, %s14
        %p204 = scmp.lt.s32.totalorder %s203, 7
        %s205 = scalar_select %p204, %s203, 7
        %s206 = smul.addr %s205, 4
        %s207 = scalar_lea.vmem %s2, %s206
      $region40: #{permutator_block_forward_pallas.14} parent=35 // pred_fallthru
        _
    $region36: #{permutator_block_forward_pallas.14} parent=5 // pred_fallthru
      _
  $region6: #{permutator_block_forward_pallas.14} parent=0 // loop_footer
    %s12 = sadd.s32 1, %s8
  $region7: #{permutator_block_forward_pallas.14} parent=0 // loop_footer_branch
    %7 = sbr.rel target = $region3
  $region8: #{permutator_block_forward_pallas.14} parent=0 // loop_exit
    _

// kernel: permutator_block_forward_pallas.18
$region0: #{permutator_block_forward_pallas.18}
  #allocation0 [shape = 'u32[]', space=smem, size = 0x4, offset = 0x4, fixed_abs, tag = 'smem constant byte address 0x4 - core index']
  #allocation1 [shape = 'u32[72,128]{1,0:T(1,128)}', space=vmem, size = 0x9000, scoped, tag = 'internal scratch']
  %s0 = inlined_call_operand.vmem [shape: bf16[2,32,16], index: 0, kind: input, shape index: {}]
  %s1 = inlined_call_operand.vmem [shape: bf16[2,32,16], index: 1, kind: input, shape index: {}]
  %s2 = inlined_call_operand.vmem [shape: bf16[2,32,16], index: 2, kind: input, shape index: {}]
  %s3 = inlined_call_operand.vmem [shape: f32[2,3,16], index: 3, kind: input, shape index: {}]
  %s4 = inlined_call_operand.vmem [shape: f32[2,32,16], index: 4, kind: input, shape index: {}]
  %s5 = inlined_call_operand.vmem [shape: bf16[16,16], index: 5, kind: input, shape index: {}]
  %s6 = inlined_call_operand.vmem [shape: f32[1,16], index: 6, kind: input, shape index: {}]
  %s7 = inlined_call_operand.vmem [shape: f32[2,32,16], index: 7, kind: output, shape index: {}]
  %s8 = sld [smem:[#allocation0]]
  $region61: #{permutator_block_forward_pallas.18} parent=0
    _
  %s10 = ssub.s32 1, %s8
  %s11 = scalar_select 0, %s10, %s8
  loop: start=0, step=1, limit=6
  $region2: #{permutator_block_forward_pallas.18} parent=0 // loop_pre_header
    _
  $region3: #{permutator_block_forward_pallas.18} parent=0 // loop_header
    %s13 = sphi 0, %s17
    %p14 = scmp.ge.s32.totalorder %s13, 6
    %s20 = sphi 0, %s32
    %s21 = sphi 0, %s28
    %s22 = sphi 0, %s20
    %s23 = sphi 0, %s21
    %s24 = sphi 0, %s22
    %s25 = sphi 0, %s23
    %s37 = sphi 0, %s39
    %s40 = sphi 0, %s37
    %s41 = sphi 0, %s40
    %s57 = sphi 0, %s41
    %s65 = sphi 0, %s67
    %s68 = sphi 0, %s65
    %s69 = sphi 0, %s68
    %s85 = sphi 0, %s69
    %s93 = sphi 0, %s95
    %s96 = sphi 0, %s93
    %s97 = sphi 0, %s96
    %s113 = sphi 0, %s97
    %s119 = sphi 0, %s121
    %s122 = sphi 0, %s119
    %s123 = sphi 0, %s122
    %s139 = sphi 0, %s123
    %s147 = sphi 0, %s149
    %s150 = sphi 0, %s147
    %s151 = sphi 0, %s150
    %s167 = sphi 0, %s151
    %s171 = sphi 0, %s171
    %s173 = sphi 0, %s171
    %s174 = sphi 0, %s173
    %s188 = sphi 0, %s174
    %s192 = sphi 0, %s192
    %s194 = sphi 0, %s192
    %s195 = sphi 0, %s194
    %s209 = sphi 0, %s195
    %s217 = sphi 0, %s219
    %s220 = sphi 0, %s217
    %s221 = sphi 0, %s220
    %s237 = sphi 0, %s221
  $region4: #{permutator_block_forward_pallas.18} parent=0 // loop_header_branch
    %16 = sbr.rel (%p14) target = $region8
  $region5: #{permutator_block_forward_pallas.18} parent=0 // loop_body
    %s18 = ssub.s32 %s13, 1
    %s19 = ssub.s32 %s13, 2
    %s26 = sadd.s32 1, %s21
    %p27 = scmp.ge.s32.totalorder %s26, 2
    %s28 = scalar_select %p27, 0, %s26
    %s29 = sadd.s32 1, %s20
    %s30 = scalar_select %p27, %s29, %s20
    %p31 = scmp.ge.s32.totalorder %s30, 2
    %s32 = scalar_select %p31, 0, %s30
    %s33 = ssub.s32 %s20, %s32
    %s34 = ssub.s32 %s21, %s28
    %s35 = sor.u32 %s33, %s34
    %p36 = scmp.eq.s32.totalorder %s35, 0
    %s38 = sadd.s32 %s37, 1
    %s39 = scalar_select %p36, %s37, %s38
    %p42 = pneg %p36
    %p43 = scmp.eq.s32.totalorder %s13, 3
    %p44 = por %p42, %p43
    %p45 = scmp.ne.s32.totalorder %s37, %s40
    %p46 = scmp.eq.s32.totalorder %s13, 0
    %p47 = por %p45, %p46
    %p48 = scmp.ne.s32.totalorder %s37, %s40
    %p49 = scmp.eq.s32.totalorder %s18, 3
    %p50 = por %p48, %p49
    %p51 = scmp.ne.s32.totalorder %s40, %s41
    %p52 = scmp.eq.s32.totalorder %s18, 0
    %p53 = por %p51, %p52
    %p54 = scmp.ne.s32.totalorder %s40, %s41
    %p55 = scmp.eq.s32.totalorder %s19, 3
    %p56 = por %p54, %p55
    %p58 = scmp.ne.s32.totalorder %s41, %s57
    %p59 = scmp.eq.s32.totalorder %s19, 0
    %p60 = por %p58, %p59
    %s61 = ssub.s32 %s20, %s32
    %s62 = ssub.s32 %s21, %s28
    %s63 = sor.u32 %s61, %s62
    %p64 = scmp.eq.s32.totalorder %s63, 0
    %s66 = sadd.s32 %s65, 1
    %s67 = scalar_select %p64, %s65, %s66
    %p70 = pneg %p64
    %p71 = scmp.eq.s32.totalorder %s13, 3
    %p72 = por %p70, %p71
    %p73 = scmp.ne.s32.totalorder %s65, %s68
    %p74 = scmp.eq.s32.totalorder %s13, 0
    %p75 = por %p73, %p74
    %p76 = scmp.ne.s32.totalorder %s65, %s68
    %p77 = scmp.eq.s32.totalorder %s18, 3
    %p78 = por %p76, %p77
    %p79 = scmp.ne.s32.totalorder %s68, %s69
    %p80 = scmp.eq.s32.totalorder %s18, 0
    %p81 = por %p79, %p80
    %p82 = scmp.ne.s32.totalorder %s68, %s69
    %p83 = scmp.eq.s32.totalorder %s19, 3
    %p84 = por %p82, %p83
    %p86 = scmp.ne.s32.totalorder %s69, %s85
    %p87 = scmp.eq.s32.totalorder %s19, 0
    %p88 = por %p86, %p87
    %s89 = ssub.s32 %s20, %s32
    %s90 = ssub.s32 %s21, %s28
    %s91 = sor.u32 %s89, %s90
    %p92 = scmp.eq.s32.totalorder %s91, 0
    %s94 = sadd.s32 %s93, 1
    %s95 = scalar_select %p92, %s93, %s94
    %p98 = pneg %p92
    %p99 = scmp.eq.s32.totalorder %s13, 3
    %p100 = por %p98, %p99
    %p101 = scmp.ne.s32.totalorder %s93, %s96
    %p102 = scmp.eq.s32.totalorder %s13, 0
    %p103 = por %p101, %p102
    %p104 = scmp.ne.s32.totalorder %s93, %s96
    %p105 = scmp.eq.s32.totalorder %s18, 3
    %p106 = por %p104, %p105
    %p107 = scmp.ne.s32.totalorder %s96, %s97
    %p108 = scmp.eq.s32.totalorder %s18, 0
    %p109 = por %p107, %p108
    %p110 = scmp.ne.s32.totalorder %s96, %s97
    %p111 = scmp.eq.s32.totalorder %s19, 3
    %p112 = por %p110, %p111
    %p114 = scmp.ne.s32.totalorder %s97, %s113
    %p115 = scmp.eq.s32.totalorder %s19, 0
    %p116 = por %p114, %p115
    %s117 = ssub.s32 %s20, %s32
    %p118 = scmp.eq.s32.totalorder %s117, 0
    %s120 = sadd.s32 %s119, 1
    %s121 = scalar_select %p118, %s119, %s120
    %p124 = pneg %p118
    %p125 = scmp.eq.s32.totalorder %s13, 3
    %p126 = por %p124, %p125
    %p127 = scmp.ne.s32.totalorder %s119, %s122
    %p128 = scmp.eq.s32.totalorder %s13, 0
    %p129 = por %p127, %p128
    %p130 = scmp.ne.s32.totalorder %s119, %s122
    %p131 = scmp.eq.s32.totalorder %s18, 3
    %p132 = por %p130, %p131
    %p133 = scmp.ne.s32.totalorder %s122, %s123
    %p134 = scmp.eq.s32.totalorder %s18, 0
    %p135 = por %p133, %p134
    %p136 = scmp.ne.s32.totalorder %s122, %s123
    %p137 = scmp.eq.s32.totalorder %s19, 3
    %p138 = por %p136, %p137
    %p140 = scmp.ne.s32.totalorder %s123, %s139
    %p141 = scmp.eq.s32.totalorder %s19, 0
    %p142 = por %p140, %p141
    %s143 = ssub.s32 %s20, %s32
    %s144 = ssub.s32 %s21, %s28
    %s145 = sor.u32 %s143, %s144
    %p146 = scmp.eq.s32.totalorder %s145, 0
    %s148 = sadd.s32 %s147, 1
    %s149 = scalar_select %p146, %s147, %s148
    %p152 = pneg %p146
    %p153 = scmp.eq.s32.totalorder %s13, 3
    %p154 = por %p152, %p153
    %p155 = scmp.ne.s32.totalorder %s147, %s150
    %p156 = scmp.eq.s32.totalorder %s13, 0
    %p157 = por %p155, %p156
    %p158 = scmp.ne.s32.totalorder %s147, %s150
    %p159 = scmp.eq.s32.totalorder %s18, 3
    %p160 = por %p158, %p159
    %p161 = scmp.ne.s32.totalorder %s150, %s151
    %p162 = scmp.eq.s32.totalorder %s18, 0
    %p163 = por %p161, %p162
    %p164 = scmp.ne.s32.totalorder %s150, %s151
    %p165 = scmp.eq.s32.totalorder %s19, 3
    %p166 = por %p164, %p165
    %p168 = scmp.ne.s32.totalorder %s151, %s167
    %p169 = scmp.eq.s32.totalorder %s19, 0
    %p170 = por %p168, %p169
    %s172 = sadd.s32 %s171, 1
    %p175 = scmp.eq.s32.totalorder %s13, 3
    %p176 = scmp.ne.s32.totalorder %s171, %s173
    %p177 = scmp.eq.s32.totalorder %s13, 0
    %p178 = por %p176, %p177
    %p179 = scmp.ne.s32.totalorder %s171, %s173
    %p180 = scmp.eq.s32.totalorder %s18, 3
    %p181 = por %p179, %p180
    %p182 = scmp.ne.s32.totalorder %s173, %s174
    %p183 = scmp.eq.s32.totalorder %s18, 0
    %p184 = por %p182, %p183
    %p185 = scmp.ne.s32.totalorder %s173, %s174
    %p186 = scmp.eq.s32.totalorder %s19, 3
    %p187 = por %p185, %p186
    %p189 = scmp.ne.s32.totalorder %s174, %s188
    %p190 = scmp.eq.s32.totalorder %s19, 0
    %p191 = por %p189, %p190
    %s193 = sadd.s32 %s192, 1
    %p196 = scmp.eq.s32.totalorder %s13, 3
    %p197 = scmp.ne.s32.totalorder %s192, %s194
    %p198 = scmp.eq.s32.totalorder %s13, 0
    %p199 = por %p197, %p198
    %p200 = scmp.ne.s32.totalorder %s192, %s194
    %p201 = scmp.eq.s32.totalorder %s18, 3
    %p202 = por %p200, %p201
    %p203 = scmp.ne.s32.totalorder %s194, %s195
    %p204 = scmp.eq.s32.totalorder %s18, 0
    %p205 = por %p203, %p204
    %p206 = scmp.ne.s32.totalorder %s194, %s195
    %p207 = scmp.eq.s32.totalorder %s19, 3
    %p208 = por %p206, %p207
    %p210 = scmp.ne.s32.totalorder %s195, %s209
    %p211 = scmp.eq.s32.totalorder %s19, 0
    %p212 = por %p210, %p211
    %s213 = ssub.s32 %s20, %s32
    %s214 = ssub.s32 %s21, %s28
    %s215 = sor.u32 %s213, %s214
    %p216 = scmp.eq.s32.totalorder %s215, 0
    %s218 = sadd.s32 %s217, 1
    %s219 = scalar_select %p216, %s217, %s218
    %p222 = pneg %p216
    %p223 = scmp.eq.s32.totalorder %s13, 3
    %p224 = por %p222, %p223
    %p225 = scmp.ne.s32.totalorder %s217, %s220
    %p226 = scmp.eq.s32.totalorder %s13, 0
    %p227 = por %p225, %p226
    %p228 = scmp.ne.s32.totalorder %s217, %s220
    %p229 = scmp.eq.s32.totalorder %s18, 3
    %p230 = por %p228, %p229
    %p231 = scmp.ne.s32.totalorder %s220, %s221
    %p232 = scmp.eq.s32.totalorder %s18, 0
    %p233 = por %p231, %p232
    %p234 = scmp.ne.s32.totalorder %s220, %s221
    %p235 = scmp.eq.s32.totalorder %s19, 3
    %p236 = por %p234, %p235
    %p238 = scmp.ne.s32.totalorder %s221, %s237
    %p239 = scmp.eq.s32.totalorder %s19, 0
    %p240 = por %p238, %p239
    %p241 = scmp.le.s32.totalorder 1, %s13
    %p242 = scmp.lt.s32.totalorder %s13, 5
    %p243 = pnand %p241, %p242
    %p244 = pneg %p243
    // Predicated region
    $region9: #{permutator_block_forward_pallas.18} parent=5 // pred_check
      _
    $region10: #{permutator_block_forward_pallas.18} parent=5 // pred_check_branch
      %246 = sbr.rel (%p243) target = $region12
    $region11: #{permutator_block_forward_pallas.18} parent=5 // pred_region
      %s247 = ssub.s32 %s13, 1
      // Predicated region
      $region13: #{permutator_block_forward_pallas.18} parent=11 // pred_check
        %p248 = pneg %p184
      $region14: #{permutator_block_forward_pallas.18} parent=11 // pred_check_branch
        %250 = sbr.rel (%p248) target = $region16
      $region15: #{permutator_block_forward_pallas.18} parent=11 // pred_region
        _
      $region16: #{permutator_block_forward_pallas.18} parent=11 // pred_fallthru
        _
      // Predicated region
      $region17: #{permutator_block_forward_pallas.18} parent=11 // pred_check
        %p251 = pneg %p205
      $region18: #{permutator_block_forward_pallas.18} parent=11 // pred_check_branch
        %253 = sbr.rel (%p251) target = $region20
      $region19: #{permutator_block_forward_pallas.18} parent=11 // pred_region
        _
      $region20: #{permutator_block_forward_pallas.18} parent=11 // pred_fallthru
        _
    $region12: #{permutator_block_forward_pallas.18} parent=5 // pred_fallthru
      _
    %p254 = scmp.lt.s32.totalorder %s13, 4
    // Predicated region
    $region21: #{permutator_block_forward_pallas.18} parent=5 // pred_check
      %p255 = pneg %p254
    $region22: #{permutator_block_forward_pallas.18} parent=5 // pred_check_branch
      %257 = sbr.rel (%p255) target = $region24
    $region23: #{permutator_block_forward_pallas.18} parent=5 // pred_region
      // Predicated region
      $region25: #{permutator_block_forward_pallas.18} parent=23 // pred_check
        %p258 = pneg %p47
      $region26: #{permutator_block_forward_pallas.18} parent=23 // pred_check_branch
        %260 = sbr.rel (%p258) target = $region28
      $region27: #{permutator_block_forward_pallas.18} parent=23 // pred_region
        %s261 = smul.u32 2, %s21
        %p262 = scmp.lt.s32.totalorder %s20, 1
        %s263 = scalar_select %p262, %s20, 1
        %p264 = scmp.lt.s32.totalorder %s261, 3
        %s265 = scalar_select %p264, %s261, 3
        %s266 = smul.addr %s263, 4
        %s267 = sadd.s32 %s265, %s266
        %s268 = smul.addr %s267, 4
        %s269 = scalar_lea.vmem %s0, %s268
        %s270 = smul.u32 2, %s21
      $region28: #{permutator_block_forward_pallas.18} parent=23 // pred_fallthru
        _
      // Predicated region
      $region29: #{permutator_block_forward_pallas.18} parent=23 // pred_check
        %p271 = pneg %p75
      $region30: #{permutator_block_forward_pallas.18} parent=23 // pred_check_branch
        %273 = sbr.rel (%p271) target = $region32
      $region31: #{permutator_block_forward_pallas.18} parent=23 // pred_region
        %s274 = smul.u32 2, %s21
        %p275 = scmp.lt.s32.totalorder %s20, 1
        %s276 = scalar_select %p275, %s20, 1
        %p277 = scmp.lt.s32.totalorder %s274, 3
        %s278 = scalar_select %p277, %s274, 3
        %s279 = smul.addr %s276, 4
        %s280 = sadd.s32 %s278, %s279
        %s281 = smul.addr %s280, 4
        %s282 = scalar_lea.vmem %s1, %s281
        %s283 = smul.u32 2, %s21
      $region32: #{permutator_block_forward_pallas.18} parent=23 // pred_fallthru
        _
      // Predicated region
      $region33: #{permutator_block_forward_pallas.18} parent=23 // pred_check
        %p284 = pneg %p103
      $region34: #{permutator_block_forward_pallas.18} parent=23 // pred_check_branch
        %286 = sbr.rel (%p284) target = $region36
      $region35: #{permutator_block_forward_pallas.18} parent=23 // pred_region
        %s287 = smul.u32 2, %s21
        %p288 = scmp.lt.s32.totalorder %s20, 1
        %s289 = scalar_select %p288, %s20, 1
        %p290 = scmp.lt.s32.totalorder %s287, 3
        %s291 = scalar_select %p290, %s287, 3
        %s292 = smul.addr %s289, 4
        %s293 = sadd.s32 %s291, %s292
        %s294 = smul.addr %s293, 4
        %s295 = scalar_lea.vmem %s2, %s294
        %s296 = smul.u32 2, %s21
      $region36: #{permutator_block_forward_pallas.18} parent=23 // pred_fallthru
        _
      // Predicated region
      $region37: #{permutator_block_forward_pallas.18} parent=23 // pred_check
        %p297 = pneg %p129
      $region38: #{permutator_block_forward_pallas.18} parent=23 // pred_check_branch
        %299 = sbr.rel (%p297) target = $region40
      $region39: #{permutator_block_forward_pallas.18} parent=23 // pred_region
        %p300 = scmp.lt.s32.totalorder %s20, 1
        %s301 = scalar_select %p300, %s20, 1
        %s302 = smul.addr %s301, 4
        %s303 = scalar_lea.vmem %s3, %s302
      $region40: #{permutator_block_forward_pallas.18} parent=23 // pred_fallthru
        _
      // Predicated region
      $region41: #{permutator_block_forward_pallas.18} parent=23 // pred_check
        %p304 = pneg %p157
      $region42: #{permutator_block_forward_pallas.18} parent=23 // pred_check_branch
        %306 = sbr.rel (%p304) target = $region44
      $region43: #{permutator_block_forward_pallas.18} parent=23 // pred_region
        %s307 = smul.u32 2, %s21
        %p308 = scmp.lt.s32.totalorder %s20, 1
        %s309 = scalar_select %p308, %s20, 1
        %p310 = scmp.lt.s32.totalorder %s307, 3
        %s311 = scalar_select %p310, %s307, 3
        %s312 = smul.addr %s309, 4
        %s313 = sadd.s32 %s311, %s312
        %s314 = smul.addr %s313, 8
        %s315 = scalar_lea.vmem %s4, %s314
        %s316 = smul.u32 2, %s21
      $region44: #{permutator_block_forward_pallas.18} parent=23 // pred_fallthru
        _
    $region24: #{permutator_block_forward_pallas.18} parent=5 // pred_fallthru
      _
    %p317 = scmp.le.s32.totalorder 1, %s13
    %p318 = scmp.lt.s32.totalorder %s13, 5
    %p319 = pnand %p317, %p318
    %p320 = pneg %p319
    // Predicated region
    $region45: #{permutator_block_forward_pallas.18} parent=5 // pred_check
      _
    $region46: #{permutator_block_forward_pallas.18} parent=5 // pred_check_branch
      %322 = sbr.rel (%p319) target = $region48
    $region47: #{permutator_block_forward_pallas.18} parent=5 // pred_region
      %s323 = ssub.s32 %s13, 1
      %s324 = smul.u32 2, %s23
      %p325 = scmp.lt.s32.totalorder %s22, 1
      %s326 = scalar_select %p325, %s22, 1
      %p327 = scmp.lt.s32.totalorder %s324, 3
      %s328 = scalar_select %p327, %s324, 3
      %s329 = smul.addr %s326, 4
      %s330 = sadd.s32 %s328, %s329
      %s331 = smul.addr %s330, 4
      %s332 = scalar_lea.vmem %s0, %s331
      %p333 = pneg %p53
      %p334 = pneg %p50
      %s335 = smul.u32 2, %s23
      %p336 = scmp.lt.s32.totalorder %s22, 1
      %s337 = scalar_select %p336, %s22, 1
      %p338 = scmp.lt.s32.totalorder %s335, 3
      %s339 = scalar_select %p338, %s335, 3
      %s340 = smul.addr %s337, 4
      %s341 = sadd.s32 %s339, %s340
      %s342 = smul.addr %s341, 4
      %s343 = scalar_lea.vmem %s1, %s342
      %p344 = pneg %p81
      %p345 = pneg %p78
      %s346 = smul.u32 2, %s23
      %p347 = scmp.lt.s32.totalorder %s22, 1
      %s348 = scalar_select %p347, %s22, 1
      %p349 = scmp.lt.s32.totalorder %s346, 3
      %s350 = scalar_select %p349, %s346, 3
      %s351 = smul.addr %s348, 4
      %s352 = sadd.s32 %s350, %s351
      %s353 = smul.addr %s352, 4
      %s354 = scalar_lea.vmem %s2, %s353
      %p355 = pneg %p109
      %p356 = pneg %p106
      %p357 = scmp.lt.s32.totalorder %s22, 1
      %s358 = scalar_select %p357, %s22, 1
      %s359 = smul.addr %s358, 4
      %s360 = scalar_lea.vmem %s3, %s359
      %p361 = pneg %p135
      %p362 = pneg %p132
      %s363 = smul.u32 2, %s23
      %p364 = scmp.lt.s32.totalorder %s22, 1
      %s365 = scalar_select %p364, %s22, 1
      %p366 = scmp.lt.s32.totalorder %s363, 3
      %s367 = scalar_select %p366, %s363, 3
      %s368 = smul.addr %s365, 4
      %s369 = sadd.s32 %s367, %s368
      %s370 = smul.addr %s369, 8
      %s371 = scalar_lea.vmem %s4, %s370
      %p372 = pneg %p163
      %p373 = pneg %p160
      %p374 = pneg %p184
      %p375 = pneg %p181
      %p376 = pneg %p205
      %p377 = pneg %p202
      %p378 = pneg %p233
      %p379 = pneg %p230
      %s380 = smul.u32 2, %s23
      %p381 = scmp.lt.s32.totalorder %s22, 1
      %s382 = scalar_select %p381, %s22, 1
      %p383 = scmp.lt.s32.totalorder %s380, 3
      %s384 = scalar_select %p383, %s380, 3
      %s385 = smul.addr %s382, 4
      %s386 = sadd.s32 %s384, %s385
      %s387 = smul.addr %s386, 8
      %s388 = scalar_lea.vmem %s7, %s387
      %s389 = smul.u32 2, %s23
      %p390 = scmp.lt.s32.totalorder %s22, 1
      %s391 = scalar_select %p390, %s22, 1
      %p392 = scmp.lt.s32.totalorder %s389, 3
      %s393 = scalar_select %p392, %s389, 3
      %s394 = smul.addr %s391, 4
      %s395 = sadd.s32 %s393, %s394
      %s396 = smul.addr %s395, 4
      %s397 = scalar_lea.vmem %s0, %s396
      %s398 = smul.u32 2, %s23
      %s399 = smul.u32 2, %s23
      %p400 = scmp.lt.s32.totalorder %s22, 1
      %s401 = scalar_select %p400, %s22, 1
      %p402 = scmp.lt.s32.totalorder %s399, 3
      %s403 = scalar_select %p402, %s399, 3
      %s404 = smul.addr %s401, 4
      %s405 = sadd.s32 %s403, %s404
      %s406 = smul.addr %s405, 4
      %s407 = scalar_lea.vmem %s1, %s406
      %s408 = smul.u32 2, %s23
      %s409 = smul.u32 2, %s23
      %p410 = scmp.lt.s32.totalorder %s22, 1
      %s411 = scalar_select %p410, %s22, 1
      %p412 = scmp.lt.s32.totalorder %s409, 3
      %s413 = scalar_select %p412, %s409, 3
      %s414 = smul.addr %s411, 4
      %s415 = sadd.s32 %s413, %s414
      %s416 = smul.addr %s415, 4
      %s417 = scalar_lea.vmem %s2, %s416
      %s418 = smul.u32 2, %s23
      %p419 = scmp.lt.s32.totalorder %s22, 1
      %s420 = scalar_select %p419, %s22, 1
      %s421 = smul.addr %s420, 4
      %s422 = scalar_lea.vmem %s3, %s421
      %s423 = smul.u32 2, %s23
      %p424 = scmp.lt.s32.totalorder %s22, 1
      %s425 = scalar_select %p424, %s22, 1
      %p426 = scmp.lt.s32.totalorder %s423, 3
      %s427 = scalar_select %p426, %s423, 3
      %s428 = smul.addr %s425, 4
      %s429 = sadd.s32 %s427, %s428
      %s430 = smul.addr %s429, 8
      %s431 = scalar_lea.vmem %s4, %s430
      %s432 = smul.u32 2, %s23
      %s433 = smul.u32 2, %s23
      %p434 = scmp.lt.s32.totalorder %s22, 1
      %s435 = scalar_select %p434, %s22, 1
      %p436 = scmp.lt.s32.totalorder %s433, 3
      %s437 = scalar_select %p436, %s433, 3
      %s438 = smul.addr %s435, 4
      %s439 = sadd.s32 %s437, %s438
      %s440 = smul.addr %s439, 8
      %s441 = scalar_lea.vmem %s7, %s440
      %s442 = smul.u32 2, %s23
      %v444 = vld [vmem:[%s422] sm:$0x7]
      %v445 = vld [vmem:[%s397] sm:$0xf]
      %v446 = vld [vmem:[%s397 + $0x4] sm:$0xf]
      %v447 = vunpack.c.l.bf16 %v445
      %v448 = vunpack.c.l.bf16 %v446
      %v449 = vperm.slane %v444, 0
      %v450 = vmul.f32 %v447, %v449
      %v451 = vmul.f32 %v448, %v449
      %v452 = vld [vmem:[%s407] sm:$0xf]
      %v453 = vld [vmem:[%s407 + $0x4] sm:$0xf]
      %v454 = vunpack.c.l.bf16 %v452
      %v455 = vunpack.c.l.bf16 %v453
      %v456 = vperm.slane %v444, 1
      %v457 = vmul.f32 %v454, %v456
      %v458 = vmul.f32 %v455, %v456
      %v459 = vadd.f32 %v450, %v457
      %v460 = vadd.f32 %v451, %v458
      %v461 = vld [vmem:[%s417] sm:$0xf]
      %v462 = vld [vmem:[%s417 + $0x4] sm:$0xf]
      %v463 = vunpack.c.l.bf16 %v461
      %v464 = vunpack.c.l.bf16 %v462
      %v465 = vperm.slane %v444, 2
      %v466 = vmul.f32 %v463, %v465
      %v467 = vmul.f32 %v464, %v465
      %v468 = vadd.f32 %v459, %v466
      %v469 = vadd.f32 %v460, %v467
      %v470 = vpack.c.bf16 %v469, %v468
      %v471 = vld [vmem:[%s5] sm:$0xf]
      %v472 = vld [vmem:[%s5 + $0x4] sm:$0xf]
      %v473 = vld [vmem:[%s6] sm:$0x1]
      %v475 = vperm.slane %v473, 0
      %v479 = vunpack.c.l.b16 %v471
      %v480 = vunpack.c.l.b16 %v472
      %v481 = vpack.c.b16 %v480, %v479
      %vm483 = vcmask 130048
      %v485 = vsel %vm483, %v470, 0
      %487 = vmatpush.bf16.msra.mxu0 0
      %488 = vmatpush.bf16.msra.mxu0 0
      %489 = vmatpush.bf16.msra.mxu0 0
      %490 = vmatpush.bf16.msra.mxu0 0
      %491 = vmatpush.bf16.msra.mxu0 0
      %492 = vmatpush.bf16.msra.mxu0 0
      %493 = vmatpush.bf16.msra.mxu0 0
      %494 = vmatpush.bf16.msra.mxu0 %v481
      %495 = vmatmul.bf16.gmra.mxu0 %v485
      %v496 = vpop.f32.mrf.mxu0
      %v497 = vadd.f32 %v475, %v496
      %v498 = vpop.f32.mrf.mxu0
      %v499 = vadd.f32 %v475, %v498
      %500 = vdwg.mxu0
      %v501 = vld [vmem:[%s431] sm:$0xff]
      %v502 = vld [vmem:[%s431 + $0x8] sm:$0xff]
      %v503 = vadd.f32 %v501, %v497
      %v504 = vadd.f32 %v502, %v499
      %505 = vst.msk [vmem:[%s441] sm:$0xff] %vm483, %v503
      %506 = vst.msk [vmem:[%s441 + $0x8] sm:$0xff] %vm483, %v504
      %s507 = smul.u32 2, %s23
      %p508 = scmp.lt.s32.totalorder %s22, 1
      %s509 = scalar_select %p508, %s22, 1
      %p510 = scmp.lt.s32.totalorder %s507, 3
      %s511 = scalar_select %p510, %s507, 3
      %s512 = smul.addr %s509, 4
      %s513 = sadd.s32 %s511, %s512
      %s514 = smul.addr %s513, 8
      %s515 = scalar_lea.vmem %s7, %s514
      // Predicated region
      $region49: #{permutator_block_forward_pallas.18} parent=47 // pred_check
        %p516 = pneg %p230
      $region50: #{permutator_block_forward_pallas.18} parent=47 // pred_check_branch
        %518 = sbr.rel (%p516) target = $region52
      $region51: #{permutator_block_forward_pallas.18} parent=47 // pred_region
        %s519 = smul.u32 2, %s23
      $region52: #{permutator_block_forward_pallas.18} parent=47 // pred_fallthru
        _
    $region48: #{permutator_block_forward_pallas.18} parent=5 // pred_fallthru
      _
    %p520 = scmp.le.s32.totalorder 2, %s13
    // Predicated region
    $region53: #{permutator_block_forward_pallas.18} parent=5 // pred_check
      %p521 = pneg %p520
    $region54: #{permutator_block_forward_pallas.18} parent=5 // pred_check_branch
      %523 = sbr.rel (%p521) target = $region56
    $region55: #{permutator_block_forward_pallas.18} parent=5 // pred_region
      %s524 = ssub.s32 %s13, 2
      // Predicated region
      $region57: #{permutator_block_forward_pallas.18} parent=55 // pred_check
        %p525 = pneg %p236
      $region58: #{permutator_block_forward_pallas.18} parent=55 // pred_check_branch
        %527 = sbr.rel (%p525) target = $region60
      $region59: #{permutator_block_forward_pallas.18} parent=55 // pred_region
        %s528 = smul.u32 2, %s25
        %p529 = scmp.lt.s32.totalorder %s24, 1
        %s530 = scalar_select %p529, %s24, 1
        %p531 = scmp.lt.s32.totalorder %s528, 3
        %s532 = scalar_select %p531, %s528, 3
        %s533 = smul.addr %s530, 4
        %s534 = sadd.s32 %s532, %s533
        %s535 = smul.addr %s534, 8
        %s536 = scalar_lea.vmem %s7, %s535
      $region60: #{permutator_block_forward_pallas.18} parent=55 // pred_fallthru
        _
    $region56: #{permutator_block_forward_pallas.18} parent=5 // pred_fallthru
      _
  $region6: #{permutator_block_forward_pallas.18} parent=0 // loop_footer
    %s17 = sadd.s32 1, %s13
  $region7: #{permutator_block_forward_pallas.18} parent=0 // loop_footer_branch
    %12 = sbr.rel target = $region3
  $region8: #{permutator_block_forward_pallas.18} parent=0 // loop_exit
    _

// kernel: permutator_block_forward_pallas.17
$region0: #{permutator_block_forward_pallas.17}
  #allocation0 [shape = 'u32[]', space=smem, size = 0x4, offset = 0x4, fixed_abs, tag = 'smem constant byte address 0x4 - core index']
  #allocation1 [shape = 'u32[72,128]{1,0:T(1,128)}', space=vmem, size = 0x9000, scoped, tag = 'internal scratch']
  #allocation2 [shape = 'f32[1,16]{1,0:T(1,128)}', space=vmem, size = 0x200, scoped, tag = 'scratch operand']
  %s0 = inlined_call_operand.vmem [shape: bf16[2,32,16], index: 0, kind: input, shape index: {}]
  %s1 = inlined_call_operand.vmem [shape: bf16[2,32,16], index: 1, kind: input, shape index: {}]
  %s2 = inlined_call_operand.vmem [shape: bf16[2,32,16], index: 2, kind: input, shape index: {}]
  %s3 = inlined_call_operand.vmem [shape: bf16[16,4], index: 3, kind: input, shape index: {}]
  %s4 = inlined_call_operand.vmem [shape: f32[1,4], index: 4, kind: input, shape index: {}]
  %s5 = inlined_call_operand.vmem [shape: bf16[4,48], index: 5, kind: input, shape index: {}]
  %s6 = inlined_call_operand.vmem [shape: f32[1,48], index: 6, kind: input, shape index: {}]
  %s7 = inlined_call_operand.vmem [shape: f32[2,3,16], index: 7, kind: output, shape index: {}]
  %s8 = sld [smem:[#allocation0]]
  $region69: #{permutator_block_forward_pallas.17} parent=0
    _
  %s10 = ssub.s32 1, %s8
  %s11 = scalar_select 0, %s10, %s8
  loop: start=0, step=1, limit=6
  $region2: #{permutator_block_forward_pallas.17} parent=0 // loop_pre_header
    _
  $region3: #{permutator_block_forward_pallas.17} parent=0 // loop_header
    %s13 = sphi 0, %s17
    %p14 = scmp.ge.s32.totalorder %s13, 6
    %s20 = sphi 0, %s32
    %s21 = sphi 0, %s28
    %s22 = sphi 0, %s20
    %s23 = sphi 0, %s21
    %s24 = sphi 0, %s22
    %s25 = sphi 0, %s23
    %s37 = sphi 0, %s39
    %s40 = sphi 0, %s37
    %s41 = sphi 0, %s40
    %s57 = sphi 0, %s41
    %s65 = sphi 0, %s67
    %s68 = sphi 0, %s65
    %s69 = sphi 0, %s68
    %s85 = sphi 0, %s69
    %s93 = sphi 0, %s95
    %s96 = sphi 0, %s93
    %s97 = sphi 0, %s96
    %s113 = sphi 0, %s97
    %s117 = sphi 0, %s117
    %s119 = sphi 0, %s117
    %s120 = sphi 0, %s119
    %s134 = sphi 0, %s120
    %s138 = sphi 0, %s138
    %s140 = sphi 0, %s138
    %s141 = sphi 0, %s140
    %s155 = sphi 0, %s141
    %s159 = sphi 0, %s159
    %s161 = sphi 0, %s159
    %s162 = sphi 0, %s161
    %s176 = sphi 0, %s162
    %s180 = sphi 0, %s180
    %s182 = sphi 0, %s180
    %s183 = sphi 0, %s182
    %s197 = sphi 0, %s183
    %s203 = sphi 0, %s205
    %s206 = sphi 0, %s203
    %s207 = sphi 0, %s206
    %s223 = sphi 0, %s207
  $region4: #{permutator_block_forward_pallas.17} parent=0 // loop_header_branch
    %16 = sbr.rel (%p14) target = $region8
  $region5: #{permutator_block_forward_pallas.17} parent=0 // loop_body
    %s18 = ssub.s32 %s13, 1
    %s19 = ssub.s32 %s13, 2
    %s26 = sadd.s32 1, %s21
    %p27 = scmp.ge.s32.totalorder %s26, 2
    %s28 = scalar_select %p27, 0, %s26
    %s29 = sadd.s32 1, %s20
    %s30 = scalar_select %p27, %s29, %s20
    %p31 = scmp.ge.s32.totalorder %s30, 2
    %s32 = scalar_select %p31, 0, %s30
    %s33 = ssub.s32 %s20, %s32
    %s34 = ssub.s32 %s21, %s28
    %s35 = sor.u32 %s33, %s34
    %p36 = scmp.eq.s32.totalorder %s35, 0
    %s38 = sadd.s32 %s37, 1
    %s39 = scalar_select %p36, %s37, %s38
    %p42 = pneg %p36
    %p43 = scmp.eq.s32.totalorder %s13, 3
    %p44 = por %p42, %p43
    %p45 = scmp.ne.s32.totalorder %s37, %s40
    %p46 = scmp.eq.s32.totalorder %s13, 0
    %p47 = por %p45, %p46
    %p48 = scmp.ne.s32.totalorder %s37, %s40
    %p49 = scmp.eq.s32.totalorder %s18, 3
    %p50 = por %p48, %p49
    %p51 = scmp.ne.s32.totalorder %s40, %s41
    %p52 = scmp.eq.s32.totalorder %s18, 0
    %p53 = por %p51, %p52
    %p54 = scmp.ne.s32.totalorder %s40, %s41
    %p55 = scmp.eq.s32.totalorder %s19, 3
    %p56 = por %p54, %p55
    %p58 = scmp.ne.s32.totalorder %s41, %s57
    %p59 = scmp.eq.s32.totalorder %s19, 0
    %p60 = por %p58, %p59
    %s61 = ssub.s32 %s20, %s32
    %s62 = ssub.s32 %s21, %s28
    %s63 = sor.u32 %s61, %s62
    %p64 = scmp.eq.s32.totalorder %s63, 0
    %s66 = sadd.s32 %s65, 1
    %s67 = scalar_select %p64, %s65, %s66
    %p70 = pneg %p64
    %p71 = scmp.eq.s32.totalorder %s13, 3
    %p72 = por %p70, %p71
    %p73 = scmp.ne.s32.totalorder %s65, %s68
    %p74 = scmp.eq.s32.totalorder %s13, 0
    %p75 = por %p73, %p74
    %p76 = scmp.ne.s32.totalorder %s65, %s68
    %p77 = scmp.eq.s32.totalorder %s18, 3
    %p78 = por %p76, %p77
    %p79 = scmp.ne.s32.totalorder %s68, %s69
    %p80 = scmp.eq.s32.totalorder %s18, 0
    %p81 = por %p79, %p80
    %p82 = scmp.ne.s32.totalorder %s68, %s69
    %p83 = scmp.eq.s32.totalorder %s19, 3
    %p84 = por %p82, %p83
    %p86 = scmp.ne.s32.totalorder %s69, %s85
    %p87 = scmp.eq.s32.totalorder %s19, 0
    %p88 = por %p86, %p87
    %s89 = ssub.s32 %s20, %s32
    %s90 = ssub.s32 %s21, %s28
    %s91 = sor.u32 %s89, %s90
    %p92 = scmp.eq.s32.totalorder %s91, 0
    %s94 = sadd.s32 %s93, 1
    %s95 = scalar_select %p92, %s93, %s94
    %p98 = pneg %p92
    %p99 = scmp.eq.s32.totalorder %s13, 3
    %p100 = por %p98, %p99
    %p101 = scmp.ne.s32.totalorder %s93, %s96
    %p102 = scmp.eq.s32.totalorder %s13, 0
    %p103 = por %p101, %p102
    %p104 = scmp.ne.s32.totalorder %s93, %s96
    %p105 = scmp.eq.s32.totalorder %s18, 3
    %p106 = por %p104, %p105
    %p107 = scmp.ne.s32.totalorder %s96, %s97
    %p108 = scmp.eq.s32.totalorder %s18, 0
    %p109 = por %p107, %p108
    %p110 = scmp.ne.s32.totalorder %s96, %s97
    %p111 = scmp.eq.s32.totalorder %s19, 3
    %p112 = por %p110, %p111
    %p114 = scmp.ne.s32.totalorder %s97, %s113
    %p115 = scmp.eq.s32.totalorder %s19, 0
    %p116 = por %p114, %p115
    %s118 = sadd.s32 %s117, 1
    %p121 = scmp.eq.s32.totalorder %s13, 3
    %p122 = scmp.ne.s32.totalorder %s117, %s119
    %p123 = scmp.eq.s32.totalorder %s13, 0
    %p124 = por %p122, %p123
    %p125 = scmp.ne.s32.totalorder %s117, %s119
    %p126 = scmp.eq.s32.totalorder %s18, 3
    %p127 = por %p125, %p126
    %p128 = scmp.ne.s32.totalorder %s119, %s120
    %p129 = scmp.eq.s32.totalorder %s18, 0
    %p130 = por %p128, %p129
    %p131 = scmp.ne.s32.totalorder %s119, %s120
    %p132 = scmp.eq.s32.totalorder %s19, 3
    %p133 = por %p131, %p132
    %p135 = scmp.ne.s32.totalorder %s120, %s134
    %p136 = scmp.eq.s32.totalorder %s19, 0
    %p137 = por %p135, %p136
    %s139 = sadd.s32 %s138, 1
    %p142 = scmp.eq.s32.totalorder %s13, 3
    %p143 = scmp.ne.s32.totalorder %s138, %s140
    %p144 = scmp.eq.s32.totalorder %s13, 0
    %p145 = por %p143, %p144
    %p146 = scmp.ne.s32.totalorder %s138, %s140
    %p147 = scmp.eq.s32.totalorder %s18, 3
    %p148 = por %p146, %p147
    %p149 = scmp.ne.s32.totalorder %s140, %s141
    %p150 = scmp.eq.s32.totalorder %s18, 0
    %p151 = por %p149, %p150
    %p152 = scmp.ne.s32.totalorder %s140, %s141
    %p153 = scmp.eq.s32.totalorder %s19, 3
    %p154 = por %p152, %p153
    %p156 = scmp.ne.s32.totalorder %s141, %s155
    %p157 = scmp.eq.s32.totalorder %s19, 0
    %p158 = por %p156, %p157
    %s160 = sadd.s32 %s159, 1
    %p163 = scmp.eq.s32.totalorder %s13, 3
    %p164 = scmp.ne.s32.totalorder %s159, %s161
    %p165 = scmp.eq.s32.totalorder %s13, 0
    %p166 = por %p164, %p165
    %p167 = scmp.ne.s32.totalorder %s159, %s161
    %p168 = scmp.eq.s32.totalorder %s18, 3
    %p169 = por %p167, %p168
    %p170 = scmp.ne.s32.totalorder %s161, %s162
    %p171 = scmp.eq.s32.totalorder %s18, 0
    %p172 = por %p170, %p171
    %p173 = scmp.ne.s32.totalorder %s161, %s162
    %p174 = scmp.eq.s32.totalorder %s19, 3
    %p175 = por %p173, %p174
    %p177 = scmp.ne.s32.totalorder %s162, %s176
    %p178 = scmp.eq.s32.totalorder %s19, 0
    %p179 = por %p177, %p178
    %s181 = sadd.s32 %s180, 1
    %p184 = scmp.eq.s32.totalorder %s13, 3
    %p185 = scmp.ne.s32.totalorder %s180, %s182
    %p186 = scmp.eq.s32.totalorder %s13, 0
    %p187 = por %p185, %p186
    %p188 = scmp.ne.s32.totalorder %s180, %s182
    %p189 = scmp.eq.s32.totalorder %s18, 3
    %p190 = por %p188, %p189
    %p191 = scmp.ne.s32.totalorder %s182, %s183
    %p192 = scmp.eq.s32.totalorder %s18, 0
    %p193 = por %p191, %p192
    %p194 = scmp.ne.s32.totalorder %s182, %s183
    %p195 = scmp.eq.s32.totalorder %s19, 3
    %p196 = por %p194, %p195
    %p198 = scmp.ne.s32.totalorder %s183, %s197
    %p199 = scmp.eq.s32.totalorder %s19, 0
    %p200 = por %p198, %p199
    %s201 = ssub.s32 %s20, %s32
    %p202 = scmp.eq.s32.totalorder %s201, 0
    %s204 = sadd.s32 %s203, 1
    %s205 = scalar_select %p202, %s203, %s204
    %p208 = pneg %p202
    %p209 = scmp.eq.s32.totalorder %s13, 3
    %p210 = por %p208, %p209
    %p211 = scmp.ne.s32.totalorder %s203, %s206
    %p212 = scmp.eq.s32.totalorder %s13, 0
    %p213 = por %p211, %p212
    %p214 = scmp.ne.s32.totalorder %s203, %s206
    %p215 = scmp.eq.s32.totalorder %s18, 3
    %p216 = por %p214, %p215
    %p217 = scmp.ne.s32.totalorder %s206, %s207
    %p218 = scmp.eq.s32.totalorder %s18, 0
    %p219 = por %p217, %p218
    %p220 = scmp.ne.s32.totalorder %s206, %s207
    %p221 = scmp.eq.s32.totalorder %s19, 3
    %p222 = por %p220, %p221
    %p224 = scmp.ne.s32.totalorder %s207, %s223
    %p225 = scmp.eq.s32.totalorder %s19, 0
    %p226 = por %p224, %p225
    %p227 = scmp.le.s32.totalorder 1, %s13
    %p228 = scmp.lt.s32.totalorder %s13, 5
    %p229 = pnand %p227, %p228
    %p230 = pneg %p229
    // Predicated region
    $region9: #{permutator_block_forward_pallas.17} parent=5 // pred_check
      _
    $region10: #{permutator_block_forward_pallas.17} parent=5 // pred_check_branch
      %232 = sbr.rel (%p229) target = $region12
    $region11: #{permutator_block_forward_pallas.17} parent=5 // pred_region
      %s233 = ssub.s32 %s13, 1
      // Predicated region
      $region13: #{permutator_block_forward_pallas.17} parent=11 // pred_check
        %p234 = pneg %p130
      $region14: #{permutator_block_forward_pallas.17} parent=11 // pred_check_branch
        %236 = sbr.rel (%p234) target = $region16
      $region15: #{permutator_block_forward_pallas.17} parent=11 // pred_region
        _
      $region16: #{permutator_block_forward_pallas.17} parent=11 // pred_fallthru
        _
      // Predicated region
      $region17: #{permutator_block_forward_pallas.17} parent=11 // pred_check
        %p237 = pneg %p151
      $region18: #{permutator_block_forward_pallas.17} parent=11 // pred_check_branch
        %239 = sbr.rel (%p237) target = $region20
      $region19: #{permutator_block_forward_pallas.17} parent=11 // pred_region
        _
      $region20: #{permutator_block_forward_pallas.17} parent=11 // pred_fallthru
        _
      // Predicated region
      $region21: #{permutator_block_forward_pallas.17} parent=11 // pred_check
        %p240 = pneg %p172
      $region22: #{permutator_block_forward_pallas.17} parent=11 // pred_check_branch
        %242 = sbr.rel (%p240) target = $region24
      $region23: #{permutator_block_forward_pallas.17} parent=11 // pred_region
        _
      $region24: #{permutator_block_forward_pallas.17} parent=11 // pred_fallthru
        _
      // Predicated region
      $region25: #{permutator_block_forward_pallas.17} parent=11 // pred_check
        %p243 = pneg %p193
      $region26: #{permutator_block_forward_pallas.17} parent=11 // pred_check_branch
        %245 = sbr.rel (%p243) target = $region28
      $region27: #{permutator_block_forward_pallas.17} parent=11 // pred_region
        _
      $region28: #{permutator_block_forward_pallas.17} parent=11 // pred_fallthru
        _
    $region12: #{permutator_block_forward_pallas.17} parent=5 // pred_fallthru
      _
    %p246 = scmp.lt.s32.totalorder %s13, 4
    // Predicated region
    $region29: #{permutator_block_forward_pallas.17} parent=5 // pred_check
      %p247 = pneg %p246
    $region30: #{permutator_block_forward_pallas.17} parent=5 // pred_check_branch
      %249 = sbr.rel (%p247) target = $region32
    $region31: #{permutator_block_forward_pallas.17} parent=5 // pred_region
      // Predicated region
      $region33: #{permutator_block_forward_pallas.17} parent=31 // pred_check
        %p250 = pneg %p47
      $region34: #{permutator_block_forward_pallas.17} parent=31 // pred_check_branch
        %252 = sbr.rel (%p250) target = $region36
      $region35: #{permutator_block_forward_pallas.17} parent=31 // pred_region
        %s253 = smul.u32 2, %s21
        %p254 = scmp.lt.s32.totalorder %s20, 1
        %s255 = scalar_select %p254, %s20, 1
        %p256 = scmp.lt.s32.totalorder %s253, 3
        %s257 = scalar_select %p256, %s253, 3
        %s258 = smul.addr %s255, 4
        %s259 = sadd.s32 %s257, %s258
        %s260 = smul.addr %s259, 4
        %s261 = scalar_lea.vmem %s0, %s260
        %s262 = smul.u32 2, %s21
      $region36: #{permutator_block_forward_pallas.17} parent=31 // pred_fallthru
        _
      // Predicated region
      $region37: #{permutator_block_forward_pallas.17} parent=31 // pred_check
        %p263 = pneg %p75
      $region38: #{permutator_block_forward_pallas.17} parent=31 // pred_check_branch
        %265 = sbr.rel (%p263) target = $region40
      $region39: #{permutator_block_forward_pallas.17} parent=31 // pred_region
        %s266 = smul.u32 2, %s21
        %p267 = scmp.lt.s32.totalorder %s20, 1
        %s268 = scalar_select %p267, %s20, 1
        %p269 = scmp.lt.s32.totalorder %s266, 3
        %s270 = scalar_select %p269, %s266, 3
        %s271 = smul.addr %s268, 4
        %s272 = sadd.s32 %s270, %s271
        %s273 = smul.addr %s272, 4
        %s274 = scalar_lea.vmem %s1, %s273
        %s275 = smul.u32 2, %s21
      $region40: #{permutator_block_forward_pallas.17} parent=31 // pred_fallthru
        _
      // Predicated region
      $region41: #{permutator_block_forward_pallas.17} parent=31 // pred_check
        %p276 = pneg %p103
      $region42: #{permutator_block_forward_pallas.17} parent=31 // pred_check_branch
        %278 = sbr.rel (%p276) target = $region44
      $region43: #{permutator_block_forward_pallas.17} parent=31 // pred_region
        %s279 = smul.u32 2, %s21
        %p280 = scmp.lt.s32.totalorder %s20, 1
        %s281 = scalar_select %p280, %s20, 1
        %p282 = scmp.lt.s32.totalorder %s279, 3
        %s283 = scalar_select %p282, %s279, 3
        %s284 = smul.addr %s281, 4
        %s285 = sadd.s32 %s283, %s284
        %s286 = smul.addr %s285, 4
        %s287 = scalar_lea.vmem %s2, %s286
        %s288 = smul.u32 2, %s21
      $region44: #{permutator_block_forward_pallas.17} parent=31 // pred_fallthru
        _
    $region32: #{permutator_block_forward_pallas.17} parent=5 // pred_fallthru
      _
    %p289 = scmp.le.s32.totalorder 1, %s13
    %p290 = scmp.lt.s32.totalorder %s13, 5
    %p291 = pnand %p289, %p290
    %p292 = pneg %p291
    // Predicated region
    $region45: #{permutator_block_forward_pallas.17} parent=5 // pred_check
      _
    $region46: #{permutator_block_forward_pallas.17} parent=5 // pred_check_branch
      %294 = sbr.rel (%p291) target = $region48
    $region47: #{permutator_block_forward_pallas.17} parent=5 // pred_region
      %s295 = ssub.s32 %s13, 1
      %s296 = smul.u32 2, %s23
      %p297 = scmp.lt.s32.totalorder %s22, 1
      %s298 = scalar_select %p297, %s22, 1
      %p299 = scmp.lt.s32.totalorder %s296, 3
      %s300 = scalar_select %p299, %s296, 3
      %s301 = smul.addr %s298, 4
      %s302 = sadd.s32 %s300, %s301
      %s303 = smul.addr %s302, 4
      %s304 = scalar_lea.vmem %s0, %s303
      %p305 = pneg %p53
      %p306 = pneg %p50
      %s307 = smul.u32 2, %s23
      %p308 = scmp.lt.s32.totalorder %s22, 1
      %s309 = scalar_select %p308, %s22, 1
      %p310 = scmp.lt.s32.totalorder %s307, 3
      %s311 = scalar_select %p310, %s307, 3
      %s312 = smul.addr %s309, 4
      %s313 = sadd.s32 %s311, %s312
      %s314 = smul.addr %s313, 4
      %s315 = scalar_lea.vmem %s1, %s314
      %p316 = pneg %p81
      %p317 = pneg %p78
      %s318 = smul.u32 2, %s23
      %p319 = scmp.lt.s32.totalorder %s22, 1
      %s320 = scalar_select %p319, %s22, 1
      %p321 = scmp.lt.s32.totalorder %s318, 3
      %s322 = scalar_select %p321, %s318, 3
      %s323 = smul.addr %s320, 4
      %s324 = sadd.s32 %s322, %s323
      %s325 = smul.addr %s324, 4
      %s326 = scalar_lea.vmem %s2, %s325
      %p327 = pneg %p109
      %p328 = pneg %p106
      %p329 = pneg %p130
      %p330 = pneg %p127
      %p331 = pneg %p151
      %p332 = pneg %p148
      %p333 = pneg %p172
      %p334 = pneg %p169
      %p335 = pneg %p193
      %p336 = pneg %p190
      %p337 = pneg %p219
      %p338 = pneg %p216
      %p339 = scmp.lt.s32.totalorder %s22, 1
      %s340 = scalar_select %p339, %s22, 1
      %s341 = smul.addr %s340, 4
      %s342 = scalar_lea.vmem %s7, %s341
      %s343 = smul.u32 2, %s23
      %p344 = scmp.lt.s32.totalorder %s22, 1
      %s345 = scalar_select %p344, %s22, 1
      %p346 = scmp.lt.s32.totalorder %s343, 3
      %s347 = scalar_select %p346, %s343, 3
      %s348 = smul.addr %s345, 4
      %s349 = sadd.s32 %s347, %s348
      %s350 = smul.addr %s349, 4
      %s351 = scalar_lea.vmem %s0, %s350
      %s352 = smul.u32 2, %s23
      %s353 = smul.u32 2, %s23
      %p354 = scmp.lt.s32.totalorder %s22, 1
      %s355 = scalar_select %p354, %s22, 1
      %p356 = scmp.lt.s32.totalorder %s353, 3
      %s357 = scalar_select %p356, %s353, 3
      %s358 = smul.addr %s355, 4
      %s359 = sadd.s32 %s357, %s358
      %s360 = smul.addr %s359, 4
      %s361 = scalar_lea.vmem %s1, %s360
      %s362 = smul.u32 2, %s23
      %s363 = smul.u32 2, %s23
      %p364 = scmp.lt.s32.totalorder %s22, 1
      %s365 = scalar_select %p364, %s22, 1
      %p366 = scmp.lt.s32.totalorder %s363, 3
      %s367 = scalar_select %p366, %s363, 3
      %s368 = smul.addr %s365, 4
      %s369 = sadd.s32 %s367, %s368
      %s370 = smul.addr %s369, 4
      %s371 = scalar_lea.vmem %s2, %s370
      %s372 = smul.u32 2, %s23
      %p373 = scmp.lt.s32.totalorder %s22, 1
      %s374 = scalar_select %p373, %s22, 1
      %s375 = smul.addr %s374, 4
      %s376 = scalar_lea.vmem %s7, %s375
      %p378 = scmp.eq.s32.totalorder %s23, 0
      // Predicated region
      $region49: #{permutator_block_forward_pallas.17} parent=47 // pred_check
        %p379 = pneg %p378
      $region50: #{permutator_block_forward_pallas.17} parent=47 // pred_check_branch
        %381 = sbr.rel (%p379) target = $region52
      $region51: #{permutator_block_forward_pallas.17} parent=47 // pred_region
        %vm382 = vcmask 122880
        %383 = vst.msk [vmem:[#allocation2] sm:$0x1] %vm382, 0.0
      $region52: #{permutator_block_forward_pallas.17} parent=47 // pred_fallthru
        _
      %v384 = vld [vmem:[%s351] sm:$0xf]
      %v385 = vld [vmem:[%s351 + $0x4] sm:$0xf]
      %v386 = vunpack.c.l.bf16 %v384
      %v387 = vunpack.c.l.bf16 %v385
      %v388 = vld [vmem:[%s361] sm:$0xf]
      %v389 = vld [vmem:[%s361 + $0x4] sm:$0xf]
      %v390 = vunpack.c.l.bf16 %v388
      %v391 = vunpack.c.l.bf16 %v389
      %v392 = vadd.f32 %v386, %v390
      %v393 = vadd.f32 %v387, %v391
      %v394 = vld [vmem:[%s371] sm:$0xf]
      %v395 = vld [vmem:[%s371 + $0x4] sm:$0xf]
      %v396 = vunpack.c.l.bf16 %v394
      %v397 = vunpack.c.l.bf16 %v395
      %v398 = vadd.f32 %v392, %v396
      %v399 = vadd.f32 %v393, %v397
      %v400 = vld [vmem:[#allocation2] sm:$0x1]
      %vm401 = vcmask 130048
      %v402 = vsel %vm401, %v398, 0.0
      %v403 = vsel %vm401, %v399, 0.0
      %v404 = vadd.f32 %v402, %v403
      %v405 = vrot.slane %v404, 4
      %v406 = vadd.f32 %v404, %v405
      %v407 = vrot.slane %v406, 2
      %v408 = vadd.f32 %v406, %v407
      %v409 = vrot.slane %v408, 1
      %v410 = vadd.f32 %v408, %v409
      %v411 = vadd.f32 %v400, %v410
      %vm412 = vcmask 122880
      %413 = vst.msk [vmem:[#allocation2] sm:$0x1] %vm412, %v411
      %p414 = scmp.eq.s32.totalorder %s23, 1
      // Predicated region
      $region53: #{permutator_block_forward_pallas.17} parent=47 // pred_check
        %p415 = pneg %p414
      $region54: #{permutator_block_forward_pallas.17} parent=47 // pred_check_branch
        %417 = sbr.rel (%p415) target = $region56
      $region55: #{permutator_block_forward_pallas.17} parent=47 // pred_region
        %v418 = vld [vmem:[#allocation2] sm:$0x1]
        %v419 = vmul.f32 %v418, 0.03125
        %v420 = vpack.c.bf16 %v419, %v419
        %v421 = vld [vmem:[%s3] sm:$0xf]
        %v422 = vld [vmem:[%s3 + $0x4] sm:$0xf]
        %v423 = vld [vmem:[%s4] sm:$0x1]
        %v426 = vunpack.c.l.b16 %v421
        %v427 = vunpack.c.l.b16 %v422
        %v428 = vpack.c.b16 %v427, %v426
        %v431 = vsel %vm401, %v420, 0
        %433 = vmatpush.bf16.msra.mxu0 0
        %434 = vmatpush.bf16.msra.mxu0 0
        %435 = vmatpush.bf16.msra.mxu0 0
        %436 = vmatpush.bf16.msra.mxu0 0
        %437 = vmatpush.bf16.msra.mxu0 0
        %438 = vmatpush.bf16.msra.mxu0 0
        %439 = vmatpush.bf16.msra.mxu0 0
        %440 = vmatpush.bf16.msra.mxu0 %v428
        %441 = vmatmul.bf16.gmra.mxu0 %v431
        %v442 = vpop.f32.mrf.mxu0
        %v443 = vadd.f32 %v423, %v442
        %v444 = vpop.f32.mrf.mxu0
        %445 = vdwg.mxu0
        %v446 = vmul.f32 %v443, 0.5
        %v447 = vmul.f32 %v443, 0.70710677
        %v448 = vmul.f32 %v447, %v447
        %v449 = vmin.f32 16.0, %v448
        %v450 = vmul.f32 %v449, 2.1237322e-06
        %v451 = vadd.f32 %v450, 0.00028619796
        %v452 = vmul.f32 %v449, %v451
        %v453 = vadd.f32 %v452, 0.0036580483
        %v454 = vmul.f32 %v449, %v453
        %v455 = vadd.f32 %v454, 0.05243302
        %v456 = vmul.f32 %v449, %v455
        %v457 = vadd.f32 %v456, 0.18741608
        %v458 = vmul.f32 %v449, %v457
        %v459 = vadd.f32 %v458, 1.1283791
        %v460 = vmul.f32 %v447, %v459
        %v461 = vmul.f32 %v449, 3.8918573e-05
        %v462 = vadd.f32 %v461, 0.001143296
        %v463 = vmul.f32 %v449, %v462
        %v464 = vadd.f32 %v463, 0.014752088
        %v465 = vmul.f32 %v449, %v464
        %v466 = vadd.f32 %v465, 0.112945676
        %v467 = vmul.f32 %v449, %v466
        %v468 = vadd.f32 %v467, 0.4994258
        %v469 = vmul.f32 %v449, %v468
        %v470 = vadd.f32 %v469, 1.0
        %v471 = vrcp.pop %v470
        %v472 = vmul.f32 %v470, %v471
        %v473 = vsub.f32 1.0, %v472
        %v474 = vmul.f32 %v471, %v473
        %v475 = vadd.f32 %v471, %v474
        %vm476 = vweird.f32 %v470
        %vm477 = vweird.f32 %v471
        %vm478 = vmor %vm476, %vm477
        %v479 = vsel %vm478, %v471, %v475
        %v480 = vand.u32 2147483647, %v470
        %vm481 = vcmp.eq.f32.partialorder %v480, 8.507059e+37
        %v482 = vand.u32 %v470, 2147483648
        %v483 = vor.u32 1.1754944e-38, %v482
        %v484 = vsel %vm481, %v483, %v479
        %v485 = vmul.f32 %v460, %v484
        %v486 = vmin.f32 %v485, 1.0
        %v487 = vmax.f32 %v486, -1.0
        %v488 = vadd.f32 %v487, 1.0
        %v489 = vmul.f32 %v446, %v488
        %v490 = vpack.c.bf16 %v489, %v489
        %v491 = vld [vmem:[%s5] sm:$0x3]
        %v492 = vld [vmem:[%s6] sm:$0x1]
        %vm493 = vcmask 31744
        %v495 = vsel %vm493, %v490, 0
        %vm497 = vcmask 1041408
        %v499 = vsel %vm497, %v491, 0
        %501 = vmatpush.bf16.msra.mxu0 0
        %502 = vmatpush.bf16.msra.mxu0 0
        %503 = vmatpush.bf16.msra.mxu0 0
        %504 = vmatpush.bf16.msra.mxu0 0
        %505 = vmatpush.bf16.msra.mxu0 0
        %506 = vmatpush.bf16.msra.mxu0 0
        %507 = vmatpush.bf16.msra.mxu0 0
        %508 = vmatpush.bf16.msra.mxu0 %v499
        %509 = vmatmul.bf16.gmra.mxu0 %v495
        %v510 = vpop.f32.mrf.mxu0
        %v511 = vadd.f32 %v492, %v510
        %v512 = vpop.f32.mrf.mxu0
        %513 = vdwg.mxu0
        %515 = vrot.lane.b32.xlu0 %v511, 112
        %v516 = vpop.permute.xlu0 %515
        %v518 = vmax.f32 %v511, %v516
        %519 = vrot.lane.b32.xlu0 %v511, 96
        %v520 = vpop.permute.xlu0 %519
        %v522 = vmax.f32 %v518, %v520
        %v523 = vsub.f32 %v511, %v522
        %v524 = vmul.f32 %v523, 1.442695
        %v525 = vpow.pop %v524
        %527 = vrot.lane.b32.xlu0 %v522, 16
        %v528 = vpop.permute.xlu0 %527
        %v530 = vsub.f32 %v511, %v528
        %v531 = vmul.f32 %v530, 1.442695
        %v532 = vpow.pop %v531
        %533 = vrot.lane.b32.xlu0 %v522, 32
        %v534 = vpop.permute.xlu0 %533
        %v536 = vsub.f32 %v511, %v534
        %v537 = vmul.f32 %v536, 1.442695
        %v538 = vpow.pop %v537
        %540 = vrot.lane.b32.xlu0 %v532, 112
        %v541 = vpop.permute.xlu0 %540
        %v543 = vadd.f32 %v525, %v541
        %545 = vrot.lane.b32.xlu0 %v538, 96
        %v546 = vpop.permute.xlu0 %545
        %v548 = vadd.f32 %v543, %v546
        %v549 = vrcp.pop %v548
        %v550 = vmul.f32 %v548, %v549
        %v551 = vsub.f32 1.0, %v550
        %v552 = vmul.f32 %v549, %v551
        %v553 = vadd.f32 %v549, %v552
        %vm554 = vweird.f32 %v548
        %vm555 = vweird.f32 %v549
        %vm556 = vmor %vm554, %vm555
        %v557 = vsel %vm556, %v549, %v553
        %v558 = vand.u32 2147483647, %v548
        %vm559 = vcmp.eq.f32.partialorder %v558, 8.507059e+37
        %v560 = vand.u32 %v548, 2147483648
        %v561 = vor.u32 1.1754944e-38, %v560
        %v562 = vsel %vm559, %v561, %v557
        %v563 = vmul.f32 1.0, %v562
        %v564 = vmul.f32 %v525, %v563
        %566 = vrot.lane.b32.xlu0 %v563, 16
        %v567 = vpop.permute.xlu0 %566
        %v569 = vmul.f32 %v532, %v567
        %570 = vrot.lane.b32.xlu0 %v563, 32
        %v571 = vpop.permute.xlu0 %570
        %v573 = vmul.f32 %v538, %v571
        %v575 = vrot.slane %v569, 7
        %576 = vrot.lane.b32.xlu0 %v575, 112
        %v577 = vpop.permute.xlu0 %576
        %v580 = vrot.slane %v573, 6
        %581 = vrot.lane.b32.xlu0 %v580, 96
        %v582 = vpop.permute.xlu0 %581
        %vm584 = vcmask 1040384
        %v585 = vsel %vm584, %v564, %v577
        %v586 = vsel %vm497, %v585, %v582
        %vm587 = vcmask 124928
        %588 = vst.msk [vmem:[%s376] sm:$0x7] %vm587, %v586
      $region56: #{permutator_block_forward_pallas.17} parent=47 // pred_fallthru
        _
      %p589 = scmp.lt.s32.totalorder %s22, 1
      %s590 = scalar_select %p589, %s22, 1
      %s591 = smul.addr %s590, 4
      %s592 = scalar_lea.vmem %s7, %s591
      // Predicated region
      $region57: #{permutator_block_forward_pallas.17} parent=47 // pred_check
        %p593 = pneg %p216
      $region58: #{permutator_block_forward_pallas.17} parent=47 // pred_check_branch
        %595 = sbr.rel (%p593) target = $region60
      $region59: #{permutator_block_forward_pallas.17} parent=47 // pred_region
        _
      $region60: #{permutator_block_forward_pallas.17} parent=47 // pred_fallthru
        _
    $region48: #{permutator_block_forward_pallas.17} parent=5 // pred_fallthru
      _
    %p596 = scmp.le.s32.totalorder 2, %s13
    // Predicated region
    $region61: #{permutator_block_forward_pallas.17} parent=5 // pred_check
      %p597 = pneg %p596
    $region62: #{permutator_block_forward_pallas.17} parent=5 // pred_check_branch
      %599 = sbr.rel (%p597) target = $region64
    $region63: #{permutator_block_forward_pallas.17} parent=5 // pred_region
      %s600 = ssub.s32 %s13, 2
      // Predicated region
      $region65: #{permutator_block_forward_pallas.17} parent=63 // pred_check
        %p601 = pneg %p222
      $region66: #{permutator_block_forward_pallas.17} parent=63 // pred_check_branch
        %603 = sbr.rel (%p601) target = $region68
      $region67: #{permutator_block_forward_pallas.17} parent=63 // pred_region
        %p604 = scmp.lt.s32.totalorder %s24, 1
        %s605 = scalar_select %p604, %s24, 1
        %s606 = smul.addr %s605, 4
        %s607 = scalar_lea.vmem %s7, %s606
      $region68: #{permutator_block_forward_pallas.17} parent=63 // pred_fallthru
        _
    $region64: #{permutator_block_forward_pallas.17} parent=5 // pred_fallthru
      _
  $region6: #{permutator_block_forward_pallas.17} parent=0 // loop_footer
    %s17 = sadd.s32 1, %s13
  $region7: #{permutator_block_forward_pallas.17} parent=0 // loop_footer_branch
    %12 = sbr.rel target = $region3
  $region8: #{permutator_block_forward_pallas.17} parent=0 // loop_exit
    _

// kernel: permutator_block_forward_pallas.19
$region0: #{permutator_block_forward_pallas.19}
  #allocation0 [shape = 'u32[]', space=smem, size = 0x4, offset = 0x4, fixed_abs, tag = 'smem constant byte address 0x4 - core index']
  #allocation1 [shape = 'u32[72,128]{1,0:T(1,128)}', space=vmem, size = 0x9000, scoped, tag = 'internal scratch']
  %s0 = inlined_call_operand.vmem [shape: f32[64,16], index: 0, kind: input, shape index: {}]
  %s1 = inlined_call_operand.vmem [shape: f32[1,16], index: 1, kind: input, shape index: {}]
  %s2 = inlined_call_operand.vmem [shape: f32[1,16], index: 2, kind: input, shape index: {}]
  %s3 = inlined_call_operand.vmem [shape: bf16[16,64], index: 3, kind: input, shape index: {}]
  %s4 = inlined_call_operand.vmem [shape: f32[1,64], index: 4, kind: input, shape index: {}]
  %s5 = inlined_call_operand.vmem [shape: bf16[64,16], index: 5, kind: input, shape index: {}]
  %s6 = inlined_call_operand.vmem [shape: f32[1,16], index: 6, kind: input, shape index: {}]
  %s7 = inlined_call_operand.hbm [shape: f32[64,16], index: 7, kind: output, shape index: {}]
  %s8 = sld [smem:[#allocation0]]
  $region61: #{permutator_block_forward_pallas.19} parent=0
    _
  %s10 = ssub.s32 1, %s8
  %s11 = scalar_select 0, %s10, %s8
  $region1: #{permutator_block_forward_pallas.19} parent=0
    #allocation2 [shape = 'u8[16384]{0}', space=vmem, size = 0x4000, scoped, tag = 'output window, operand 0']
    #allocation3 [shape = 's32[2]{0}', space=sflag, size = 0x8, scoped, tag = 'scoped memory for permutator_block_forward_pallas.19']
    %12 = vsyncpa [#allocation3], 0
    %s13 = scalar_lea.sflag [#allocation3], 1
    %14 = vsyncpa %s13, 0
    loop: start=0, step=1, limit=6
    $region2: #{permutator_block_forward_pallas.19} parent=1 // loop_pre_header
      _
    $region3: #{permutator_block_forward_pallas.19} parent=1 // loop_header
      %s16 = sphi 0, %s20
      %p17 = scmp.ge.s32.totalorder %s16, 6
      %s26 = sphi 0, %s28
      %s29 = sphi 0, %s26
      %s30 = sphi 0, %s29
      %s46 = sphi 0, %s30
      %s50 = sphi 0, %s50
      %s52 = sphi 0, %s50
      %s53 = sphi 0, %s52
      %s67 = sphi 0, %s53
      %s71 = sphi 0, %s71
      %s73 = sphi 0, %s71
      %s74 = sphi 0, %s73
      %s88 = sphi 0, %s74
      %s92 = sphi 0, %s92
      %s94 = sphi 0, %s92
      %s95 = sphi 0, %s94
      %s109 = sphi 0, %s95
      %s113 = sphi 0, %s113
      %s115 = sphi 0, %s113
      %s116 = sphi 0, %s115
      %s130 = sphi 0, %s116
      %s134 = sphi 0, %s134
      %s136 = sphi 0, %s134
      %s137 = sphi 0, %s136
      %s151 = sphi 0, %s137
      %s155 = sphi 0, %s155
      %s157 = sphi 0, %s155
      %s158 = sphi 0, %s157
      %s172 = sphi 0, %s158
      %s178 = sphi 0, %s180
      %s181 = sphi 0, %s178
      %s182 = sphi 0, %s181
      %s198 = sphi 0, %s182
    $region4: #{permutator_block_forward_pallas.19} parent=1 // loop_header_branch
      %19 = sbr.rel (%p17) target = $region8
    $region5: #{permutator_block_forward_pallas.19} parent=1 // loop_body
      %s21 = ssub.s32 %s16, 1
      %s22 = ssub.s32 %s16, 2
      %s23 = sadd.s32 %s16, 1
      %s24 = ssub.s32 %s16, %s23
      %p25 = scmp.eq.s32.totalorder %s24, 0
      %s27 = sadd.s32 %s26, 1
      %s28 = scalar_select %p25, %s26, %s27
      %p31 = pneg %p25
      %p32 = scmp.eq.s32.totalorder %s16, 3
      %p33 = por %p31, %p32
      %p34 = scmp.ne.s32.totalorder %s26, %s29
      %p35 = scmp.eq.s32.totalorder %s16, 0
      %p36 = por %p34, %p35
      %p37 = scmp.ne.s32.totalorder %s26, %s29
      %p38 = scmp.eq.s32.totalorder %s21, 3
      %p39 = por %p37, %p38
      %p40 = scmp.ne.s32.totalorder %s29, %s30
      %p41 = scmp.eq.s32.totalorder %s21, 0
      %p42 = por %p40, %p41
      %p43 = scmp.ne.s32.totalorder %s29, %s30
      %p44 = scmp.eq.s32.totalorder %s22, 3
      %p45 = por %p43, %p44
      %p47 = scmp.ne.s32.totalorder %s30, %s46
      %p48 = scmp.eq.s32.totalorder %s22, 0
      %p49 = por %p47, %p48
      %s51 = sadd.s32 %s50, 1
      %p54 = scmp.eq.s32.totalorder %s16, 3
      %p55 = scmp.ne.s32.totalorder %s50, %s52
      %p56 = scmp.eq.s32.totalorder %s16, 0
      %p57 = por %p55, %p56
      %p58 = scmp.ne.s32.totalorder %s50, %s52
      %p59 = scmp.eq.s32.totalorder %s21, 3
      %p60 = por %p58, %p59
      %p61 = scmp.ne.s32.totalorder %s52, %s53
      %p62 = scmp.eq.s32.totalorder %s21, 0
      %p63 = por %p61, %p62
      %p64 = scmp.ne.s32.totalorder %s52, %s53
      %p65 = scmp.eq.s32.totalorder %s22, 3
      %p66 = por %p64, %p65
      %p68 = scmp.ne.s32.totalorder %s53, %s67
      %p69 = scmp.eq.s32.totalorder %s22, 0
      %p70 = por %p68, %p69
      %s72 = sadd.s32 %s71, 1
      %p75 = scmp.eq.s32.totalorder %s16, 3
      %p76 = scmp.ne.s32.totalorder %s71, %s73
      %p77 = scmp.eq.s32.totalorder %s16, 0
      %p78 = por %p76, %p77
      %p79 = scmp.ne.s32.totalorder %s71, %s73
      %p80 = scmp.eq.s32.totalorder %s21, 3
      %p81 = por %p79, %p80
      %p82 = scmp.ne.s32.totalorder %s73, %s74
      %p83 = scmp.eq.s32.totalorder %s21, 0
      %p84 = por %p82, %p83
      %p85 = scmp.ne.s32.totalorder %s73, %s74
      %p86 = scmp.eq.s32.totalorder %s22, 3
      %p87 = por %p85, %p86
      %p89 = scmp.ne.s32.totalorder %s74, %s88
      %p90 = scmp.eq.s32.totalorder %s22, 0
      %p91 = por %p89, %p90
      %s93 = sadd.s32 %s92, 1
      %p96 = scmp.eq.s32.totalorder %s16, 3
      %p97 = scmp.ne.s32.totalorder %s92, %s94
      %p98 = scmp.eq.s32.totalorder %s16, 0
      %p99 = por %p97, %p98
      %p100 = scmp.ne.s32.totalorder %s92, %s94
      %p101 = scmp.eq.s32.totalorder %s21, 3
      %p102 = por %p100, %p101
      %p103 = scmp.ne.s32.totalorder %s94, %s95
      %p104 = scmp.eq.s32.totalorder %s21, 0
      %p105 = por %p103, %p104
      %p106 = scmp.ne.s32.totalorder %s94, %s95
      %p107 = scmp.eq.s32.totalorder %s22, 3
      %p108 = por %p106, %p107
      %p110 = scmp.ne.s32.totalorder %s95, %s109
      %p111 = scmp.eq.s32.totalorder %s22, 0
      %p112 = por %p110, %p111
      %s114 = sadd.s32 %s113, 1
      %p117 = scmp.eq.s32.totalorder %s16, 3
      %p118 = scmp.ne.s32.totalorder %s113, %s115
      %p119 = scmp.eq.s32.totalorder %s16, 0
      %p120 = por %p118, %p119
      %p121 = scmp.ne.s32.totalorder %s113, %s115
      %p122 = scmp.eq.s32.totalorder %s21, 3
      %p123 = por %p121, %p122
      %p124 = scmp.ne.s32.totalorder %s115, %s116
      %p125 = scmp.eq.s32.totalorder %s21, 0
      %p126 = por %p124, %p125
      %p127 = scmp.ne.s32.totalorder %s115, %s116
      %p128 = scmp.eq.s32.totalorder %s22, 3
      %p129 = por %p127, %p128
      %p131 = scmp.ne.s32.totalorder %s116, %s130
      %p132 = scmp.eq.s32.totalorder %s22, 0
      %p133 = por %p131, %p132
      %s135 = sadd.s32 %s134, 1
      %p138 = scmp.eq.s32.totalorder %s16, 3
      %p139 = scmp.ne.s32.totalorder %s134, %s136
      %p140 = scmp.eq.s32.totalorder %s16, 0
      %p141 = por %p139, %p140
      %p142 = scmp.ne.s32.totalorder %s134, %s136
      %p143 = scmp.eq.s32.totalorder %s21, 3
      %p144 = por %p142, %p143
      %p145 = scmp.ne.s32.totalorder %s136, %s137
      %p146 = scmp.eq.s32.totalorder %s21, 0
      %p147 = por %p145, %p146
      %p148 = scmp.ne.s32.totalorder %s136, %s137
      %p149 = scmp.eq.s32.totalorder %s22, 3
      %p150 = por %p148, %p149
      %p152 = scmp.ne.s32.totalorder %s137, %s151
      %p153 = scmp.eq.s32.totalorder %s22, 0
      %p154 = por %p152, %p153
      %s156 = sadd.s32 %s155, 1
      %p159 = scmp.eq.s32.totalorder %s16, 3
      %p160 = scmp.ne.s32.totalorder %s155, %s157
      %p161 = scmp.eq.s32.totalorder %s16, 0
      %p162 = por %p160, %p161
      %p163 = scmp.ne.s32.totalorder %s155, %s157
      %p164 = scmp.eq.s32.totalorder %s21, 3
      %p165 = por %p163, %p164
      %p166 = scmp.ne.s32.totalorder %s157, %s158
      %p167 = scmp.eq.s32.totalorder %s21, 0
      %p168 = por %p166, %p167
      %p169 = scmp.ne.s32.totalorder %s157, %s158
      %p170 = scmp.eq.s32.totalorder %s22, 3
      %p171 = por %p169, %p170
      %p173 = scmp.ne.s32.totalorder %s158, %s172
      %p174 = scmp.eq.s32.totalorder %s22, 0
      %p175 = por %p173, %p174
      %s176 = ssub.s32 %s16, %s23
      %p177 = scmp.eq.s32.totalorder %s176, 0
      %s179 = sadd.s32 %s178, 1
      %s180 = scalar_select %p177, %s178, %s179
      %p183 = pneg %p177
      %p184 = scmp.eq.s32.totalorder %s16, 3
      %p185 = por %p183, %p184
      %p186 = scmp.ne.s32.totalorder %s178, %s181
      %p187 = scmp.eq.s32.totalorder %s16, 0
      %p188 = por %p186, %p187
      %p189 = scmp.ne.s32.totalorder %s178, %s181
      %p190 = scmp.eq.s32.totalorder %s21, 3
      %p191 = por %p189, %p190
      %p192 = scmp.ne.s32.totalorder %s181, %s182
      %p193 = scmp.eq.s32.totalorder %s21, 0
      %p194 = por %p192, %p193
      %p195 = scmp.ne.s32.totalorder %s181, %s182
      %p196 = scmp.eq.s32.totalorder %s22, 3
      %p197 = por %p195, %p196
      %p199 = scmp.ne.s32.totalorder %s182, %s198
      %p200 = scmp.eq.s32.totalorder %s22, 0
      %p201 = por %p199, %p200
      %p202 = scmp.le.s32.totalorder 1, %s16
      %p203 = scmp.lt.s32.totalorder %s16, 5
      %p204 = pnand %p202, %p203
      %p205 = pneg %p204
      // Predicated region
      $region9: #{permutator_block_forward_pallas.19} parent=5 // pred_check
        _
      $region10: #{permutator_block_forward_pallas.19} parent=5 // pred_check_branch
        %207 = sbr.rel (%p204) target = $region12
      $region11: #{permutator_block_forward_pallas.19} parent=5 // pred_region
        %s208 = ssub.s32 %s16, 1
        // Predicated region
        $region13: #{permutator_block_forward_pallas.19} parent=11 // pred_check
          %p209 = pneg %p63
        $region14: #{permutator_block_forward_pallas.19} parent=11 // pred_check_branch
          %211 = sbr.rel (%p209) target = $region16
        $region15: #{permutator_block_forward_pallas.19} parent=11 // pred_region
          _
        $region16: #{permutator_block_forward_pallas.19} parent=11 // pred_fallthru
          _
        // Predicated region
        $region17: #{permutator_block_forward_pallas.19} parent=11 // pred_check
          %p212 = pneg %p84
        $region18: #{permutator_block_forward_pallas.19} parent=11 // pred_check_branch
          %214 = sbr.rel (%p212) target = $region20
        $region19: #{permutator_block_forward_pallas.19} parent=11 // pred_region
          _
        $region20: #{permutator_block_forward_pallas.19} parent=11 // pred_fallthru
          _
        // Predicated region
        $region21: #{permutator_block_forward_pallas.19} parent=11 // pred_check
          %p215 = pneg %p105
        $region22: #{permutator_block_forward_pallas.19} parent=11 // pred_check_branch
          %217 = sbr.rel (%p215) target = $region24
        $region23: #{permutator_block_forward_pallas.19} parent=11 // pred_region
          _
        $region24: #{permutator_block_forward_pallas.19} parent=11 // pred_fallthru
          _
        // Predicated region
        $region25: #{permutator_block_forward_pallas.19} parent=11 // pred_check
          %p218 = pneg %p126
        $region26: #{permutator_block_forward_pallas.19} parent=11 // pred_check_branch
          %220 = sbr.rel (%p218) target = $region28
        $region27: #{permutator_block_forward_pallas.19} parent=11 // pred_region
          _
        $region28: #{permutator_block_forward_pallas.19} parent=11 // pred_fallthru
          _
        // Predicated region
        $region29: #{permutator_block_forward_pallas.19} parent=11 // pred_check
          %p221 = pneg %p147
        $region30: #{permutator_block_forward_pallas.19} parent=11 // pred_check_branch
          %223 = sbr.rel (%p221) target = $region32
        $region31: #{permutator_block_forward_pallas.19} parent=11 // pred_region
          _
        $region32: #{permutator_block_forward_pallas.19} parent=11 // pred_fallthru
          _
        // Predicated region
        $region33: #{permutator_block_forward_pallas.19} parent=11 // pred_check
          %p224 = pneg %p168
        $region34: #{permutator_block_forward_pallas.19} parent=11 // pred_check_branch
          %226 = sbr.rel (%p224) target = $region36
        $region35: #{permutator_block_forward_pallas.19} parent=11 // pred_region
          _
        $region36: #{permutator_block_forward_pallas.19} parent=11 // pred_fallthru
          _
      $region12: #{permutator_block_forward_pallas.19} parent=5 // pred_fallthru
        _
      %p227 = scmp.lt.s32.totalorder %s16, 4
      // Predicated region
      $region37: #{permutator_block_forward_pallas.19} parent=5 // pred_check
        %p228 = pneg %p227
      $region38: #{permutator_block_forward_pallas.19} parent=5 // pred_check_branch
        %230 = sbr.rel (%p228) target = $region40
      $region39: #{permutator_block_forward_pallas.19} parent=5 // pred_region
        // Predicated region
        $region41: #{permutator_block_forward_pallas.19} parent=39 // pred_check
          %p231 = pneg %p36
        $region42: #{permutator_block_forward_pallas.19} parent=39 // pred_check_branch
          %233 = sbr.rel (%p231) target = $region44
        $region43: #{permutator_block_forward_pallas.19} parent=39 // pred_region
          %s234 = smul.u32 2, %s16
          %p235 = scmp.lt.s32.totalorder %s234, 7
          %s236 = scalar_select %p235, %s234, 7
          %s237 = smul.addr %s236, 8
          %s238 = scalar_lea.vmem %s0, %s237
          %s239 = smul.u32 2, %s16
        $region44: #{permutator_block_forward_pallas.19} parent=39 // pred_fallthru
          _
      $region40: #{permutator_block_forward_pallas.19} parent=5 // pred_fallthru
        _
      %p240 = scmp.le.s32.totalorder 1, %s16
      %p241 = scmp.lt.s32.totalorder %s16, 5
      %p242 = pnand %p240, %p241
      %p243 = pneg %p242
      // Predicated region
      $region45: #{permutator_block_forward_pallas.19} parent=5 // pred_check
        _
      $region46: #{permutator_block_forward_pallas.19} parent=5 // pred_check_branch
        %245 = sbr.rel (%p242) target = $region48
      $region47: #{permutator_block_forward_pallas.19} parent=5 // pred_region
        %s246 = ssub.s32 %s16, 1
        %s247 = smul.u32 2, %s21
        %p248 = scmp.lt.s32.totalorder %s247, 7
        %s249 = scalar_select %p248, %s247, 7
        %s250 = smul.addr %s249, 8
        %s251 = scalar_lea.vmem %s0, %s250
        %p252 = pneg %p42
        %p253 = pneg %p39
        %p254 = pneg %p63
        %p255 = pneg %p60
        %p256 = pneg %p84
        %p257 = pneg %p81
        %p258 = pneg %p105
        %p259 = pneg %p102
        %p260 = pneg %p126
        %p261 = pneg %p123
        %p262 = pneg %p147
        %p263 = pneg %p144
        %p264 = pneg %p168
        %p265 = pneg %p165
        %p266 = pneg %p194
        %p267 = pneg %p191
        %s268 = sand.u32 %s181, 1
        %s269 = scalar_lea.sflag [#allocation3], %s268
        %s270 = sand.u32 %s181, 1
        %s271 = smul.addr %s270, 16
        %s272 = scalar_lea.vmem [#allocation2], %s271
        %s273 = smul.u32 2, %s21
        %p274 = scmp.lt.s32.totalorder %s273, 7
        %s275 = scalar_select %p274, %s273, 7
        %s276 = smul.addr %s275, 8
        %s277 = scalar_lea.vmem %s0, %s276
        %s278 = smul.u32 2, %s21
        %s279 = smul.u32 2, %s21
        %v281 = vld [vmem:[%s277] sm:$0xff]
        %v282 = vld [vmem:[%s277 + $0x8] sm:$0xff]
        %vm283 = vcmask 130048
        %v284 = vsel %vm283, %v281, 0.0
        %285 = vadd.xlane.f32.xlu0 %v284
        %v286 = vpop.xlane.xlu0 %285
        %v287 = vsel %vm283, %v282, 0.0
        %288 = vadd.xlane.f32.xlu0 %v287
        %v289 = vpop.xlane.xlu0 %288
        %v290 = vrcp.pop 16.0
        %v291 = vmul.f32 16.0, %v290
        %v292 = vsub.f32 1.0, %v291
        %v293 = vmul.f32 %v290, %v292
        %v294 = vadd.f32 %v290, %v293
        %vm295 = vweird.f32 %v290
        %v296 = vsel %vm295, %v290, %v294
        %v297 = vmul.f32 %v286, %v296
        %v298 = vmul.f32 %v289, %v296
        %v299 = vsub.f32 %v281, %v297
        %v300 = vsub.f32 %v282, %v298
        %v301 = vmul.f32 %v299, %v299
        %v302 = vmul.f32 %v300, %v300
        %v303 = vsel %vm283, %v301, 0.0
        %304 = vadd.xlane.f32.xlu0 %v303
        %v305 = vpop.xlane.xlu0 %304
        %v306 = vsel %vm283, %v302, 0.0
        %307 = vadd.xlane.f32.xlu0 %v306
        %v308 = vpop.xlane.xlu0 %307
        %v309 = vmul.f32 %v305, %v296
        %v310 = vmul.f32 %v308, %v296
        %v311 = vadd.f32 %v309, 1e-05
        %v312 = vadd.f32 %v310, 1e-05
        %v313 = vrsqrt.pop %v311
        %v314 = vmul.f32 %v313, %v311
        %v315 = vmul.f32 %v314, %v313
        %v316 = vmul.f32 0.5, %v315
        %v317 = vsub.f32 1.5, %v316
        %v318 = vmul.f32 %v313, %v317
        %vm319 = vweird.f32 %v311
        %vm320 = vweird.f32 %v313
        %vm321 = vmor %vm319, %vm320
        %v322 = vsel %vm321, %v313, %v318
        %v323 = vrsqrt.pop %v312
        %v324 = vmul.f32 %v323, %v312
        %v325 = vmul.f32 %v324, %v323
        %v326 = vmul.f32 0.5, %v325
        %v327 = vsub.f32 1.5, %v326
        %v328 = vmul.f32 %v323, %v327
        %vm329 = vweird.f32 %v312
        %vm330 = vweird.f32 %v323
        %vm331 = vmor %vm329, %vm330
        %v332 = vsel %vm331, %v323, %v328
        %v333 = vmul.f32 %v299, %v322
        %v334 = vmul.f32 %v300, %v332
        %v335 = vld [vmem:[%s1] sm:$0x1]
        %v337 = vperm.slane %v335, 0
        %v339 = vmul.f32 %v333, %v337
        %v340 = vmul.f32 %v334, %v337
        %v341 = vld [vmem:[%s2] sm:$0x1]
        %v343 = vperm.slane %v341, 0
        %v345 = vadd.f32 %v339, %v343
        %v346 = vadd.f32 %v340, %v343
        %v347 = vpack.c.bf16 %v346, %v345
        %v348 = vld [vmem:[%s3] sm:$0xf]
        %v349 = vld [vmem:[%s3 + $0x4] sm:$0xf]
        %v350 = vld [vmem:[%s4] sm:$0x1]
        %v352 = vperm.slane %v350, 0
        %v356 = vunpack.c.l.b16 %v348
        %v357 = vunpack.c.l.b16 %v349
        %v358 = vpack.c.b16 %v357, %v356
        %v361 = vsel %vm283, %v347, 0
        %363 = vmatpush.bf16.msra.mxu0 0
        %364 = vmatpush.bf16.msra.mxu0 0
        %365 = vmatpush.bf16.msra.mxu0 0
        %366 = vmatpush.bf16.msra.mxu0 0
        %367 = vmatpush.bf16.msra.mxu0 0
        %368 = vmatpush.bf16.msra.mxu0 0
        %369 = vmatpush.bf16.msra.mxu0 0
        %370 = vmatpush.bf16.msra.mxu0 %v358
        %371 = vmatmul.bf16.gmra.mxu0 %v361
        %v372 = vpop.f32.mrf.mxu0
        %v373 = vadd.f32 %v352, %v372
        %v374 = vpop.f32.mrf.mxu0
        %v375 = vadd.f32 %v352, %v374
        %376 = vdwg.mxu0
        %v377 = vmul.f32 %v373, 0.5
        %v378 = vmul.f32 %v375, 0.5
        %v379 = vmul.f32 %v373, 0.70710677
        %v380 = vmul.f32 %v375, 0.70710677
        %v381 = vmul.f32 %v379, %v379
        %v382 = vmin.f32 16.0, %v381
        %v383 = vmul.f32 %v382, 2.1237322e-06
        %v384 = vadd.f32 %v383, 0.00028619796
        %v385 = vmul.f32 %v382, %v384
        %v386 = vadd.f32 %v385, 0.0036580483
        %v387 = vmul.f32 %v382, %v386
        %v388 = vadd.f32 %v387, 0.05243302
        %v389 = vmul.f32 %v382, %v388
        %v390 = vadd.f32 %v389, 0.18741608
        %v391 = vmul.f32 %v382, %v390
        %v392 = vadd.f32 %v391, 1.1283791
        %v393 = vmul.f32 %v379, %v392
        %v394 = vmul.f32 %v382, 3.8918573e-05
        %v395 = vadd.f32 %v394, 0.001143296
        %v396 = vmul.f32 %v382, %v395
        %v397 = vadd.f32 %v396, 0.014752088
        %v398 = vmul.f32 %v382, %v397
        %v399 = vadd.f32 %v398, 0.112945676
        %v400 = vmul.f32 %v382, %v399
        %v401 = vadd.f32 %v400, 0.4994258
        %v402 = vmul.f32 %v382, %v401
        %v403 = vadd.f32 %v402, 1.0
        %v404 = vrcp.pop %v403
        %v405 = vmul.f32 %v403, %v404
        %v406 = vsub.f32 1.0, %v405
        %v407 = vmul.f32 %v404, %v406
        %v408 = vadd.f32 %v404, %v407
        %vm409 = vweird.f32 %v403
        %vm410 = vweird.f32 %v404
        %vm411 = vmor %vm409, %vm410
        %v412 = vsel %vm411, %v404, %v408
        %v413 = vand.u32 2147483647, %v403
        %vm414 = vcmp.eq.f32.partialorder %v413, 8.507059e+37
        %v415 = vand.u32 %v403, 2147483648
        %v416 = vor.u32 1.1754944e-38, %v415
        %v417 = vsel %vm414, %v416, %v412
        %v418 = vmul.f32 %v393, %v417
        %v419 = vmin.f32 %v418, 1.0
        %v420 = vmax.f32 %v419, -1.0
        %v421 = vmul.f32 %v380, %v380
        %v422 = vmin.f32 16.0, %v421
        %v423 = vmul.f32 %v422, 2.1237322e-06
        %v424 = vadd.f32 %v423, 0.00028619796
        %v425 = vmul.f32 %v422, %v424
        %v426 = vadd.f32 %v425, 0.0036580483
        %v427 = vmul.f32 %v422, %v426
        %v428 = vadd.f32 %v427, 0.05243302
        %v429 = vmul.f32 %v422, %v428
        %v430 = vadd.f32 %v429, 0.18741608
        %v431 = vmul.f32 %v422, %v430
        %v432 = vadd.f32 %v431, 1.1283791
        %v433 = vmul.f32 %v380, %v432
        %v434 = vmul.f32 %v422, 3.8918573e-05
        %v435 = vadd.f32 %v434, 0.001143296
        %v436 = vmul.f32 %v422, %v435
        %v437 = vadd.f32 %v436, 0.014752088
        %v438 = vmul.f32 %v422, %v437
        %v439 = vadd.f32 %v438, 0.112945676
        %v440 = vmul.f32 %v422, %v439
        %v441 = vadd.f32 %v440, 0.4994258
        %v442 = vmul.f32 %v422, %v441
        %v443 = vadd.f32 %v442, 1.0
        %v444 = vrcp.pop %v443
        %v445 = vmul.f32 %v443, %v444
        %v446 = vsub.f32 1.0, %v445
        %v447 = vmul.f32 %v444, %v446
        %v448 = vadd.f32 %v444, %v447
        %vm449 = vweird.f32 %v443
        %vm450 = vweird.f32 %v444
        %vm451 = vmor %vm449, %vm450
        %v452 = vsel %vm451, %v444, %v448
        %v453 = vand.u32 2147483647, %v443
        %vm454 = vcmp.eq.f32.partialorder %v453, 8.507059e+37
        %v455 = vand.u32 %v443, 2147483648
        %v456 = vor.u32 1.1754944e-38, %v455
        %v457 = vsel %vm454, %v456, %v452
        %v458 = vmul.f32 %v433, %v457
        %v459 = vmin.f32 %v458, 1.0
        %v460 = vmax.f32 %v459, -1.0
        %v461 = vadd.f32 %v420, 1.0
        %v462 = vadd.f32 %v460, 1.0
        %v463 = vmul.f32 %v377, %v461
        %v464 = vmul.f32 %v378, %v462
        %v465 = vpack.c.bf16 %v464, %v463
        %v466 = vld [vmem:[%s5] sm:$0xf]
        %v467 = vld [vmem:[%s5 + $0x4] sm:$0xf]
        %v468 = vld [vmem:[%s5 + $0x8] sm:$0xf]
        %v469 = vld [vmem:[%s5 + $0xc] sm:$0xf]
        %v470 = vld [vmem:[%s5 + $0x10] sm:$0xf]
        %v471 = vld [vmem:[%s5 + $0x14] sm:$0xf]
        %v472 = vld [vmem:[%s5 + $0x18] sm:$0xf]
        %v473 = vld [vmem:[%s5 + $0x1c] sm:$0xf]
        %v474 = vld [vmem:[%s6] sm:$0x1]
        %v476 = vperm.slane %v474, 0
        %v486 = vunpack.c.l.b16 %v466
        %v487 = vunpack.c.l.b16 %v467
        %v488 = vunpack.c.l.b16 %v468
        %v489 = vunpack.c.l.b16 %v469
        %v490 = vunpack.c.l.b16 %v470
        %v491 = vunpack.c.l.b16 %v471
        %v492 = vunpack.c.l.b16 %v472
        %v493 = vunpack.c.l.b16 %v473
        %v494 = vpack.c.b16 %v487, %v486
        %v495 = vpack.c.b16 %v489, %v488
        %v496 = vpack.c.b16 %v491, %v490
        %v497 = vpack.c.b16 %v493, %v492
        %vm502 = vcmask 523264
        %v504 = vsel %vm502, %v465, 0
        %506 = vmatpush.bf16.msra.mxu0 0
        %507 = vmatpush.bf16.msra.mxu0 0
        %508 = vmatpush.bf16.msra.mxu0 0
        %509 = vmatpush.bf16.msra.mxu0 0
        %510 = vmatpush.bf16.msra.mxu0 %v497
        %511 = vmatpush.bf16.msra.mxu0 %v496
        %512 = vmatpush.bf16.msra.mxu0 %v495
        %513 = vmatpush.bf16.msra.mxu0 %v494
        %514 = vmatmul.bf16.gmra.mxu0 %v504
        %v515 = vpop.f32.mrf.mxu0
        %v516 = vadd.f32 %v476, %v515
        %v517 = vpop.f32.mrf.mxu0
        %v518 = vadd.f32 %v476, %v517
        %519 = vdwg.mxu0
        %v520 = vadd.f32 %v281, %v516
        %v521 = vadd.f32 %v282, %v518
        %522 = vst.msk [vmem:[%s272] sm:$0xff] %vm283, %v520
        %523 = vst.msk [vmem:[%s272 + $0x8] sm:$0xff] %vm283, %v521
        %s524 = sand.u32 %s181, 1
        %s525 = scalar_lea.sflag [#allocation3], %s524
        %s526 = sand.u32 %s181, 1
        %s527 = smul.addr %s526, 16
        %s528 = scalar_lea.vmem [#allocation2], %s527
        // Predicated region
        $region49: #{permutator_block_forward_pallas.19} parent=47 // pred_check
          %p529 = pneg %p191
        $region50: #{permutator_block_forward_pallas.19} parent=47 // pred_check_branch
          %531 = sbr.rel (%p529) target = $region52
        $region51: #{permutator_block_forward_pallas.19} parent=47 // pred_region
          %s532 = smul.u32 2, %s21
          %534 = vsyncadd %s525, 0
          %s535 = smul.addr %s532, 8
          %s536 = scalar_lea.hbm %s7, %s535
          %s537 = sshll.u32 %s528, 4
          %s538 = int_to_ptr.vmem [resolvable:$true] %s537
          %s539 = sshll.u32 %s536, 4
          %s540 = int_to_ptr.hbm [resolvable:$true] %s539
          %545 = dma.vmem_to_hbm [thread:$0]  %s538, 256, %s540, %s525, 128, 128, 8
        $region52: #{permutator_block_forward_pallas.19} parent=47 // pred_fallthru
          _
      $region48: #{permutator_block_forward_pallas.19} parent=5 // pred_fallthru
        _
      %p546 = scmp.le.s32.totalorder 2, %s16
      // Predicated region
      $region53: #{permutator_block_forward_pallas.19} parent=5 // pred_check
        %p547 = pneg %p546
      $region54: #{permutator_block_forward_pallas.19} parent=5 // pred_check_branch
        %549 = sbr.rel (%p547) target = $region56
      $region55: #{permutator_block_forward_pallas.19} parent=5 // pred_region
        %s550 = ssub.s32 %s16, 2
        // Predicated region
        $region57: #{permutator_block_forward_pallas.19} parent=55 // pred_check
          %p551 = pneg %p197
        $region58: #{permutator_block_forward_pallas.19} parent=55 // pred_check_branch
          %553 = sbr.rel (%p551) target = $region60
        $region59: #{permutator_block_forward_pallas.19} parent=55 // pred_region
          %s554 = sand.u32 %s182, 1
          %s555 = scalar_lea.sflag [#allocation3], %s554
          %s556 = sand.u32 %s182, 1
          %s557 = smul.addr %s556, 16
          %s558 = scalar_lea.vmem [#allocation2], %s557
          %560 = dma.done %s555, 256
        $region60: #{permutator_block_forward_pallas.19} parent=55 // pred_fallthru
          _
      $region56: #{permutator_block_forward_pallas.19} parent=5 // pred_fallthru
        _
    $region6: #{permutator_block_forward_pallas.19} parent=1 // loop_footer
      %s20 = sadd.s32 1, %s16
    $region7: #{permutator_block_forward_pallas.19} parent=1 // loop_footer_branch
      %15 = sbr.rel target = $region3
    $region8: #{permutator_block_forward_pallas.19} parent=1 // loop_exit
      _
    %561 = vsyncpa [#allocation3], 1
    %s562 = scalar_lea.sflag [#allocation3], 1
    %563 = vsyncpa %s562, 1

</llo_original>
